<compile_context>
chip_gen: v6e
topology: v6e:2x2x1
jax: 0.10.0
libtpu: 0.0.40
codegen_flags: <defaults>
</compile_context>

<pallas_src>
import math

import jax
import jax.numpy as jnp
from jax.experimental import pallas as pl
from jax.experimental.pallas import tpu as pltpu

# ----------------------------- config -----------------------------
D_MODEL = 32
DIM_FF = 64
NHEAD = 4
HEAD_DIM = D_MODEL // NHEAD
LN_EPS = 1e-5
N_LAYERS = 2
VOCAB = 128
MAX_LEN = 16
PREFIX = 4                      # image prefix tokens
PAD_ID, BOS_ID, EOS_ID = 0, 1, 2
NEG_INF = -1e30
IMG_C, IMG_H, IMG_W = 1, 16, 16
IMG_FLAT = IMG_C * IMG_H * IMG_W
IMG_FEATS = 1000                # timm backbone output dim (folded away at init)


# ----------------------------- helpers -----------------------------
def replicated_spec(shape):
    zeros = (0,) * len(shape)
    return pl.BlockSpec(shape, lambda i, _z=zeros: _z)


def _layernorm(x, w, b):
    mu = jnp.mean(x, axis=-1, keepdims=True)
    var = jnp.mean((x - mu) ** 2, axis=-1, keepdims=True)
    return (x - mu) * jax.lax.rsqrt(var + LN_EPS) * w + b


def _num_batch_chunks(batch):
    """2-way batch split only where there are two TensorCores (v7x)."""
    try:
        kind = jax.devices()[0].device_kind.lower()
    except Exception:
        kind = ""
    if ("v7" in kind or "tpu7" in kind) and batch >= 2 and batch % 2 == 0:
        return 2
    return 1


# ----------------------------- fused kernel -----------------------------
def fused_forward_kernel(imgs_ref, ids_ref, pad_ref,
                         img_w_ref, emb_ref, pos_ref,
                         wqkv_ref, wo_ref, w1_ref, w2_ref, head_w_ref,
                         small_ref, misc_ref,
                         out_ref):
    # Post-norm TransformerEncoderLayer stack, ReLU FFN, eval-mode (dropout=id).
    BC = ids_ref.shape[0]
    N = ids_ref.shape[1]
    D = D_MODEL
    S = N + PREFIX
    V = head_w_ref.shape[1]

    misc = misc_ref[...]                       # (2, 128): row0=img bias, row1=head bias
    img_b = misc[0:1, :]
    head_b = misc[1:2, :]

    # ---- token embedding fused in-kernel: one-hot (BC*N,V) @ (V,D) on MXU ----
    ids2 = ids_ref[...].reshape(BC * N, 1)                       # int32
    vocab_iota = jax.lax.broadcasted_iota(jnp.int32, (1, V), 1)
    onehot = (ids2 == vocab_iota).astype(jnp.float32)            # (BC*N, V)
    tok = jnp.dot(onehot, emb_ref[...],
                  preferred_element_type=jnp.float32)            # emb pre-scaled by sqrt(D)
    tok = tok.reshape(BC, N, D) + pos_ref[...][None, :, :]       # sinusoidal PE (text only)

    # ---- image prefix: folded stub+FFN, single (BC,256)@(256,128) matmul ----
    imgs = imgs_ref[...].reshape(BC, IMG_FLAT)
    img = jnp.dot(imgs.astype(jnp.bfloat16), img_w_ref[...],
                  preferred_element_type=jnp.float32) + img_b
    img = img.reshape(BC, PREFIX, D)

    # ---- sequence assembled as [text | prefix] (sublane-aligned boundary) ----
    x = jnp.concatenate([tok, img], axis=1)                      # (BC, S, D)
    xf = x.reshape(BC * S, D)

    # ---- additive attention mask for [text | prefix] ordering ----
    # prefix keys visible to everyone; text key k visible to text query q iff k<=q;
    # prefix queries attend to prefix keys only (matches causal_mask[:, :4]=False).
    q_idx = jax.lax.broadcasted_iota(jnp.int32, (S, S), 0)
    k_idx = jax.lax.broadcasted_iota(jnp.int32, (S, S), 1)
    allowed = (k_idx >= N) | ((q_idx < N) & (k_idx <= q_idx))
    causal_add = jnp.where(allowed, 0.0, NEG_INF).astype(jnp.float32)   # (S, S)
    mask = causal_add[None, :, :] + pad_ref[...]                 # (BC,1,S) -> (BC, S, S)

    scale = 1.0 / math.sqrt(HEAD_DIM)
    for l in range(N_LAYERS):
        sm = small_ref[l]                                        # (8, 128) packed slab
        bqkv = sm[0:1, 0:3 * D]
        b1 = sm[1:2, 0:DIM_FF]
        bo = sm[2:3, 0:D]
        ln1w = sm[3:4, 0:D]
        ln1b = sm[4:5, 0:D]
        ln2w = sm[5:6, 0:D]
        ln2b = sm[6:7, 0:D]
        b2 = sm[7:8, 0:D]

        # fused QKV projection: one (BC*S, D) @ (D, 3D) bf16 matmul, f32 accum
        qkv = jnp.dot(xf.astype(jnp.bfloat16), wqkv_ref[l],
                      preferred_element_type=jnp.float32) + bqkv
        q3 = qkv[:, 0 * D:1 * D].reshape(BC, S, D)
        k3 = qkv[:, 1 * D:2 * D].reshape(BC, S, D)
        v3 = qkv[:, 2 * D:3 * D].reshape(BC, S, D)

        heads = []
        for h in range(NHEAD):
            lo = h * HEAD_DIM
            qh = q3[:, :, lo:lo + HEAD_DIM]
            kh = k3[:, :, lo:lo + HEAD_DIM]
            vh = v3[:, :, lo:lo + HEAD_DIM]
            s = jnp.einsum('bqd,bkd->bqk', qh, kh,
                           preferred_element_type=jnp.float32) * scale + mask
            m = jnp.max(s, axis=-1, keepdims=True)
            p = jnp.exp(s - m)
            p = p * pl.reciprocal(jnp.sum(p, axis=-1, keepdims=True), approx=True)
            heads.append(jnp.einsum('bqk,bkd->bqd', p, vh,
                                    preferred_element_type=jnp.float32))
        attn = jnp.concatenate(heads, axis=-1).reshape(BC * S, D)
        attn = jnp.dot(attn.astype(jnp.bfloat16), wo_ref[l],
                       preferred_element_type=jnp.float32) + bo

        y = _layernorm(xf + attn, ln1w, ln1b)

        f = jnp.maximum(
            jnp.dot(y.astype(jnp.bfloat16), w1_ref[l],
                    preferred_element_type=jnp.float32) + b1, 0.0)
        f = jnp.dot(f.astype(jnp.bfloat16), w2_ref[l],
                    preferred_element_type=jnp.float32) + b2
        xf = _layernorm(y + f, ln2w, ln2b)

    # ---- tok_head + log_softmax on the text rows (rows 0..N-1, aligned) ----
    h_tok = xf.reshape(BC, S, D)[:, 0:N, :].reshape(BC * N, D)
    logits = jnp.dot(h_tok.astype(jnp.bfloat16), head_w_ref[...],
                     preferred_element_type=jnp.float32) + head_b
    m = jnp.max(logits, axis=-1, keepdims=True)
    lse = m + jnp.log(jnp.sum(jnp.exp(logits - m), axis=-1, keepdims=True))
    out_ref[...] = (logits - lse).reshape(BC, N, V)              # lane-dense V=128 write


# ----------------------------- wrapper -----------------------------
def fused_forward(imgs_flat, ids, pad_add, pos, params):
    B = ids.shape[0]
    N = ids.shape[1]
    S = N + PREFIX
    V = VOCAB

    num_chunks = _num_batch_chunks(B)   # 1 on v5e/v6e (single TC), 2 on v7x
    BC = B // num_chunks

    weights = [params["img_w"], params["emb_scaled"], pos,
               params["wqkv"], params["wo"], params["w1"], params["w2"],
               params["head_w"], params["small"], params["misc"]]

    in_specs = [
        pl.BlockSpec((BC, 1, IMG_FLAT), lambda i: (i, 0, 0)),
        pl.BlockSpec((BC, N, 1), lambda i: (i, 0, 0)),
        pl.BlockSpec((BC, 1, S), lambda i: (i, 0, 0)),
    ] + [replicated_spec(w.shape) for w in weights]

    return pl.pallas_call(
        fused_forward_kernel,
        out_shape=jax.ShapeDtypeStruct((B, N, V), jnp.float32),
        grid=(num_chunks,),
        in_specs=in_specs,
        out_specs=pl.BlockSpec((BC, N, V), lambda i: (i, 0, 0)),
        compiler_params=pltpu.CompilerParams(
            dimension_semantics=("parallel",)),
    )(imgs_flat, ids, pad_add, *weights)


# ----------------------------- model glue -----------------------------
def sinusoidal_table(max_len, d_model):
    pos = jnp.arange(max_len, dtype=jnp.float32)[:, None]
    i = jnp.arange(0, d_model, 2, dtype=jnp.float32)[None, :]
    angle = pos / jnp.power(10000.0, i / d_model)
    pe = jnp.zeros((max_len, d_model), dtype=jnp.float32)
    pe = pe.at[:, 0::2].set(jnp.sin(angle)).at[:, 1::2].set(jnp.cos(angle))
    return pe


def init_params(key):
    ks = iter(jax.random.split(key, 16))

    def nrm(shape, scale=0.02):
        return scale * jax.random.normal(next(ks), shape, dtype=jnp.float32)

    L = N_LAYERS
    bf16 = jnp.bfloat16

    wqkv = nrm((L, D_MODEL, 3 * D_MODEL))          # Wq|Wk|Wv fused per layer
    wo = nrm((L, D_MODEL, D_MODEL))
    w1 = nrm((L, D_MODEL, DIM_FF))
    w2 = nrm((L, DIM_FF, D_MODEL))
    head_w = nrm((D_MODEL, VOCAB))
    tok_emb = nrm((VOCAB, D_MODEL), 1.0)
    pos_emb = sinusoidal_table(MAX_LEN + 1, D_MODEL)

    # TODO(synk): timm 'nf_resnet26' backbone has no clean Pallas equivalent;
    # replaced with a deterministic flatten+linear stub (256 -> 1000 feats),
    # which is then folded with ImageEncoder.ffn into ONE (256, 128) weight.
    img_stub_w = nrm((IMG_FLAT, IMG_FEATS))
    img_stub_b = jnp.zeros((IMG_FEATS,), jnp.float32)
    img_ffn_w = nrm((IMG_FEATS, PREFIX * D_MODEL))
    img_ffn_b = jnp.zeros((PREFIX * D_MODEL,), jnp.float32)
    img_w = img_stub_w @ img_ffn_w                              # (256, 128)
    img_b = img_stub_b @ img_ffn_w + img_ffn_b                  # (128,)

    # per-layer biases / LN params (nn defaults: zero biases, unit LN scales)
    bqkv = jnp.zeros((L, 3 * D_MODEL), jnp.float32)
    bo = jnp.zeros((L, D_MODEL), jnp.float32)
    b1 = jnp.zeros((L, DIM_FF), jnp.float32)
    b2 = jnp.zeros((L, D_MODEL), jnp.float32)
    ln1w = jnp.ones((L, D_MODEL), jnp.float32)
    ln1b = jnp.zeros((L, D_MODEL), jnp.float32)
    ln2w = jnp.ones((L, D_MODEL), jnp.float32)
    ln2b = jnp.zeros((L, D_MODEL), jnp.float32)
    head_b = jnp.zeros((VOCAB,), jnp.float32)

    # pack the 8 tiny per-layer vectors into one (L, 8, 128) slab (one DMA)
    small = jnp.zeros((L, 8, 128), jnp.float32)
    small = small.at[:, 0, :3 * D_MODEL].set(bqkv)
    small = small.at[:, 1, :DIM_FF].set(b1)
    small = small.at[:, 2, :D_MODEL].set(bo)
    small = small.at[:, 3, :D_MODEL].set(ln1w)
    small = small.at[:, 4, :D_MODEL].set(ln1b)
    small = small.at[:, 5, :D_MODEL].set(ln2w)
    small = small.at[:, 6, :D_MODEL].set(ln2b)
    small = small.at[:, 7, :D_MODEL].set(b2)

    misc = jnp.stack([img_b, head_b])              # (2, 128)

    return dict(
        # bf16 weight DMAs (MXU-native path, f32 accumulation in-kernel)
        wqkv=wqkv.astype(bf16), wo=wo.astype(bf16),
        w1=w1.astype(bf16), w2=w2.astype(bf16),
        head_w=head_w.astype(bf16), img_w=img_w.astype(bf16),
        # f32 small params / tables
        emb_scaled=tok_emb * math.sqrt(D_MODEL),   # sqrt(d_model) folded in
        pos_emb=pos_emb,
        small=small, misc=misc,
    )


def forward(imgs, input_ids, attn_mask, params):
    """Mirrors DecoderOnlyTransformer.forward (eval mode)."""
    B, N = input_ids.shape
    S = N + PREFIX

    imgs_flat = imgs.reshape(B, 1, IMG_FLAT)                     # NCHW -> flat
    ids3 = input_ids.astype(jnp.int32).reshape(B, N, 1)

    # additive key-padding vector in [text | prefix] order (prefix never padded);
    # the causal/prefix structure is built in-kernel.
    pad_text = jnp.where(attn_mask, jnp.float32(NEG_INF), jnp.float32(0.0))
    pad_add = jnp.concatenate(
        [pad_text, jnp.zeros((B, PREFIX), jnp.float32)], axis=1).reshape(B, 1, S)

    # SinusoidalEmbedding(..., d=1) assumed to mean positions offset by 1
    # (table of max_len+1); image-prefix tokens get no positional embedding.
    pos = params["pos_emb"][1:N + 1]                             # (N, D)

    # fused Pallas kernel: embedding gather + img FFN + 2 encoder layers +
    # tok_head + log_softmax
    return fused_forward(imgs_flat, ids3, pad_add, pos, params)  # (B, N, V)


# ----------------------------- main -----------------------------
if __name__ == "__main__":
    key = jax.random.PRNGKey(0)
    kp, ki, kt = jax.random.split(key, 3)
    params = init_params(kp)

    B, N = 2, 8
    imgs = jax.random.normal(ki, (B, IMG_C, IMG_H, IMG_W), dtype=jnp.float32)   # NCHW
    input_ids = jax.random.randint(kt, (B, N), 3, VOCAB, dtype=jnp.int32)
    input_ids = input_ids.at[:, 0].set(BOS_ID)
    input_ids = input_ids.at[1, 6:].set(PAD_ID)
    attn_mask = (input_ids == PAD_ID)        # True = padded key (src_key_padding_mask)

    out = jax.jit(forward)(imgs, input_ids, attn_mask, params)
    out = jax.block_until_ready(out)

    assert out.shape == (B, N, VOCAB), out.shape
    # log_softmax rows must exponentiate-sum to 1
    assert bool(jnp.allclose(jnp.sum(jnp.exp(out), axis=-1), 1.0, atol=1e-3))
    print("KERNEL_OK")
</pallas_src>

<mosaic_0001>
module attributes {stable_mosaic.version = 11 : i64} {
  func.func @fused_forward_kernel(%arg0: i32, %arg1: memref<2x1x256xf32, #tpu.memory_space<vmem>>, %arg2: memref<2x8x1xi32, #tpu.memory_space<vmem>>, %arg3: memref<2x1x12xf32, #tpu.memory_space<vmem>>, %arg4: memref<256x128xbf16, #tpu.memory_space<vmem>>, %arg5: memref<128x32xf32, #tpu.memory_space<vmem>>, %arg6: memref<8x32xf32, #tpu.memory_space<vmem>>, %arg7: memref<2x32x96xbf16, #tpu.memory_space<vmem>>, %arg8: memref<2x32x32xbf16, #tpu.memory_space<vmem>>, %arg9: memref<2x32x64xbf16, #tpu.memory_space<vmem>>, %arg10: memref<2x64x32xbf16, #tpu.memory_space<vmem>>, %arg11: memref<32x128xbf16, #tpu.memory_space<vmem>>, %arg12: memref<2x8x128xf32, #tpu.memory_space<vmem>>, %arg13: memref<2x128xf32, #tpu.memory_space<vmem>>, %arg14: memref<2x8x128xf32, #tpu.memory_space<vmem>>) attributes {dimension_semantics = [#tpu.dimension_semantics<parallel>], iteration_bounds = array<i64: 1>, scalar_prefetch = 0 : i64, scratch_operands = 0 : i64, tpu.core_type = #tpu.core_type<tc>, window_params = [{transform_indices = @transform_0, window_bounds = array<i64: 2, 1, 256>}, {transform_indices = @transform_1, window_bounds = array<i64: 2, 8, 1>}, {transform_indices = @transform_2, window_bounds = array<i64: 2, 1, 12>}, {pipeline_mode = #tpu.pipeline_mode<synchronous>, transform_indices = @transform_3, window_bounds = array<i64: 256, 128>}, {pipeline_mode = #tpu.pipeline_mode<synchronous>, transform_indices = @transform_4, window_bounds = array<i64: 128, 32>}, {pipeline_mode = #tpu.pipeline_mode<synchronous>, transform_indices = @transform_5, window_bounds = array<i64: 8, 32>}, {pipeline_mode = #tpu.pipeline_mode<synchronous>, transform_indices = @transform_6, window_bounds = array<i64: 2, 32, 96>}, {pipeline_mode = #tpu.pipeline_mode<synchronous>, transform_indices = @transform_7, window_bounds = array<i64: 2, 32, 32>}, {pipeline_mode = #tpu.pipeline_mode<synchronous>, transform_indices = @transform_8, window_bounds = array<i64: 2, 32, 64>}, {pipeline_mode = #tpu.pipeline_mode<synchronous>, transform_indices = @transform_9, window_bounds = array<i64: 2, 64, 32>}, {pipeline_mode = #tpu.pipeline_mode<synchronous>, transform_indices = @transform_10, window_bounds = array<i64: 32, 128>}, {pipeline_mode = #tpu.pipeline_mode<synchronous>, transform_indices = @transform_11, window_bounds = array<i64: 2, 8, 128>}, {pipeline_mode = #tpu.pipeline_mode<synchronous>, transform_indices = @transform_12, window_bounds = array<i64: 2, 128>}, {transform_indices = @transform_13, window_bounds = array<i64: 2, 8, 128>}]} {
    %c0 = arith.constant 0 : index
    %c0_0 = arith.constant 0 : index
    %0 = vector.load %arg13[%c0, %c0_0] : memref<2x128xf32, #tpu.memory_space<vmem>>, vector<2x128xf32>
    %1 = vector.extract_strided_slice %0 {offsets = [0, 0], sizes = [1, 128], strides = [1, 1]} : vector<2x128xf32> to vector<1x128xf32>
    %2 = vector.extract_strided_slice %0 {offsets = [1, 0], sizes = [1, 128], strides = [1, 1]} : vector<2x128xf32> to vector<1x128xf32>
    %c0_1 = arith.constant 0 : index
    %c0_2 = arith.constant 0 : index
    %c0_3 = arith.constant 0 : index
    %3 = vector.load %arg2[%c0_1, %c0_2, %c0_3] : memref<2x8x1xi32, #tpu.memory_space<vmem>>, vector<2x8x1xi32>
    %4 = vector.shape_cast %3 : vector<2x8x1xi32> to vector<16x1xi32>
    %5 = tpu.iota {dimensions = array<i32: 1>} : vector<1x128xi32>
    %6 = vector.broadcast %4 : vector<16x1xi32> to vector<16x128xi32>
    %7 = vector.broadcast %5 : vector<1x128xi32> to vector<16x128xi32>
    %8 = arith.cmpi eq, %6, %7 : vector<16x128xi32>
    %9 = arith.extui %8 : vector<16x128xi1> to vector<16x128xi32>
    %10 = arith.sitofp %9 : vector<16x128xi32> to vector<16x128xf32>
    %c0_4 = arith.constant 0 : index
    %c0_5 = arith.constant 0 : index
    %11 = vector.load %arg5[%c0_4, %c0_5] : memref<128x32xf32, #tpu.memory_space<vmem>>, vector<128x32xf32>
    %cst = arith.constant dense<0.000000e+00> : vector<16x32xf32>
    %12 = tpu.matmul %10, %11, %cst {dimension_numbers = #tpu.dot_dimension_numbers<[1], [0], [0], [1], [0, 0, 1, 1], [], []>} : vector<16x128xf32>, vector<128x32xf32>, vector<16x32xf32> -> vector<16x32xf32>
    %13 = vector.shape_cast %12 : vector<16x32xf32> to vector<2x8x32xf32>
    %c0_6 = arith.constant 0 : index
    %c0_7 = arith.constant 0 : index
    %14 = vector.load %arg6[%c0_6, %c0_7] : memref<8x32xf32, #tpu.memory_space<vmem>>, vector<8x32xf32>
    %15 = vector.shape_cast %14 : vector<8x32xf32> to vector<1x8x32xf32>
    %16 = vector.broadcast %15 : vector<1x8x32xf32> to vector<2x8x32xf32>
    %17 = arith.addf %13, %16 : vector<2x8x32xf32>
    %c0_8 = arith.constant 0 : index
    %c0_9 = arith.constant 0 : index
    %c0_10 = arith.constant 0 : index
    %18 = vector.load %arg1[%c0_8, %c0_9, %c0_10] : memref<2x1x256xf32, #tpu.memory_space<vmem>>, vector<2x1x256xf32>
    %19 = vector.shape_cast %18 : vector<2x1x256xf32> to vector<2x256xf32>
    %20 = arith.truncf %19 : vector<2x256xf32> to vector<2x256xbf16>
    %c0_11 = arith.constant 0 : index
    %c0_12 = arith.constant 0 : index
    %21 = vector.load %arg4[%c0_11, %c0_12] : memref<256x128xbf16, #tpu.memory_space<vmem>>, vector<256x128xbf16>
    %cst_13 = arith.constant dense<0.000000e+00> : vector<2x128xf32>
    %22 = tpu.matmul %20, %21, %cst_13 {dimension_numbers = #tpu.dot_dimension_numbers<[1], [0], [0], [1], [0, 0, 1, 1], [], []>} : vector<2x256xbf16>, vector<256x128xbf16>, vector<2x128xf32> -> vector<2x128xf32>
    %23 = vector.broadcast %1 : vector<1x128xf32> to vector<2x128xf32>
    %24 = arith.addf %22, %23 : vector<2x128xf32>
    %25 = vector.shape_cast %24 : vector<2x128xf32> to vector<2x4x32xf32>
    %26 = tpu.concatenate %17, %25 in 1 : vector<2x8x32xf32>, vector<2x4x32xf32> -> vector<2x12x32xf32>
    %27 = vector.shape_cast %26 : vector<2x12x32xf32> to vector<24x32xf32>
    %28 = tpu.iota {dimensions = array<i32: 0>} : vector<12x12xi32>
    %29 = tpu.iota {dimensions = array<i32: 1>} : vector<12x12xi32>
    %c8_i32 = arith.constant 8 : i32
    %30 = vector.broadcast %c8_i32 : i32 to vector<12x12xi32>
    %31 = arith.cmpi sge, %29, %30 : vector<12x12xi32>
    %c8_i32_14 = arith.constant 8 : i32
    %32 = vector.broadcast %c8_i32_14 : i32 to vector<12x12xi32>
    %33 = arith.cmpi slt, %28, %32 : vector<12x12xi32>
    %34 = arith.cmpi sle, %29, %28 : vector<12x12xi32>
    %35 = arith.andi %33, %34 : vector<12x12xi1>
    %36 = arith.ori %31, %35 : vector<12x12xi1>
    %cst_15 = arith.constant 0.000000e+00 : f32
    %cst_16 = arith.constant -1.000000e+30 : f32
    %37 = vector.broadcast %cst_15 : f32 to vector<12x12xf32>
    %38 = vector.broadcast %cst_16 : f32 to vector<12x12xf32>
    %39 = arith.select %36, %37, %38 : vector<12x12xi1>, vector<12x12xf32>
    %40 = vector.shape_cast %39 : vector<12x12xf32> to vector<1x12x12xf32>
    %c0_17 = arith.constant 0 : index
    %c0_18 = arith.constant 0 : index
    %c0_19 = arith.constant 0 : index
    %41 = vector.load %arg3[%c0_17, %c0_18, %c0_19] : memref<2x1x12xf32, #tpu.memory_space<vmem>>, vector<2x1x12xf32>
    %42 = vector.broadcast %40 : vector<1x12x12xf32> to vector<2x12x12xf32>
    %43 = vector.broadcast %41 : vector<2x1x12xf32> to vector<2x12x12xf32>
    %44 = arith.addf %42, %43 : vector<2x12x12xf32>
    %c0_20 = arith.constant 0 : index
    %c0_21 = arith.constant 0 : index
    %c0_22 = arith.constant 0 : index
    %45 = vector.load %arg12[%c0_20, %c0_21, %c0_22] : memref<2x8x128xf32, #tpu.memory_space<vmem>>, vector<1x8x128xf32>
    %46 = vector.shape_cast %45 : vector<1x8x128xf32> to vector<8x128xf32>
    %47 = vector.extract_strided_slice %46 {offsets = [0, 0], sizes = [1, 96], strides = [1, 1]} : vector<8x128xf32> to vector<1x96xf32>
    %48 = vector.extract_strided_slice %46 {offsets = [1, 0], sizes = [1, 64], strides = [1, 1]} : vector<8x128xf32> to vector<1x64xf32>
    %49 = vector.extract_strided_slice %46 {offsets = [2, 0], sizes = [1, 32], strides = [1, 1]} : vector<8x128xf32> to vector<1x32xf32>
    %50 = vector.extract_strided_slice %46 {offsets = [3, 0], sizes = [1, 32], strides = [1, 1]} : vector<8x128xf32> to vector<1x32xf32>
    %51 = vector.extract_strided_slice %46 {offsets = [4, 0], sizes = [1, 32], strides = [1, 1]} : vector<8x128xf32> to vector<1x32xf32>
    %52 = vector.extract_strided_slice %46 {offsets = [5, 0], sizes = [1, 32], strides = [1, 1]} : vector<8x128xf32> to vector<1x32xf32>
    %53 = vector.extract_strided_slice %46 {offsets = [6, 0], sizes = [1, 32], strides = [1, 1]} : vector<8x128xf32> to vector<1x32xf32>
    %54 = vector.extract_strided_slice %46 {offsets = [7, 0], sizes = [1, 32], strides = [1, 1]} : vector<8x128xf32> to vector<1x32xf32>
    %55 = arith.truncf %27 : vector<24x32xf32> to vector<24x32xbf16>
    %c0_23 = arith.constant 0 : index
    %c0_24 = arith.constant 0 : index
    %c0_25 = arith.constant 0 : index
    %56 = vector.load %arg7[%c0_23, %c0_24, %c0_25] : memref<2x32x96xbf16, #tpu.memory_space<vmem>>, vector<1x32x96xbf16>
    %57 = vector.shape_cast %56 : vector<1x32x96xbf16> to vector<32x96xbf16>
    %cst_26 = arith.constant dense<0.000000e+00> : vector<24x96xf32>
    %58 = tpu.matmul %55, %57, %cst_26 {dimension_numbers = #tpu.dot_dimension_numbers<[1], [0], [0], [1], [0, 0, 1, 1], [], []>} : vector<24x32xbf16>, vector<32x96xbf16>, vector<24x96xf32> -> vector<24x96xf32>
    %59 = vector.broadcast %47 : vector<1x96xf32> to vector<24x96xf32>
    %60 = arith.addf %58, %59 : vector<24x96xf32>
    %61 = vector.extract_strided_slice %60 {offsets = [0, 0], sizes = [24, 32], strides = [1, 1]} : vector<24x96xf32> to vector<24x32xf32>
    %62 = vector.shape_cast %61 : vector<24x32xf32> to vector<2x12x32xf32>
    %63 = vector.extract_strided_slice %60 {offsets = [0, 32], sizes = [24, 32], strides = [1, 1]} : vector<24x96xf32> to vector<24x32xf32>
    %64 = vector.shape_cast %63 : vector<24x32xf32> to vector<2x12x32xf32>
    %65 = vector.extract_strided_slice %60 {offsets = [0, 64], sizes = [24, 32], strides = [1, 1]} : vector<24x96xf32> to vector<24x32xf32>
    %66 = vector.shape_cast %65 : vector<24x32xf32> to vector<2x12x32xf32>
    %67 = vector.extract_strided_slice %62 {offsets = [0, 0, 0], sizes = [2, 12, 8], strides = [1, 1, 1]} : vector<2x12x32xf32> to vector<2x12x8xf32>
    %68 = vector.extract_strided_slice %64 {offsets = [0, 0, 0], sizes = [2, 12, 8], strides = [1, 1, 1]} : vector<2x12x32xf32> to vector<2x12x8xf32>
    %69 = vector.extract_strided_slice %66 {offsets = [0, 0, 0], sizes = [2, 12, 8], strides = [1, 1, 1]} : vector<2x12x32xf32> to vector<2x12x8xf32>
    "tpu.trace_start"() <{level = 10 : i32, message = "bqd,bkd->bqk"}> : () -> ()
    %cst_27 = arith.constant dense<0.000000e+00> : vector<2x12x12xf32>
    %70 = tpu.matmul %67, %68, %cst_27 {dimension_numbers = #tpu.dot_dimension_numbers<[2], [2], [1], [1], [0, 0, 0, 1, 1, 1], [0], [0]>} : vector<2x12x8xf32>, vector<2x12x8xf32>, vector<2x12x12xf32> -> vector<2x12x12xf32>
    "tpu.trace_stop"() : () -> ()
    %cst_28 = arith.constant 0.353553385 : f32
    %71 = vector.broadcast %cst_28 : f32 to vector<2x12x12xf32>
    %72 = arith.mulf %70, %71 : vector<2x12x12xf32>
    %73 = arith.addf %72, %44 : vector<2x12x12xf32>
    %cst_29 = arith.constant dense<0xFF800000> : vector<2x12xf32>
    %74 = vector.multi_reduction <maximumf>, %73, %cst_29 [2] : vector<2x12x12xf32> to vector<2x12xf32>
    %75 = vector.shape_cast %74 : vector<2x12xf32> to vector<2x12x1xf32>
    %76 = vector.broadcast %75 : vector<2x12x1xf32> to vector<2x12x12xf32>
    %77 = arith.subf %73, %76 : vector<2x12x12xf32>
    %78 = math.exp %77 : vector<2x12x12xf32>
    %cst_30 = arith.constant dense<0.000000e+00> : vector<2x12xf32>
    %79 = vector.multi_reduction <add>, %78, %cst_30 [2] : vector<2x12x12xf32> to vector<2x12xf32>
    %80 = vector.shape_cast %79 : vector<2x12xf32> to vector<2x12x1xf32>
    %81 = tpu.reciprocal %80 {approx = true} : vector<2x12x1xf32> -> vector<2x12x1xf32>
    %82 = vector.broadcast %81 : vector<2x12x1xf32> to vector<2x12x12xf32>
    %83 = arith.mulf %78, %82 : vector<2x12x12xf32>
    "tpu.trace_start"() <{level = 10 : i32, message = "bqk,bkd->bqd"}> : () -> ()
    %cst_31 = arith.constant dense<0.000000e+00> : vector<2x12x8xf32>
    %84 = tpu.matmul %83, %69, %cst_31 {dimension_numbers = #tpu.dot_dimension_numbers<[2], [1], [1], [2], [0, 0, 0, 1, 1, 2], [0], [0]>} : vector<2x12x12xf32>, vector<2x12x8xf32>, vector<2x12x8xf32> -> vector<2x12x8xf32>
    "tpu.trace_stop"() : () -> ()
    %85 = vector.extract_strided_slice %62 {offsets = [0, 0, 8], sizes = [2, 12, 8], strides = [1, 1, 1]} : vector<2x12x32xf32> to vector<2x12x8xf32>
    %86 = vector.extract_strided_slice %64 {offsets = [0, 0, 8], sizes = [2, 12, 8], strides = [1, 1, 1]} : vector<2x12x32xf32> to vector<2x12x8xf32>
    %87 = vector.extract_strided_slice %66 {offsets = [0, 0, 8], sizes = [2, 12, 8], strides = [1, 1, 1]} : vector<2x12x32xf32> to vector<2x12x8xf32>
    "tpu.trace_start"() <{level = 10 : i32, message = "bqd,bkd->bqk"}> : () -> ()
    %cst_32 = arith.constant dense<0.000000e+00> : vector<2x12x12xf32>
    %88 = tpu.matmul %85, %86, %cst_32 {dimension_numbers = #tpu.dot_dimension_numbers<[2], [2], [1], [1], [0, 0, 0, 1, 1, 1], [0], [0]>} : vector<2x12x8xf32>, vector<2x12x8xf32>, vector<2x12x12xf32> -> vector<2x12x12xf32>
    "tpu.trace_stop"() : () -> ()
    %cst_33 = arith.constant 0.353553385 : f32
    %89 = vector.broadcast %cst_33 : f32 to vector<2x12x12xf32>
    %90 = arith.mulf %88, %89 : vector<2x12x12xf32>
    %91 = arith.addf %90, %44 : vector<2x12x12xf32>
    %cst_34 = arith.constant dense<0xFF800000> : vector<2x12xf32>
    %92 = vector.multi_reduction <maximumf>, %91, %cst_34 [2] : vector<2x12x12xf32> to vector<2x12xf32>
    %93 = vector.shape_cast %92 : vector<2x12xf32> to vector<2x12x1xf32>
    %94 = vector.broadcast %93 : vector<2x12x1xf32> to vector<2x12x12xf32>
    %95 = arith.subf %91, %94 : vector<2x12x12xf32>
    %96 = math.exp %95 : vector<2x12x12xf32>
    %cst_35 = arith.constant dense<0.000000e+00> : vector<2x12xf32>
    %97 = vector.multi_reduction <add>, %96, %cst_35 [2] : vector<2x12x12xf32> to vector<2x12xf32>
    %98 = vector.shape_cast %97 : vector<2x12xf32> to vector<2x12x1xf32>
    %99 = tpu.reciprocal %98 {approx = true} : vector<2x12x1xf32> -> vector<2x12x1xf32>
    %100 = vector.broadcast %99 : vector<2x12x1xf32> to vector<2x12x12xf32>
    %101 = arith.mulf %96, %100 : vector<2x12x12xf32>
    "tpu.trace_start"() <{level = 10 : i32, message = "bqk,bkd->bqd"}> : () -> ()
    %cst_36 = arith.constant dense<0.000000e+00> : vector<2x12x8xf32>
    %102 = tpu.matmul %101, %87, %cst_36 {dimension_numbers = #tpu.dot_dimension_numbers<[2], [1], [1], [2], [0, 0, 0, 1, 1, 2], [0], [0]>} : vector<2x12x12xf32>, vector<2x12x8xf32>, vector<2x12x8xf32> -> vector<2x12x8xf32>
    "tpu.trace_stop"() : () -> ()
    %103 = vector.extract_strided_slice %62 {offsets = [0, 0, 16], sizes = [2, 12, 8], strides = [1, 1, 1]} : vector<2x12x32xf32> to vector<2x12x8xf32>
    %104 = vector.extract_strided_slice %64 {offsets = [0, 0, 16], sizes = [2, 12, 8], strides = [1, 1, 1]} : vector<2x12x32xf32> to vector<2x12x8xf32>
    %105 = vector.extract_strided_slice %66 {offsets = [0, 0, 16], sizes = [2, 12, 8], strides = [1, 1, 1]} : vector<2x12x32xf32> to vector<2x12x8xf32>
    "tpu.trace_start"() <{level = 10 : i32, message = "bqd,bkd->bqk"}> : () -> ()
    %cst_37 = arith.constant dense<0.000000e+00> : vector<2x12x12xf32>
    %106 = tpu.matmul %103, %104, %cst_37 {dimension_numbers = #tpu.dot_dimension_numbers<[2], [2], [1], [1], [0, 0, 0, 1, 1, 1], [0], [0]>} : vector<2x12x8xf32>, vector<2x12x8xf32>, vector<2x12x12xf32> -> vector<2x12x12xf32>
    "tpu.trace_stop"() : () -> ()
    %cst_38 = arith.constant 0.353553385 : f32
    %107 = vector.broadcast %cst_38 : f32 to vector<2x12x12xf32>
    %108 = arith.mulf %106, %107 : vector<2x12x12xf32>
    %109 = arith.addf %108, %44 : vector<2x12x12xf32>
    %cst_39 = arith.constant dense<0xFF800000> : vector<2x12xf32>
    %110 = vector.multi_reduction <maximumf>, %109, %cst_39 [2] : vector<2x12x12xf32> to vector<2x12xf32>
    %111 = vector.shape_cast %110 : vector<2x12xf32> to vector<2x12x1xf32>
    %112 = vector.broadcast %111 : vector<2x12x1xf32> to vector<2x12x12xf32>
    %113 = arith.subf %109, %112 : vector<2x12x12xf32>
    %114 = math.exp %113 : vector<2x12x12xf32>
    %cst_40 = arith.constant dense<0.000000e+00> : vector<2x12xf32>
    %115 = vector.multi_reduction <add>, %114, %cst_40 [2] : vector<2x12x12xf32> to vector<2x12xf32>
    %116 = vector.shape_cast %115 : vector<2x12xf32> to vector<2x12x1xf32>
    %117 = tpu.reciprocal %116 {approx = true} : vector<2x12x1xf32> -> vector<2x12x1xf32>
    %118 = vector.broadcast %117 : vector<2x12x1xf32> to vector<2x12x12xf32>
    %119 = arith.mulf %114, %118 : vector<2x12x12xf32>
    "tpu.trace_start"() <{level = 10 : i32, message = "bqk,bkd->bqd"}> : () -> ()
    %cst_41 = arith.constant dense<0.000000e+00> : vector<2x12x8xf32>
    %120 = tpu.matmul %119, %105, %cst_41 {dimension_numbers = #tpu.dot_dimension_numbers<[2], [1], [1], [2], [0, 0, 0, 1, 1, 2], [0], [0]>} : vector<2x12x12xf32>, vector<2x12x8xf32>, vector<2x12x8xf32> -> vector<2x12x8xf32>
    "tpu.trace_stop"() : () -> ()
    %121 = vector.extract_strided_slice %62 {offsets = [0, 0, 24], sizes = [2, 12, 8], strides = [1, 1, 1]} : vector<2x12x32xf32> to vector<2x12x8xf32>
    %122 = vector.extract_strided_slice %64 {offsets = [0, 0, 24], sizes = [2, 12, 8], strides = [1, 1, 1]} : vector<2x12x32xf32> to vector<2x12x8xf32>
    %123 = vector.extract_strided_slice %66 {offsets = [0, 0, 24], sizes = [2, 12, 8], strides = [1, 1, 1]} : vector<2x12x32xf32> to vector<2x12x8xf32>
    "tpu.trace_start"() <{level = 10 : i32, message = "bqd,bkd->bqk"}> : () -> ()
    %cst_42 = arith.constant dense<0.000000e+00> : vector<2x12x12xf32>
    %124 = tpu.matmul %121, %122, %cst_42 {dimension_numbers = #tpu.dot_dimension_numbers<[2], [2], [1], [1], [0, 0, 0, 1, 1, 1], [0], [0]>} : vector<2x12x8xf32>, vector<2x12x8xf32>, vector<2x12x12xf32> -> vector<2x12x12xf32>
    "tpu.trace_stop"() : () -> ()
    %cst_43 = arith.constant 0.353553385 : f32
    %125 = vector.broadcast %cst_43 : f32 to vector<2x12x12xf32>
    %126 = arith.mulf %124, %125 : vector<2x12x12xf32>
    %127 = arith.addf %126, %44 : vector<2x12x12xf32>
    %cst_44 = arith.constant dense<0xFF800000> : vector<2x12xf32>
    %128 = vector.multi_reduction <maximumf>, %127, %cst_44 [2] : vector<2x12x12xf32> to vector<2x12xf32>
    %129 = vector.shape_cast %128 : vector<2x12xf32> to vector<2x12x1xf32>
    %130 = vector.broadcast %129 : vector<2x12x1xf32> to vector<2x12x12xf32>
    %131 = arith.subf %127, %130 : vector<2x12x12xf32>
    %132 = math.exp %131 : vector<2x12x12xf32>
    %cst_45 = arith.constant dense<0.000000e+00> : vector<2x12xf32>
    %133 = vector.multi_reduction <add>, %132, %cst_45 [2] : vector<2x12x12xf32> to vector<2x12xf32>
    %134 = vector.shape_cast %133 : vector<2x12xf32> to vector<2x12x1xf32>
    %135 = tpu.reciprocal %134 {approx = true} : vector<2x12x1xf32> -> vector<2x12x1xf32>
    %136 = vector.broadcast %135 : vector<2x12x1xf32> to vector<2x12x12xf32>
    %137 = arith.mulf %132, %136 : vector<2x12x12xf32>
    "tpu.trace_start"() <{level = 10 : i32, message = "bqk,bkd->bqd"}> : () -> ()
    %cst_46 = arith.constant dense<0.000000e+00> : vector<2x12x8xf32>
    %138 = tpu.matmul %137, %123, %cst_46 {dimension_numbers = #tpu.dot_dimension_numbers<[2], [1], [1], [2], [0, 0, 0, 1, 1, 2], [0], [0]>} : vector<2x12x12xf32>, vector<2x12x8xf32>, vector<2x12x8xf32> -> vector<2x12x8xf32>
    "tpu.trace_stop"() : () -> ()
    %139 = tpu.concatenate %84, %102, %120, %138 in 2 : vector<2x12x8xf32>, vector<2x12x8xf32>, vector<2x12x8xf32>, vector<2x12x8xf32> -> vector<2x12x32xf32>
    %140 = vector.shape_cast %139 : vector<2x12x32xf32> to vector<24x32xf32>
    %141 = arith.truncf %140 : vector<24x32xf32> to vector<24x32xbf16>
    %c0_47 = arith.constant 0 : index
    %c0_48 = arith.constant 0 : index
    %c0_49 = arith.constant 0 : index
    %142 = vector.load %arg8[%c0_47, %c0_48, %c0_49] : memref<2x32x32xbf16, #tpu.memory_space<vmem>>, vector<1x32x32xbf16>
    %143 = vector.shape_cast %142 : vector<1x32x32xbf16> to vector<32x32xbf16>
    %cst_50 = arith.constant dense<0.000000e+00> : vector<24x32xf32>
    %144 = tpu.matmul %141, %143, %cst_50 {dimension_numbers = #tpu.dot_dimension_numbers<[1], [0], [0], [1], [0, 0, 1, 1], [], []>} : vector<24x32xbf16>, vector<32x32xbf16>, vector<24x32xf32> -> vector<24x32xf32>
    %145 = vector.broadcast %49 : vector<1x32xf32> to vector<24x32xf32>
    %146 = arith.addf %144, %145 : vector<24x32xf32>
    %147 = arith.addf %27, %146 : vector<24x32xf32>
    %cst_51 = arith.constant dense<0.000000e+00> : vector<24xf32>
    %148 = vector.multi_reduction <add>, %147, %cst_51 [1] : vector<24x32xf32> to vector<24xf32>
    %149 = vector.shape_cast %148 : vector<24xf32> to vector<24x1xf32>
    %cst_52 = arith.constant 3.200000e+01 : f32
    %150 = vector.broadcast %cst_52 : f32 to vector<24x1xf32>
    %151 = arith.divf %149, %150 : vector<24x1xf32>
    %152 = vector.broadcast %151 : vector<24x1xf32> to vector<24x32xf32>
    %153 = arith.subf %147, %152 : vector<24x32xf32>
    %154 = arith.mulf %153, %153 : vector<24x32xf32>
    %cst_53 = arith.constant dense<0.000000e+00> : vector<24xf32>
    %155 = vector.multi_reduction <add>, %154, %cst_53 [1] : vector<24x32xf32> to vector<24xf32>
    %156 = vector.shape_cast %155 : vector<24xf32> to vector<24x1xf32>
    %cst_54 = arith.constant 3.200000e+01 : f32
    %157 = vector.broadcast %cst_54 : f32 to vector<24x1xf32>
    %158 = arith.divf %156, %157 : vector<24x1xf32>
    %159 = vector.broadcast %151 : vector<24x1xf32> to vector<24x32xf32>
    %160 = arith.subf %147, %159 : vector<24x32xf32>
    %cst_55 = arith.constant 9.99999974E-6 : f32
    %161 = vector.broadcast %cst_55 : f32 to vector<24x1xf32>
    %162 = arith.addf %158, %161 : vector<24x1xf32>
    %163 = math.rsqrt %162 : vector<24x1xf32>
    %164 = vector.broadcast %163 : vector<24x1xf32> to vector<24x32xf32>
    %165 = arith.mulf %160, %164 : vector<24x32xf32>
    %166 = vector.broadcast %50 : vector<1x32xf32> to vector<24x32xf32>
    %167 = arith.mulf %165, %166 : vector<24x32xf32>
    %168 = vector.broadcast %51 : vector<1x32xf32> to vector<24x32xf32>
    %169 = arith.addf %167, %168 : vector<24x32xf32>
    %170 = arith.truncf %169 : vector<24x32xf32> to vector<24x32xbf16>
    %c0_56 = arith.constant 0 : index
    %c0_57 = arith.constant 0 : index
    %c0_58 = arith.constant 0 : index
    %171 = vector.load %arg9[%c0_56, %c0_57, %c0_58] : memref<2x32x64xbf16, #tpu.memory_space<vmem>>, vector<1x32x64xbf16>
    %172 = vector.shape_cast %171 : vector<1x32x64xbf16> to vector<32x64xbf16>
    %cst_59 = arith.constant dense<0.000000e+00> : vector<24x64xf32>
    %173 = tpu.matmul %170, %172, %cst_59 {dimension_numbers = #tpu.dot_dimension_numbers<[1], [0], [0], [1], [0, 0, 1, 1], [], []>} : vector<24x32xbf16>, vector<32x64xbf16>, vector<24x64xf32> -> vector<24x64xf32>
    %174 = vector.broadcast %48 : vector<1x64xf32> to vector<24x64xf32>
    %175 = arith.addf %173, %174 : vector<24x64xf32>
    %cst_60 = arith.constant 0.000000e+00 : f32
    %176 = vector.broadcast %cst_60 : f32 to vector<24x64xf32>
    %177 = arith.maximumf %175, %176 : vector<24x64xf32>
    %178 = arith.truncf %177 : vector<24x64xf32> to vector<24x64xbf16>
    %c0_61 = arith.constant 0 : index
    %c0_62 = arith.constant 0 : index
    %c0_63 = arith.constant 0 : index
    %179 = vector.load %arg10[%c0_61, %c0_62, %c0_63] : memref<2x64x32xbf16, #tpu.memory_space<vmem>>, vector<1x64x32xbf16>
    %180 = vector.shape_cast %179 : vector<1x64x32xbf16> to vector<64x32xbf16>
    %cst_64 = arith.constant dense<0.000000e+00> : vector<24x32xf32>
    %181 = tpu.matmul %178, %180, %cst_64 {dimension_numbers = #tpu.dot_dimension_numbers<[1], [0], [0], [1], [0, 0, 1, 1], [], []>} : vector<24x64xbf16>, vector<64x32xbf16>, vector<24x32xf32> -> vector<24x32xf32>
    %182 = vector.broadcast %54 : vector<1x32xf32> to vector<24x32xf32>
    %183 = arith.addf %181, %182 : vector<24x32xf32>
    %184 = arith.addf %169, %183 : vector<24x32xf32>
    %cst_65 = arith.constant dense<0.000000e+00> : vector<24xf32>
    %185 = vector.multi_reduction <add>, %184, %cst_65 [1] : vector<24x32xf32> to vector<24xf32>
    %186 = vector.shape_cast %185 : vector<24xf32> to vector<24x1xf32>
    %cst_66 = arith.constant 3.200000e+01 : f32
    %187 = vector.broadcast %cst_66 : f32 to vector<24x1xf32>
    %188 = arith.divf %186, %187 : vector<24x1xf32>
    %189 = vector.broadcast %188 : vector<24x1xf32> to vector<24x32xf32>
    %190 = arith.subf %184, %189 : vector<24x32xf32>
    %191 = arith.mulf %190, %190 : vector<24x32xf32>
    %cst_67 = arith.constant dense<0.000000e+00> : vector<24xf32>
    %192 = vector.multi_reduction <add>, %191, %cst_67 [1] : vector<24x32xf32> to vector<24xf32>
    %193 = vector.shape_cast %192 : vector<24xf32> to vector<24x1xf32>
    %cst_68 = arith.constant 3.200000e+01 : f32
    %194 = vector.broadcast %cst_68 : f32 to vector<24x1xf32>
    %195 = arith.divf %193, %194 : vector<24x1xf32>
    %196 = vector.broadcast %188 : vector<24x1xf32> to vector<24x32xf32>
    %197 = arith.subf %184, %196 : vector<24x32xf32>
    %cst_69 = arith.constant 9.99999974E-6 : f32
    %198 = vector.broadcast %cst_69 : f32 to vector<24x1xf32>
    %199 = arith.addf %195, %198 : vector<24x1xf32>
    %200 = math.rsqrt %199 : vector<24x1xf32>
    %201 = vector.broadcast %200 : vector<24x1xf32> to vector<24x32xf32>
    %202 = arith.mulf %197, %201 : vector<24x32xf32>
    %203 = vector.broadcast %52 : vector<1x32xf32> to vector<24x32xf32>
    %204 = arith.mulf %202, %203 : vector<24x32xf32>
    %205 = vector.broadcast %53 : vector<1x32xf32> to vector<24x32xf32>
    %206 = arith.addf %204, %205 : vector<24x32xf32>
    %c1 = arith.constant 1 : index
    %c0_70 = arith.constant 0 : index
    %c0_71 = arith.constant 0 : index
    %207 = vector.load %arg12[%c1, %c0_70, %c0_71] : memref<2x8x128xf32, #tpu.memory_space<vmem>>, vector<1x8x128xf32>
    %208 = vector.shape_cast %207 : vector<1x8x128xf32> to vector<8x128xf32>
    %209 = vector.extract_strided_slice %208 {offsets = [0, 0], sizes = [1, 96], strides = [1, 1]} : vector<8x128xf32> to vector<1x96xf32>
    %210 = vector.extract_strided_slice %208 {offsets = [1, 0], sizes = [1, 64], strides = [1, 1]} : vector<8x128xf32> to vector<1x64xf32>
    %211 = vector.extract_strided_slice %208 {offsets = [2, 0], sizes = [1, 32], strides = [1, 1]} : vector<8x128xf32> to vector<1x32xf32>
    %212 = vector.extract_strided_slice %208 {offsets = [3, 0], sizes = [1, 32], strides = [1, 1]} : vector<8x128xf32> to vector<1x32xf32>
    %213 = vector.extract_strided_slice %208 {offsets = [4, 0], sizes = [1, 32], strides = [1, 1]} : vector<8x128xf32> to vector<1x32xf32>
    %214 = vector.extract_strided_slice %208 {offsets = [5, 0], sizes = [1, 32], strides = [1, 1]} : vector<8x128xf32> to vector<1x32xf32>
    %215 = vector.extract_strided_slice %208 {offsets = [6, 0], sizes = [1, 32], strides = [1, 1]} : vector<8x128xf32> to vector<1x32xf32>
    %216 = vector.extract_strided_slice %208 {offsets = [7, 0], sizes = [1, 32], strides = [1, 1]} : vector<8x128xf32> to vector<1x32xf32>
    %217 = arith.truncf %206 : vector<24x32xf32> to vector<24x32xbf16>
    %c1_72 = arith.constant 1 : index
    %c0_73 = arith.constant 0 : index
    %c0_74 = arith.constant 0 : index
    %218 = vector.load %arg7[%c1_72, %c0_73, %c0_74] : memref<2x32x96xbf16, #tpu.memory_space<vmem>>, vector<1x32x96xbf16>
    %219 = vector.shape_cast %218 : vector<1x32x96xbf16> to vector<32x96xbf16>
    %cst_75 = arith.constant dense<0.000000e+00> : vector<24x96xf32>
    %220 = tpu.matmul %217, %219, %cst_75 {dimension_numbers = #tpu.dot_dimension_numbers<[1], [0], [0], [1], [0, 0, 1, 1], [], []>} : vector<24x32xbf16>, vector<32x96xbf16>, vector<24x96xf32> -> vector<24x96xf32>
    %221 = vector.broadcast %209 : vector<1x96xf32> to vector<24x96xf32>
    %222 = arith.addf %220, %221 : vector<24x96xf32>
    %223 = vector.extract_strided_slice %222 {offsets = [0, 0], sizes = [24, 32], strides = [1, 1]} : vector<24x96xf32> to vector<24x32xf32>
    %224 = vector.shape_cast %223 : vector<24x32xf32> to vector<2x12x32xf32>
    %225 = vector.extract_strided_slice %222 {offsets = [0, 32], sizes = [24, 32], strides = [1, 1]} : vector<24x96xf32> to vector<24x32xf32>
    %226 = vector.shape_cast %225 : vector<24x32xf32> to vector<2x12x32xf32>
    %227 = vector.extract_strided_slice %222 {offsets = [0, 64], sizes = [24, 32], strides = [1, 1]} : vector<24x96xf32> to vector<24x32xf32>
    %228 = vector.shape_cast %227 : vector<24x32xf32> to vector<2x12x32xf32>
    %229 = vector.extract_strided_slice %224 {offsets = [0, 0, 0], sizes = [2, 12, 8], strides = [1, 1, 1]} : vector<2x12x32xf32> to vector<2x12x8xf32>
    %230 = vector.extract_strided_slice %226 {offsets = [0, 0, 0], sizes = [2, 12, 8], strides = [1, 1, 1]} : vector<2x12x32xf32> to vector<2x12x8xf32>
    %231 = vector.extract_strided_slice %228 {offsets = [0, 0, 0], sizes = [2, 12, 8], strides = [1, 1, 1]} : vector<2x12x32xf32> to vector<2x12x8xf32>
    "tpu.trace_start"() <{level = 10 : i32, message = "bqd,bkd->bqk"}> : () -> ()
    %cst_76 = arith.constant dense<0.000000e+00> : vector<2x12x12xf32>
    %232 = tpu.matmul %229, %230, %cst_76 {dimension_numbers = #tpu.dot_dimension_numbers<[2], [2], [1], [1], [0, 0, 0, 1, 1, 1], [0], [0]>} : vector<2x12x8xf32>, vector<2x12x8xf32>, vector<2x12x12xf32> -> vector<2x12x12xf32>
    "tpu.trace_stop"() : () -> ()
    %cst_77 = arith.constant 0.353553385 : f32
    %233 = vector.broadcast %cst_77 : f32 to vector<2x12x12xf32>
    %234 = arith.mulf %232, %233 : vector<2x12x12xf32>
    %235 = arith.addf %234, %44 : vector<2x12x12xf32>
    %cst_78 = arith.constant dense<0xFF800000> : vector<2x12xf32>
    %236 = vector.multi_reduction <maximumf>, %235, %cst_78 [2] : vector<2x12x12xf32> to vector<2x12xf32>
    %237 = vector.shape_cast %236 : vector<2x12xf32> to vector<2x12x1xf32>
    %238 = vector.broadcast %237 : vector<2x12x1xf32> to vector<2x12x12xf32>
    %239 = arith.subf %235, %238 : vector<2x12x12xf32>
    %240 = math.exp %239 : vector<2x12x12xf32>
    %cst_79 = arith.constant dense<0.000000e+00> : vector<2x12xf32>
    %241 = vector.multi_reduction <add>, %240, %cst_79 [2] : vector<2x12x12xf32> to vector<2x12xf32>
    %242 = vector.shape_cast %241 : vector<2x12xf32> to vector<2x12x1xf32>
    %243 = tpu.reciprocal %242 {approx = true} : vector<2x12x1xf32> -> vector<2x12x1xf32>
    %244 = vector.broadcast %243 : vector<2x12x1xf32> to vector<2x12x12xf32>
    %245 = arith.mulf %240, %244 : vector<2x12x12xf32>
    "tpu.trace_start"() <{level = 10 : i32, message = "bqk,bkd->bqd"}> : () -> ()
    %cst_80 = arith.constant dense<0.000000e+00> : vector<2x12x8xf32>
    %246 = tpu.matmul %245, %231, %cst_80 {dimension_numbers = #tpu.dot_dimension_numbers<[2], [1], [1], [2], [0, 0, 0, 1, 1, 2], [0], [0]>} : vector<2x12x12xf32>, vector<2x12x8xf32>, vector<2x12x8xf32> -> vector<2x12x8xf32>
    "tpu.trace_stop"() : () -> ()
    %247 = vector.extract_strided_slice %224 {offsets = [0, 0, 8], sizes = [2, 12, 8], strides = [1, 1, 1]} : vector<2x12x32xf32> to vector<2x12x8xf32>
    %248 = vector.extract_strided_slice %226 {offsets = [0, 0, 8], sizes = [2, 12, 8], strides = [1, 1, 1]} : vector<2x12x32xf32> to vector<2x12x8xf32>
    %249 = vector.extract_strided_slice %228 {offsets = [0, 0, 8], sizes = [2, 12, 8], strides = [1, 1, 1]} : vector<2x12x32xf32> to vector<2x12x8xf32>
    "tpu.trace_start"() <{level = 10 : i32, message = "bqd,bkd->bqk"}> : () -> ()
    %cst_81 = arith.constant dense<0.000000e+00> : vector<2x12x12xf32>
    %250 = tpu.matmul %247, %248, %cst_81 {dimension_numbers = #tpu.dot_dimension_numbers<[2], [2], [1], [1], [0, 0, 0, 1, 1, 1], [0], [0]>} : vector<2x12x8xf32>, vector<2x12x8xf32>, vector<2x12x12xf32> -> vector<2x12x12xf32>
    "tpu.trace_stop"() : () -> ()
    %cst_82 = arith.constant 0.353553385 : f32
    %251 = vector.broadcast %cst_82 : f32 to vector<2x12x12xf32>
    %252 = arith.mulf %250, %251 : vector<2x12x12xf32>
    %253 = arith.addf %252, %44 : vector<2x12x12xf32>
    %cst_83 = arith.constant dense<0xFF800000> : vector<2x12xf32>
    %254 = vector.multi_reduction <maximumf>, %253, %cst_83 [2] : vector<2x12x12xf32> to vector<2x12xf32>
    %255 = vector.shape_cast %254 : vector<2x12xf32> to vector<2x12x1xf32>
    %256 = vector.broadcast %255 : vector<2x12x1xf32> to vector<2x12x12xf32>
    %257 = arith.subf %253, %256 : vector<2x12x12xf32>
    %258 = math.exp %257 : vector<2x12x12xf32>
    %cst_84 = arith.constant dense<0.000000e+00> : vector<2x12xf32>
    %259 = vector.multi_reduction <add>, %258, %cst_84 [2] : vector<2x12x12xf32> to vector<2x12xf32>
    %260 = vector.shape_cast %259 : vector<2x12xf32> to vector<2x12x1xf32>
    %261 = tpu.reciprocal %260 {approx = true} : vector<2x12x1xf32> -> vector<2x12x1xf32>
    %262 = vector.broadcast %261 : vector<2x12x1xf32> to vector<2x12x12xf32>
    %263 = arith.mulf %258, %262 : vector<2x12x12xf32>
    "tpu.trace_start"() <{level = 10 : i32, message = "bqk,bkd->bqd"}> : () -> ()
    %cst_85 = arith.constant dense<0.000000e+00> : vector<2x12x8xf32>
    %264 = tpu.matmul %263, %249, %cst_85 {dimension_numbers = #tpu.dot_dimension_numbers<[2], [1], [1], [2], [0, 0, 0, 1, 1, 2], [0], [0]>} : vector<2x12x12xf32>, vector<2x12x8xf32>, vector<2x12x8xf32> -> vector<2x12x8xf32>
    "tpu.trace_stop"() : () -> ()
    %265 = vector.extract_strided_slice %224 {offsets = [0, 0, 16], sizes = [2, 12, 8], strides = [1, 1, 1]} : vector<2x12x32xf32> to vector<2x12x8xf32>
    %266 = vector.extract_strided_slice %226 {offsets = [0, 0, 16], sizes = [2, 12, 8], strides = [1, 1, 1]} : vector<2x12x32xf32> to vector<2x12x8xf32>
    %267 = vector.extract_strided_slice %228 {offsets = [0, 0, 16], sizes = [2, 12, 8], strides = [1, 1, 1]} : vector<2x12x32xf32> to vector<2x12x8xf32>
    "tpu.trace_start"() <{level = 10 : i32, message = "bqd,bkd->bqk"}> : () -> ()
    %cst_86 = arith.constant dense<0.000000e+00> : vector<2x12x12xf32>
    %268 = tpu.matmul %265, %266, %cst_86 {dimension_numbers = #tpu.dot_dimension_numbers<[2], [2], [1], [1], [0, 0, 0, 1, 1, 1], [0], [0]>} : vector<2x12x8xf32>, vector<2x12x8xf32>, vector<2x12x12xf32> -> vector<2x12x12xf32>
    "tpu.trace_stop"() : () -> ()
    %cst_87 = arith.constant 0.353553385 : f32
    %269 = vector.broadcast %cst_87 : f32 to vector<2x12x12xf32>
    %270 = arith.mulf %268, %269 : vector<2x12x12xf32>
    %271 = arith.addf %270, %44 : vector<2x12x12xf32>
    %cst_88 = arith.constant dense<0xFF800000> : vector<2x12xf32>
    %272 = vector.multi_reduction <maximumf>, %271, %cst_88 [2] : vector<2x12x12xf32> to vector<2x12xf32>
    %273 = vector.shape_cast %272 : vector<2x12xf32> to vector<2x12x1xf32>
    %274 = vector.broadcast %273 : vector<2x12x1xf32> to vector<2x12x12xf32>
    %275 = arith.subf %271, %274 : vector<2x12x12xf32>
    %276 = math.exp %275 : vector<2x12x12xf32>
    %cst_89 = arith.constant dense<0.000000e+00> : vector<2x12xf32>
    %277 = vector.multi_reduction <add>, %276, %cst_89 [2] : vector<2x12x12xf32> to vector<2x12xf32>
    %278 = vector.shape_cast %277 : vector<2x12xf32> to vector<2x12x1xf32>
    %279 = tpu.reciprocal %278 {approx = true} : vector<2x12x1xf32> -> vector<2x12x1xf32>
    %280 = vector.broadcast %279 : vector<2x12x1xf32> to vector<2x12x12xf32>
    %281 = arith.mulf %276, %280 : vector<2x12x12xf32>
    "tpu.trace_start"() <{level = 10 : i32, message = "bqk,bkd->bqd"}> : () -> ()
    %cst_90 = arith.constant dense<0.000000e+00> : vector<2x12x8xf32>
    %282 = tpu.matmul %281, %267, %cst_90 {dimension_numbers = #tpu.dot_dimension_numbers<[2], [1], [1], [2], [0, 0, 0, 1, 1, 2], [0], [0]>} : vector<2x12x12xf32>, vector<2x12x8xf32>, vector<2x12x8xf32> -> vector<2x12x8xf32>
    "tpu.trace_stop"() : () -> ()
    %283 = vector.extract_strided_slice %224 {offsets = [0, 0, 24], sizes = [2, 12, 8], strides = [1, 1, 1]} : vector<2x12x32xf32> to vector<2x12x8xf32>
    %284 = vector.extract_strided_slice %226 {offsets = [0, 0, 24], sizes = [2, 12, 8], strides = [1, 1, 1]} : vector<2x12x32xf32> to vector<2x12x8xf32>
    %285 = vector.extract_strided_slice %228 {offsets = [0, 0, 24], sizes = [2, 12, 8], strides = [1, 1, 1]} : vector<2x12x32xf32> to vector<2x12x8xf32>
    "tpu.trace_start"() <{level = 10 : i32, message = "bqd,bkd->bqk"}> : () -> ()
    %cst_91 = arith.constant dense<0.000000e+00> : vector<2x12x12xf32>
    %286 = tpu.matmul %283, %284, %cst_91 {dimension_numbers = #tpu.dot_dimension_numbers<[2], [2], [1], [1], [0, 0, 0, 1, 1, 1], [0], [0]>} : vector<2x12x8xf32>, vector<2x12x8xf32>, vector<2x12x12xf32> -> vector<2x12x12xf32>
    "tpu.trace_stop"() : () -> ()
    %cst_92 = arith.constant 0.353553385 : f32
    %287 = vector.broadcast %cst_92 : f32 to vector<2x12x12xf32>
    %288 = arith.mulf %286, %287 : vector<2x12x12xf32>
    %289 = arith.addf %288, %44 : vector<2x12x12xf32>
    %cst_93 = arith.constant dense<0xFF800000> : vector<2x12xf32>
    %290 = vector.multi_reduction <maximumf>, %289, %cst_93 [2] : vector<2x12x12xf32> to vector<2x12xf32>
    %291 = vector.shape_cast %290 : vector<2x12xf32> to vector<2x12x1xf32>
    %292 = vector.broadcast %291 : vector<2x12x1xf32> to vector<2x12x12xf32>
    %293 = arith.subf %289, %292 : vector<2x12x12xf32>
    %294 = math.exp %293 : vector<2x12x12xf32>
    %cst_94 = arith.constant dense<0.000000e+00> : vector<2x12xf32>
    %295 = vector.multi_reduction <add>, %294, %cst_94 [2] : vector<2x12x12xf32> to vector<2x12xf32>
    %296 = vector.shape_cast %295 : vector<2x12xf32> to vector<2x12x1xf32>
    %297 = tpu.reciprocal %296 {approx = true} : vector<2x12x1xf32> -> vector<2x12x1xf32>
    %298 = vector.broadcast %297 : vector<2x12x1xf32> to vector<2x12x12xf32>
    %299 = arith.mulf %294, %298 : vector<2x12x12xf32>
    "tpu.trace_start"() <{level = 10 : i32, message = "bqk,bkd->bqd"}> : () -> ()
    %cst_95 = arith.constant dense<0.000000e+00> : vector<2x12x8xf32>
    %300 = tpu.matmul %299, %285, %cst_95 {dimension_numbers = #tpu.dot_dimension_numbers<[2], [1], [1], [2], [0, 0, 0, 1, 1, 2], [0], [0]>} : vector<2x12x12xf32>, vector<2x12x8xf32>, vector<2x12x8xf32> -> vector<2x12x8xf32>
    "tpu.trace_stop"() : () -> ()
    %301 = tpu.concatenate %246, %264, %282, %300 in 2 : vector<2x12x8xf32>, vector<2x12x8xf32>, vector<2x12x8xf32>, vector<2x12x8xf32> -> vector<2x12x32xf32>
    %302 = vector.shape_cast %301 : vector<2x12x32xf32> to vector<24x32xf32>
    %303 = arith.truncf %302 : vector<24x32xf32> to vector<24x32xbf16>
    %c1_96 = arith.constant 1 : index
    %c0_97 = arith.constant 0 : index
    %c0_98 = arith.constant 0 : index
    %304 = vector.load %arg8[%c1_96, %c0_97, %c0_98] : memref<2x32x32xbf16, #tpu.memory_space<vmem>>, vector<1x32x32xbf16>
    %305 = vector.shape_cast %304 : vector<1x32x32xbf16> to vector<32x32xbf16>
    %cst_99 = arith.constant dense<0.000000e+00> : vector<24x32xf32>
    %306 = tpu.matmul %303, %305, %cst_99 {dimension_numbers = #tpu.dot_dimension_numbers<[1], [0], [0], [1], [0, 0, 1, 1], [], []>} : vector<24x32xbf16>, vector<32x32xbf16>, vector<24x32xf32> -> vector<24x32xf32>
    %307 = vector.broadcast %211 : vector<1x32xf32> to vector<24x32xf32>
    %308 = arith.addf %306, %307 : vector<24x32xf32>
    %309 = arith.addf %206, %308 : vector<24x32xf32>
    %cst_100 = arith.constant dense<0.000000e+00> : vector<24xf32>
    %310 = vector.multi_reduction <add>, %309, %cst_100 [1] : vector<24x32xf32> to vector<24xf32>
    %311 = vector.shape_cast %310 : vector<24xf32> to vector<24x1xf32>
    %cst_101 = arith.constant 3.200000e+01 : f32
    %312 = vector.broadcast %cst_101 : f32 to vector<24x1xf32>
    %313 = arith.divf %311, %312 : vector<24x1xf32>
    %314 = vector.broadcast %313 : vector<24x1xf32> to vector<24x32xf32>
    %315 = arith.subf %309, %314 : vector<24x32xf32>
    %316 = arith.mulf %315, %315 : vector<24x32xf32>
    %cst_102 = arith.constant dense<0.000000e+00> : vector<24xf32>
    %317 = vector.multi_reduction <add>, %316, %cst_102 [1] : vector<24x32xf32> to vector<24xf32>
    %318 = vector.shape_cast %317 : vector<24xf32> to vector<24x1xf32>
    %cst_103 = arith.constant 3.200000e+01 : f32
    %319 = vector.broadcast %cst_103 : f32 to vector<24x1xf32>
    %320 = arith.divf %318, %319 : vector<24x1xf32>
    %321 = vector.broadcast %313 : vector<24x1xf32> to vector<24x32xf32>
    %322 = arith.subf %309, %321 : vector<24x32xf32>
    %cst_104 = arith.constant 9.99999974E-6 : f32
    %323 = vector.broadcast %cst_104 : f32 to vector<24x1xf32>
    %324 = arith.addf %320, %323 : vector<24x1xf32>
    %325 = math.rsqrt %324 : vector<24x1xf32>
    %326 = vector.broadcast %325 : vector<24x1xf32> to vector<24x32xf32>
    %327 = arith.mulf %322, %326 : vector<24x32xf32>
    %328 = vector.broadcast %212 : vector<1x32xf32> to vector<24x32xf32>
    %329 = arith.mulf %327, %328 : vector<24x32xf32>
    %330 = vector.broadcast %213 : vector<1x32xf32> to vector<24x32xf32>
    %331 = arith.addf %329, %330 : vector<24x32xf32>
    %332 = arith.truncf %331 : vector<24x32xf32> to vector<24x32xbf16>
    %c1_105 = arith.constant 1 : index
    %c0_106 = arith.constant 0 : index
    %c0_107 = arith.constant 0 : index
    %333 = vector.load %arg9[%c1_105, %c0_106, %c0_107] : memref<2x32x64xbf16, #tpu.memory_space<vmem>>, vector<1x32x64xbf16>
    %334 = vector.shape_cast %333 : vector<1x32x64xbf16> to vector<32x64xbf16>
    %cst_108 = arith.constant dense<0.000000e+00> : vector<24x64xf32>
    %335 = tpu.matmul %332, %334, %cst_108 {dimension_numbers = #tpu.dot_dimension_numbers<[1], [0], [0], [1], [0, 0, 1, 1], [], []>} : vector<24x32xbf16>, vector<32x64xbf16>, vector<24x64xf32> -> vector<24x64xf32>
    %336 = vector.broadcast %210 : vector<1x64xf32> to vector<24x64xf32>
    %337 = arith.addf %335, %336 : vector<24x64xf32>
    %cst_109 = arith.constant 0.000000e+00 : f32
    %338 = vector.broadcast %cst_109 : f32 to vector<24x64xf32>
    %339 = arith.maximumf %337, %338 : vector<24x64xf32>
    %340 = arith.truncf %339 : vector<24x64xf32> to vector<24x64xbf16>
    %c1_110 = arith.constant 1 : index
    %c0_111 = arith.constant 0 : index
    %c0_112 = arith.constant 0 : index
    %341 = vector.load %arg10[%c1_110, %c0_111, %c0_112] : memref<2x64x32xbf16, #tpu.memory_space<vmem>>, vector<1x64x32xbf16>
    %342 = vector.shape_cast %341 : vector<1x64x32xbf16> to vector<64x32xbf16>
    %cst_113 = arith.constant dense<0.000000e+00> : vector<24x32xf32>
    %343 = tpu.matmul %340, %342, %cst_113 {dimension_numbers = #tpu.dot_dimension_numbers<[1], [0], [0], [1], [0, 0, 1, 1], [], []>} : vector<24x64xbf16>, vector<64x32xbf16>, vector<24x32xf32> -> vector<24x32xf32>
    %344 = vector.broadcast %216 : vector<1x32xf32> to vector<24x32xf32>
    %345 = arith.addf %343, %344 : vector<24x32xf32>
    %346 = arith.addf %331, %345 : vector<24x32xf32>
    %cst_114 = arith.constant dense<0.000000e+00> : vector<24xf32>
    %347 = vector.multi_reduction <add>, %346, %cst_114 [1] : vector<24x32xf32> to vector<24xf32>
    %348 = vector.shape_cast %347 : vector<24xf32> to vector<24x1xf32>
    %cst_115 = arith.constant 3.200000e+01 : f32
    %349 = vector.broadcast %cst_115 : f32 to vector<24x1xf32>
    %350 = arith.divf %348, %349 : vector<24x1xf32>
    %351 = vector.broadcast %350 : vector<24x1xf32> to vector<24x32xf32>
    %352 = arith.subf %346, %351 : vector<24x32xf32>
    %353 = arith.mulf %352, %352 : vector<24x32xf32>
    %cst_116 = arith.constant dense<0.000000e+00> : vector<24xf32>
    %354 = vector.multi_reduction <add>, %353, %cst_116 [1] : vector<24x32xf32> to vector<24xf32>
    %355 = vector.shape_cast %354 : vector<24xf32> to vector<24x1xf32>
    %cst_117 = arith.constant 3.200000e+01 : f32
    %356 = vector.broadcast %cst_117 : f32 to vector<24x1xf32>
    %357 = arith.divf %355, %356 : vector<24x1xf32>
    %358 = vector.broadcast %350 : vector<24x1xf32> to vector<24x32xf32>
    %359 = arith.subf %346, %358 : vector<24x32xf32>
    %cst_118 = arith.constant 9.99999974E-6 : f32
    %360 = vector.broadcast %cst_118 : f32 to vector<24x1xf32>
    %361 = arith.addf %357, %360 : vector<24x1xf32>
    %362 = math.rsqrt %361 : vector<24x1xf32>
    %363 = vector.broadcast %362 : vector<24x1xf32> to vector<24x32xf32>
    %364 = arith.mulf %359, %363 : vector<24x32xf32>
    %365 = vector.broadcast %214 : vector<1x32xf32> to vector<24x32xf32>
    %366 = arith.mulf %364, %365 : vector<24x32xf32>
    %367 = vector.broadcast %215 : vector<1x32xf32> to vector<24x32xf32>
    %368 = arith.addf %366, %367 : vector<24x32xf32>
    %369 = vector.shape_cast %368 : vector<24x32xf32> to vector<2x12x32xf32>
    %370 = vector.extract_strided_slice %369 {offsets = [0, 0, 0], sizes = [2, 8, 32], strides = [1, 1, 1]} : vector<2x12x32xf32> to vector<2x8x32xf32>
    %371 = vector.shape_cast %370 : vector<2x8x32xf32> to vector<16x32xf32>
    %372 = arith.truncf %371 : vector<16x32xf32> to vector<16x32xbf16>
    %c0_119 = arith.constant 0 : index
    %c0_120 = arith.constant 0 : index
    %373 = vector.load %arg11[%c0_119, %c0_120] : memref<32x128xbf16, #tpu.memory_space<vmem>>, vector<32x128xbf16>
    %cst_121 = arith.constant dense<0.000000e+00> : vector<16x128xf32>
    %374 = tpu.matmul %372, %373, %cst_121 {dimension_numbers = #tpu.dot_dimension_numbers<[1], [0], [0], [1], [0, 0, 1, 1], [], []>} : vector<16x32xbf16>, vector<32x128xbf16>, vector<16x128xf32> -> vector<16x128xf32>
    %375 = vector.broadcast %2 : vector<1x128xf32> to vector<16x128xf32>
    %376 = arith.addf %374, %375 : vector<16x128xf32>
    %cst_122 = arith.constant dense<0xFF800000> : vector<16xf32>
    %377 = vector.multi_reduction <maximumf>, %376, %cst_122 [1] : vector<16x128xf32> to vector<16xf32>
    %378 = vector.shape_cast %377 : vector<16xf32> to vector<16x1xf32>
    %379 = vector.broadcast %378 : vector<16x1xf32> to vector<16x128xf32>
    %380 = arith.subf %376, %379 : vector<16x128xf32>
    %381 = math.exp %380 : vector<16x128xf32>
    %cst_123 = arith.constant dense<0.000000e+00> : vector<16xf32>
    %382 = vector.multi_reduction <add>, %381, %cst_123 [1] : vector<16x128xf32> to vector<16xf32>
    %383 = vector.shape_cast %382 : vector<16xf32> to vector<16x1xf32>
    %384 = math.log %383 : vector<16x1xf32>
    %385 = arith.addf %378, %384 : vector<16x1xf32>
    %386 = vector.broadcast %385 : vector<16x1xf32> to vector<16x128xf32>
    %387 = arith.subf %376, %386 : vector<16x128xf32>
    %388 = vector.shape_cast %387 : vector<16x128xf32> to vector<2x8x128xf32>
    %c0_124 = arith.constant 0 : index
    %c0_125 = arith.constant 0 : index
    %c0_126 = arith.constant 0 : index
    %389 = vector.load %arg14[%c0_124, %c0_125, %c0_126] : memref<2x8x128xf32, #tpu.memory_space<vmem>>, vector<2x8x128xf32>
    tpu.vector_store %arg14[%c0_124, %c0_125, %c0_126], %388 {strides = array<i32>} : memref<2x8x128xf32, #tpu.memory_space<vmem>>, vector<2x8x128xf32>,
    return
  }
  func.func @transform_0(%arg0: i32) -> (i32, i32, i32) {
    %c0_i32 = arith.constant 0 : i32
    %c0_i32_0 = arith.constant 0 : i32
    %c0_i32_1 = arith.constant 0 : i32
    return %arg0, %c0_i32, %c0_i32_0 : i32, i32, i32
  }
  func.func @transform_1(%arg0: i32) -> (i32, i32, i32) {
    %c0_i32 = arith.constant 0 : i32
    %c0_i32_0 = arith.constant 0 : i32
    %c0_i32_1 = arith.constant 0 : i32
    return %arg0, %c0_i32, %c0_i32_0 : i32, i32, i32
  }
  func.func @transform_2(%arg0: i32) -> (i32, i32, i32) {
    %c0_i32 = arith.constant 0 : i32
    %c0_i32_0 = arith.constant 0 : i32
    %c0_i32_1 = arith.constant 0 : i32
    return %arg0, %c0_i32, %c0_i32_0 : i32, i32, i32
  }
  func.func @transform_3(%arg0: i32) -> (i32, i32) {
    %c0_i32 = arith.constant 0 : i32
    %c0_i32_0 = arith.constant 0 : i32
    %c0_i32_1 = arith.constant 0 : i32
    return %c0_i32, %c0_i32_0 : i32, i32
  }
  func.func @transform_4(%arg0: i32) -> (i32, i32) {
    %c0_i32 = arith.constant 0 : i32
    %c0_i32_0 = arith.constant 0 : i32
    %c0_i32_1 = arith.constant 0 : i32
    return %c0_i32, %c0_i32_0 : i32, i32
  }
  func.func @transform_5(%arg0: i32) -> (i32, i32) {
    %c0_i32 = arith.constant 0 : i32
    %c0_i32_0 = arith.constant 0 : i32
    %c0_i32_1 = arith.constant 0 : i32
    return %c0_i32, %c0_i32_0 : i32, i32
  }
  func.func @transform_6(%arg0: i32) -> (i32, i32, i32) {
    %c0_i32 = arith.constant 0 : i32
    %c0_i32_0 = arith.constant 0 : i32
    %c0_i32_1 = arith.constant 0 : i32
    %c0_i32_2 = arith.constant 0 : i32
    return %c0_i32, %c0_i32_0, %c0_i32_1 : i32, i32, i32
  }
  func.func @transform_7(%arg0: i32) -> (i32, i32, i32) {
    %c0_i32 = arith.constant 0 : i32
    %c0_i32_0 = arith.constant 0 : i32
    %c0_i32_1 = arith.constant 0 : i32
    %c0_i32_2 = arith.constant 0 : i32
    return %c0_i32, %c0_i32_0, %c0_i32_1 : i32, i32, i32
  }
  func.func @transform_8(%arg0: i32) -> (i32, i32, i32) {
    %c0_i32 = arith.constant 0 : i32
    %c0_i32_0 = arith.constant 0 : i32
    %c0_i32_1 = arith.constant 0 : i32
    %c0_i32_2 = arith.constant 0 : i32
    return %c0_i32, %c0_i32_0, %c0_i32_1 : i32, i32, i32
  }
  func.func @transform_9(%arg0: i32) -> (i32, i32, i32) {
    %c0_i32 = arith.constant 0 : i32
    %c0_i32_0 = arith.constant 0 : i32
    %c0_i32_1 = arith.constant 0 : i32
    %c0_i32_2 = arith.constant 0 : i32
    return %c0_i32, %c0_i32_0, %c0_i32_1 : i32, i32, i32
  }
  func.func @transform_10(%arg0: i32) -> (i32, i32) {
    %c0_i32 = arith.constant 0 : i32
    %c0_i32_0 = arith.constant 0 : i32
    %c0_i32_1 = arith.constant 0 : i32
    return %c0_i32, %c0_i32_0 : i32, i32
  }
  func.func @transform_11(%arg0: i32) -> (i32, i32, i32) {
    %c0_i32 = arith.constant 0 : i32
    %c0_i32_0 = arith.constant 0 : i32
    %c0_i32_1 = arith.constant 0 : i32
    %c0_i32_2 = arith.constant 0 : i32
    return %c0_i32, %c0_i32_0, %c0_i32_1 : i32, i32, i32
  }
  func.func @transform_12(%arg0: i32) -> (i32, i32) {
    %c0_i32 = arith.constant 0 : i32
    %c0_i32_0 = arith.constant 0 : i32
    %c0_i32_1 = arith.constant 0 : i32
    return %c0_i32, %c0_i32_0 : i32, i32
  }
  func.func @transform_13(%arg0: i32) -> (i32, i32, i32) {
    %c0_i32 = arith.constant 0 : i32
    %c0_i32_0 = arith.constant 0 : i32
    %c0_i32_1 = arith.constant 0 : i32
    return %arg0, %c0_i32, %c0_i32_0 : i32, i32, i32
  }
}

</mosaic_0001>

<llo_original>
// kernel: forward.1
$region0: #{forward.1}
  #allocation0 [shape = 'u32[]', space=smem, size = 0x4, offset = 0x4, fixed_abs, tag = 'smem constant byte address 0x4 - core index']
  #allocation1 [shape = 'u32[144,128]{1,0:T(1,128)}', space=vmem, size = 0x12000, scoped, tag = 'internal scratch']
  %s0 = inlined_call_operand.vmem [shape: f32[2,1,256], index: 0, kind: input, shape index: {}]
  %s1 = inlined_call_operand.vmem [shape: s32[2,8,1], index: 1, kind: input, shape index: {}]
  %s2 = inlined_call_operand.vmem [shape: f32[2,1,12], index: 2, kind: input, shape index: {}]
  %s3 = inlined_call_operand.vmem [shape: bf16[256,128], index: 3, kind: input, shape index: {}]
  %s4 = inlined_call_operand.vmem [shape: f32[128,32], index: 4, kind: input, shape index: {}]
  %s5 = inlined_call_operand.vmem [shape: f32[8,32], index: 5, kind: input, shape index: {}]
  %s6 = inlined_call_operand.vmem [shape: bf16[2,32,96], index: 6, kind: input, shape index: {}]
  %s7 = inlined_call_operand.vmem [shape: bf16[2,32,32], index: 7, kind: input, shape index: {}]
  %s8 = inlined_call_operand.vmem [shape: bf16[2,32,64], index: 8, kind: input, shape index: {}]
  %s9 = inlined_call_operand.vmem [shape: bf16[2,64,32], index: 9, kind: input, shape index: {}]
  %s10 = inlined_call_operand.vmem [shape: bf16[32,128], index: 10, kind: input, shape index: {}]
  %s11 = inlined_call_operand.vmem [shape: f32[2,8,128], index: 11, kind: input, shape index: {}]
  %s12 = inlined_call_operand.vmem [shape: f32[2,128], index: 12, kind: input, shape index: {}]
  %s13 = inlined_call_operand.hbm [shape: f32[2,8,128], index: 13, kind: output, shape index: {}]
  %s14 = sld [smem:[#allocation0]]
  $region62: #{forward.1} parent=0
    _
  %s16 = ssub.s32 1, %s14
  %s17 = scalar_select 0, %s16, %s14
  $region1: #{forward.1} parent=0
    #allocation2 [shape = 'u8[8192]{0}', space=vmem, size = 0x2000, scoped, tag = 'output window, operand 0, single buffered']
    #allocation3 [shape = 's32[1]{0}', space=sflag, size = 0x4, scoped, tag = 'scoped memory for forward.1']
    %18 = vsyncpa [#allocation3], 0
    // Predicated region
    $region2: #{forward.1} parent=1 // pred_check
      _
    $region3: #{forward.1} parent=1 // pred_check_branch
      %20 = sbr.rel (0) target = $region5
    $region4: #{forward.1} parent=1 // pred_region
      _
    $region5: #{forward.1} parent=1 // pred_fallthru
      _
    // Predicated region
    $region6: #{forward.1} parent=1 // pred_check
      _
    $region7: #{forward.1} parent=1 // pred_check_branch
      %22 = sbr.rel (0) target = $region9
    $region8: #{forward.1} parent=1 // pred_region
      _
    $region9: #{forward.1} parent=1 // pred_fallthru
      _
    // Predicated region
    $region10: #{forward.1} parent=1 // pred_check
      _
    $region11: #{forward.1} parent=1 // pred_check_branch
      %24 = sbr.rel (0) target = $region13
    $region12: #{forward.1} parent=1 // pred_region
      _
    $region13: #{forward.1} parent=1 // pred_fallthru
      _
    // Predicated region
    $region14: #{forward.1} parent=1 // pred_check
      _
    $region15: #{forward.1} parent=1 // pred_check_branch
      %26 = sbr.rel (0) target = $region17
    $region16: #{forward.1} parent=1 // pred_region
      _
    $region17: #{forward.1} parent=1 // pred_fallthru
      _
    // Predicated region
    $region18: #{forward.1} parent=1 // pred_check
      _
    $region19: #{forward.1} parent=1 // pred_check_branch
      %28 = sbr.rel (0) target = $region21
    $region20: #{forward.1} parent=1 // pred_region
      _
    $region21: #{forward.1} parent=1 // pred_fallthru
      _
    // Predicated region
    $region22: #{forward.1} parent=1 // pred_check
      _
    $region23: #{forward.1} parent=1 // pred_check_branch
      %30 = sbr.rel (0) target = $region25
    $region24: #{forward.1} parent=1 // pred_region
      _
    $region25: #{forward.1} parent=1 // pred_fallthru
      _
    // Predicated region
    $region26: #{forward.1} parent=1 // pred_check
      _
    $region27: #{forward.1} parent=1 // pred_check_branch
      %32 = sbr.rel (0) target = $region29
    $region28: #{forward.1} parent=1 // pred_region
      _
    $region29: #{forward.1} parent=1 // pred_fallthru
      _
    // Predicated region
    $region30: #{forward.1} parent=1 // pred_check
      _
    $region31: #{forward.1} parent=1 // pred_check_branch
      %34 = sbr.rel (0) target = $region33
    $region32: #{forward.1} parent=1 // pred_region
      _
    $region33: #{forward.1} parent=1 // pred_fallthru
      _
    // Predicated region
    $region34: #{forward.1} parent=1 // pred_check
      _
    $region35: #{forward.1} parent=1 // pred_check_branch
      %36 = sbr.rel (0) target = $region37
    $region36: #{forward.1} parent=1 // pred_region
      _
    $region37: #{forward.1} parent=1 // pred_fallthru
      _
    // Predicated region
    $region38: #{forward.1} parent=1 // pred_check
      _
    $region39: #{forward.1} parent=1 // pred_check_branch
      %38 = sbr.rel (0) target = $region41
    $region40: #{forward.1} parent=1 // pred_region
      _
    $region41: #{forward.1} parent=1 // pred_fallthru
      _
    // Predicated region
    $region42: #{forward.1} parent=1 // pred_check
      _
    $region43: #{forward.1} parent=1 // pred_check_branch
      %40 = sbr.rel (0) target = $region45
    $region44: #{forward.1} parent=1 // pred_region
      _
    $region45: #{forward.1} parent=1 // pred_fallthru
      _
    // Predicated region
    $region46: #{forward.1} parent=1 // pred_check
      _
    $region47: #{forward.1} parent=1 // pred_check_branch
      %42 = sbr.rel (0) target = $region49
    $region48: #{forward.1} parent=1 // pred_region
      _
    $region49: #{forward.1} parent=1 // pred_fallthru
      _
    // Predicated region
    $region50: #{forward.1} parent=1 // pred_check
      _
    $region51: #{forward.1} parent=1 // pred_check_branch
      %44 = sbr.rel (0) target = $region53
    $region52: #{forward.1} parent=1 // pred_region
      _
    $region53: #{forward.1} parent=1 // pred_fallthru
      _
    %v46 = vld [vmem:[%s12] sm:$0x3]
    %v47 = vld [vmem:[%s1] sm:$0xff]
    %v48 = vld [vmem:[%s1 + $0x8] sm:$0xff]
    %v49 = vlaneseq
    %v50 = vand.u32 %v49, 127
    %51 = vset.pattern.permute.xlu0 0
    %52 = vperm.xlu0 %51, %v47
    %v53 = vpop.permute.xlu0 %52
    %54 = vset.pattern.permute.xlu0 0
    %55 = vperm.xlu0 %54, %v48
    %v56 = vpop.permute.xlu0 %55
    %vm57 = vcmp.eq.s32.totalorder %v53, %v50
    %vm58 = vcmp.eq.s32.totalorder %v56, %v50
    %v59 = vsel %vm57, 1, 0
    %v60 = vsel %vm58, 1, 0
    %v61 = vcvt.s32.f32 %v59
    %v62 = vcvt.s32.f32 %v60
    %v63 = vld [vmem:[%s4] sm:$0xff]
    %v64 = vld [vmem:[%s4 + $0x8] sm:$0xff]
    %v65 = vld [vmem:[%s4 + $0x10] sm:$0xff]
    %v66 = vld [vmem:[%s4 + $0x18] sm:$0xff]
    %v67 = vld [vmem:[%s4 + $0x20] sm:$0xff]
    %v68 = vld [vmem:[%s4 + $0x28] sm:$0xff]
    %v69 = vld [vmem:[%s4 + $0x30] sm:$0xff]
    %v70 = vld [vmem:[%s4 + $0x38] sm:$0xff]
    %v71 = vld [vmem:[%s4 + $0x40] sm:$0xff]
    %v72 = vld [vmem:[%s4 + $0x48] sm:$0xff]
    %v73 = vld [vmem:[%s4 + $0x50] sm:$0xff]
    %v74 = vld [vmem:[%s4 + $0x58] sm:$0xff]
    %v75 = vld [vmem:[%s4 + $0x60] sm:$0xff]
    %v76 = vld [vmem:[%s4 + $0x68] sm:$0xff]
    %v77 = vld [vmem:[%s4 + $0x70] sm:$0xff]
    %v78 = vld [vmem:[%s4 + $0x78] sm:$0xff]
    %79 = vmatprep.subr.mxu0 0.0
    %80 = vmatpush1.msra.mxu0 %v78
    %81 = vmatprep.subr.mxu0 0.0
    %82 = vmatpush1.msra.mxu0 %v77
    %83 = vmatprep.subr.mxu0 0.0
    %84 = vmatpush1.msra.mxu0 %v76
    %85 = vmatprep.subr.mxu0 0.0
    %86 = vmatpush1.msra.mxu0 %v75
    %87 = vmatprep.subr.mxu0 0.0
    %88 = vmatpush1.msra.mxu0 %v74
    %89 = vmatprep.subr.mxu0 0.0
    %90 = vmatpush1.msra.mxu0 %v73
    %91 = vmatprep.subr.mxu0 0.0
    %92 = vmatpush1.msra.mxu0 %v72
    %93 = vmatprep.subr.mxu0 0.0
    %94 = vmatpush1.msra.mxu0 %v71
    %95 = vmatprep.subr.mxu0 0.0
    %96 = vmatpush1.msra.mxu0 %v70
    %97 = vmatprep.subr.mxu0 0.0
    %98 = vmatpush1.msra.mxu0 %v69
    %99 = vmatprep.subr.mxu0 0.0
    %100 = vmatpush1.msra.mxu0 %v68
    %101 = vmatprep.subr.mxu0 0.0
    %102 = vmatpush1.msra.mxu0 %v67
    %103 = vmatprep.subr.mxu0 0.0
    %104 = vmatpush1.msra.mxu0 %v66
    %105 = vmatprep.subr.mxu0 0.0
    %106 = vmatpush1.msra.mxu0 %v65
    %107 = vmatprep.subr.mxu0 0.0
    %108 = vmatpush1.msra.mxu0 %v64
    %109 = vmatprep.subr.mxu0 0.0
    %110 = vmatpush1.msra.mxu0 %v63
    %111 = vmatprep.subr.mxu0 0.0
    %112 = vmatpush2.msra.mxu0 0.0
    %113 = vmatprep.subr.mxu0 0.0
    %114 = vmatpush2.msra.mxu0 0.0
    %115 = vmatprep.subr.mxu0 0.0
    %116 = vmatpush2.msra.mxu0 0.0
    %117 = vmatprep.subr.mxu0 0.0
    %118 = vmatpush2.msra.mxu0 0.0
    %119 = vmatprep.subr.mxu0 0.0
    %120 = vmatpush2.msra.mxu0 0.0
    %121 = vmatprep.subr.mxu0 0.0
    %122 = vmatpush2.msra.mxu0 0.0
    %123 = vmatprep.subr.mxu0 0.0
    %124 = vmatpush2.msra.mxu0 0.0
    %125 = vmatprep.subr.mxu0 0.0
    %126 = vmatpush2.msra.mxu0 0.0
    %127 = vmatprep.subr.mxu0 0.0
    %128 = vmatpush2.msra.mxu0 0.0
    %129 = vmatprep.subr.mxu0 0.0
    %130 = vmatpush2.msra.mxu0 0.0
    %131 = vmatprep.subr.mxu0 0.0
    %132 = vmatpush2.msra.mxu0 0.0
    %133 = vmatprep.subr.mxu0 0.0
    %134 = vmatpush2.msra.mxu0 0.0
    %135 = vmatprep.subr.mxu0 0.0
    %136 = vmatpush2.msra.mxu0 0.0
    %137 = vmatprep.subr.mxu0 0.0
    %138 = vmatpush2.msra.mxu0 0.0
    %139 = vmatprep.subr.mxu0 0.0
    %140 = vmatpush2.msra.mxu0 0.0
    %141 = vmatprep.subr.mxu0 0.0
    %142 = vmatpush2.msra.mxu0 0.0
    %143 = vmatprep.mubr.f32.mxu0 0.0
    %144 = vmatmul.mubr.f32.gmra.mxu0 %v61
    %v145 = vpop.f32.mrf.mxu0
    %v146 = vadd.f32 0.0, %v145
    %v147 = vpop.f32.mrf.mxu0
    %148 = vmatprep.mubr.f32.mxu0 0.0
    %149 = vmatmul.mubr.f32.gmra.mxu0 %v62
    %v150 = vpop.f32.mrf.mxu0
    %v151 = vadd.f32 0.0, %v150
    %v152 = vpop.f32.mrf.mxu0
    %153 = vdwg.mxu0
    %v154 = vld [vmem:[%s5] sm:$0xff]
    %v155 = vadd.f32 %v146, %v154
    %v156 = vadd.f32 %v151, %v154
    %v157 = vld [vmem:[%s0] sm:$0x3]
    %v158 = vld [vmem:[%s0 + $0x2] sm:$0x3]
    %v161 = vlaneseq
    %v162 = vshrl.u32 %v161, 7
    %v163 = vsub.s32 0, %v162
    %v164 = vrot.slane %v157, %v163
    %v165 = vlaneseq
    %v166 = vshrl.u32 %v165, 7
    %v167 = vsub.s32 1, %v166
    %v168 = vrot.slane %v157, %v167
    %v169 = vlaneseq
    %v170 = vshrl.u32 %v169, 7
    %v171 = vsub.s32 0, %v170
    %v172 = vrot.slane %v158, %v171
    %v173 = vlaneseq
    %v174 = vshrl.u32 %v173, 7
    %v175 = vsub.s32 1, %v174
    %v176 = vrot.slane %v158, %v175
    %v181 = vpack.c.bf16 %v164, %v164
    %v182 = vpack.c.bf16 %v168, %v168
    %v183 = vpack.c.bf16 %v172, %v172
    %v184 = vpack.c.bf16 %v176, %v176
    %v185 = vld [vmem:[%s3] sm:$0xf]
    %v186 = vld [vmem:[%s3 + $0x4] sm:$0xf]
    %v187 = vld [vmem:[%s3 + $0x8] sm:$0xf]
    %v188 = vld [vmem:[%s3 + $0xc] sm:$0xf]
    %v189 = vld [vmem:[%s3 + $0x10] sm:$0xf]
    %v190 = vld [vmem:[%s3 + $0x14] sm:$0xf]
    %v191 = vld [vmem:[%s3 + $0x18] sm:$0xf]
    %v192 = vld [vmem:[%s3 + $0x1c] sm:$0xf]
    %v193 = vld [vmem:[%s3 + $0x20] sm:$0xf]
    %v194 = vld [vmem:[%s3 + $0x24] sm:$0xf]
    %v195 = vld [vmem:[%s3 + $0x28] sm:$0xf]
    %v196 = vld [vmem:[%s3 + $0x2c] sm:$0xf]
    %v197 = vld [vmem:[%s3 + $0x30] sm:$0xf]
    %v198 = vld [vmem:[%s3 + $0x34] sm:$0xf]
    %v199 = vld [vmem:[%s3 + $0x38] sm:$0xf]
    %v200 = vld [vmem:[%s3 + $0x3c] sm:$0xf]
    %v201 = vld [vmem:[%s3 + $0x40] sm:$0xf]
    %v202 = vld [vmem:[%s3 + $0x44] sm:$0xf]
    %v203 = vld [vmem:[%s3 + $0x48] sm:$0xf]
    %v204 = vld [vmem:[%s3 + $0x4c] sm:$0xf]
    %v205 = vld [vmem:[%s3 + $0x50] sm:$0xf]
    %v206 = vld [vmem:[%s3 + $0x54] sm:$0xf]
    %v207 = vld [vmem:[%s3 + $0x58] sm:$0xf]
    %v208 = vld [vmem:[%s3 + $0x5c] sm:$0xf]
    %v209 = vld [vmem:[%s3 + $0x60] sm:$0xf]
    %v210 = vld [vmem:[%s3 + $0x64] sm:$0xf]
    %v211 = vld [vmem:[%s3 + $0x68] sm:$0xf]
    %v212 = vld [vmem:[%s3 + $0x6c] sm:$0xf]
    %v213 = vld [vmem:[%s3 + $0x70] sm:$0xf]
    %v214 = vld [vmem:[%s3 + $0x74] sm:$0xf]
    %v215 = vld [vmem:[%s3 + $0x78] sm:$0xf]
    %v216 = vld [vmem:[%s3 + $0x7c] sm:$0xf]
    %v217 = vlaneseq
    %v218 = vshrl.u32 %v217, 7
    %v219 = vsub.s32 0, %v218
    %v220 = vrot.slane %v46, %v219
    %v225 = vunpack.c.l.b16 %v181
    %v226 = vunpack.c.l.b16 %v182
    %v227 = vunpack.c.l.b16 %v183
    %v228 = vunpack.c.l.b16 %v184
    %v229 = vrot.slane %v227, 7
    %vm230 = vcmask 1041409
    %v231 = vsel %vm230, %v229, %v225
    %v232 = vrot.slane %v228, 7
    %v233 = vsel %vm230, %v232, %v226
    %v234 = vpack.c.b16 %v231, %v231
    %v235 = vpack.c.b16 %v233, %v233
    %v270 = vunpack.c.l.b16 %v185
    %v271 = vunpack.c.l.b16 %v186
    %v272 = vunpack.c.l.b16 %v187
    %v273 = vunpack.c.l.b16 %v188
    %v274 = vunpack.c.l.b16 %v189
    %v275 = vunpack.c.l.b16 %v190
    %v276 = vunpack.c.l.b16 %v191
    %v277 = vunpack.c.l.b16 %v192
    %v278 = vunpack.c.l.b16 %v193
    %v279 = vunpack.c.l.b16 %v194
    %v280 = vunpack.c.l.b16 %v195
    %v281 = vunpack.c.l.b16 %v196
    %v282 = vunpack.c.l.b16 %v197
    %v283 = vunpack.c.l.b16 %v198
    %v284 = vunpack.c.l.b16 %v199
    %v285 = vunpack.c.l.b16 %v200
    %v286 = vunpack.c.l.b16 %v201
    %v287 = vunpack.c.l.b16 %v202
    %v288 = vunpack.c.l.b16 %v203
    %v289 = vunpack.c.l.b16 %v204
    %v290 = vunpack.c.l.b16 %v205
    %v291 = vunpack.c.l.b16 %v206
    %v292 = vunpack.c.l.b16 %v207
    %v293 = vunpack.c.l.b16 %v208
    %v294 = vunpack.c.l.b16 %v209
    %v295 = vunpack.c.l.b16 %v210
    %v296 = vunpack.c.l.b16 %v211
    %v297 = vunpack.c.l.b16 %v212
    %v298 = vunpack.c.l.b16 %v213
    %v299 = vunpack.c.l.b16 %v214
    %v300 = vunpack.c.l.b16 %v215
    %v301 = vunpack.c.l.b16 %v216
    %v302 = vpack.c.b16 %v271, %v270
    %v303 = vpack.c.b16 %v273, %v272
    %v304 = vpack.c.b16 %v275, %v274
    %v305 = vpack.c.b16 %v277, %v276
    %v306 = vpack.c.b16 %v279, %v278
    %v307 = vpack.c.b16 %v281, %v280
    %v308 = vpack.c.b16 %v283, %v282
    %v309 = vpack.c.b16 %v285, %v284
    %v310 = vpack.c.b16 %v287, %v286
    %v311 = vpack.c.b16 %v289, %v288
    %v312 = vpack.c.b16 %v291, %v290
    %v313 = vpack.c.b16 %v293, %v292
    %v314 = vpack.c.b16 %v295, %v294
    %v315 = vpack.c.b16 %v297, %v296
    %v316 = vpack.c.b16 %v299, %v298
    %v317 = vpack.c.b16 %v301, %v300
    %334 = vmatprep.subr.bf16.mxu0 0
    %335 = vmatpush1.bf16.msra.mxu0 %v309
    %336 = vmatprep.subr.bf16.mxu0 0
    %337 = vmatpush1.bf16.msra.mxu0 %v308
    %338 = vmatprep.subr.bf16.mxu0 0
    %339 = vmatpush1.bf16.msra.mxu0 %v307
    %340 = vmatprep.subr.bf16.mxu0 0
    %341 = vmatpush1.bf16.msra.mxu0 %v306
    %342 = vmatprep.subr.bf16.mxu0 0
    %343 = vmatpush1.bf16.msra.mxu0 %v305
    %344 = vmatprep.subr.bf16.mxu0 0
    %345 = vmatpush1.bf16.msra.mxu0 %v304
    %346 = vmatprep.subr.bf16.mxu0 0
    %347 = vmatpush1.bf16.msra.mxu0 %v303
    %348 = vmatprep.subr.bf16.mxu0 0
    %349 = vmatpush1.bf16.msra.mxu0 %v302
    %350 = vmatprep.subr.bf16.mxu0 0
    %351 = vmatpush2.bf16.msra.mxu0 %v317
    %352 = vmatprep.subr.bf16.mxu0 0
    %353 = vmatpush2.bf16.msra.mxu0 %v316
    %354 = vmatprep.subr.bf16.mxu0 0
    %355 = vmatpush2.bf16.msra.mxu0 %v315
    %356 = vmatprep.subr.bf16.mxu0 0
    %357 = vmatpush2.bf16.msra.mxu0 %v314
    %358 = vmatprep.subr.bf16.mxu0 0
    %359 = vmatpush2.bf16.msra.mxu0 %v313
    %360 = vmatprep.subr.bf16.mxu0 0
    %361 = vmatpush2.bf16.msra.mxu0 %v312
    %362 = vmatprep.subr.bf16.mxu0 0
    %363 = vmatpush2.bf16.msra.mxu0 %v311
    %364 = vmatprep.subr.bf16.mxu0 0
    %365 = vmatpush2.bf16.msra.mxu0 %v310
    %366 = vmatprep.mubr.bf16.mxu0 %v235
    %367 = vmatmul.mubr.bf16.gmra.mxu0 %v234
    %v368 = vpop.f32.mrf.mxu0
    %v369 = vadd.f32 %v220, %v368
    %v370 = vpop.f32.mrf.mxu0
    %v371 = vpop.f32.mrf.mxu0
    %v372 = vpop.f32.mrf.mxu0
    %373 = vdwg.mxu0
    %375 = vrot.lane.b32.xlu0 %v369, 96
    %v376 = vpop.permute.xlu0 %375
    %378 = vrot.lane.b32.xlu0 %v369, 64
    %v379 = vpop.permute.xlu0 %378
    %381 = vrot.lane.b32.xlu0 %v369, 32
    %v382 = vpop.permute.xlu0 %381
    %v384 = vcombine.low %v369, %v379
    %v386 = vunpack.c.l.s4 1983009808
    %v387 = vunpack.c.0.s8 %v386
    %v388 = vlaneseq
    %v389 = vshrl.u32 %v388, 7
    %v390 = vsub.s32 %v387, %v389
    %v391 = vrot.slane %v384, %v390
    %v392 = vcombine.low %v376, %v382
    %v394 = vunpack.c.l.s4 1983009808
    %v395 = vunpack.c.0.s8 %v394
    %v396 = vlaneseq
    %v397 = vshrl.u32 %v396, 7
    %v398 = vsub.s32 %v395, %v397
    %v399 = vrot.slane %v392, %v398
    %v400 = vcombine.low %v391, %v399
    %v402 = vunpack.c.l.s4 1934713408
    %v403 = vunpack.c.0.s8 %v402
    %v404 = vlaneseq
    %v405 = vshrl.u32 %v404, 7
    %v406 = vsub.s32 %v403, %v405
    %v407 = vrot.slane %v400, %v406
    %v408 = vcombine.high %v407, 0.0
    %v413 = vcombine.high %v155, %v155
    %v414 = vcombine.high %v156, %v156
    %v417 = vlaneseq
    %v418 = vshrl.u32 %v417, 7
    %v419 = vadd.s32 %v418, 8
    %vm420 = vcmp.ge.s32.totalorder %v50, 8
    %vm421 = vcmp.lt.s32.totalorder %v418, 8
    %vm422 = vcmp.lt.s32.totalorder %v419, 8
    %vm423 = vcmp.le.s32.totalorder %v50, %v418
    %vm424 = vcmp.le.s32.totalorder %v50, %v419
    %vm425 = vmand %vm421, %vm423
    %vm426 = vmand %vm422, %vm424
    %vm427 = vmor %vm420, %vm425
    %vm428 = vmor %vm420, %vm426
    %v429 = vsel %vm427, 0.0, -1e+30
    %v430 = vsel %vm428, 0.0, -1e+30
    %v431 = vld [vmem:[%s2] sm:$0x1]
    %v432 = vld [vmem:[%s2 + $0x1] sm:$0x1]
    %v435 = vlaneseq
    %v436 = vshrl.u32 %v435, 7
    %v437 = vsub.s32 0, %v436
    %v438 = vrot.slane %v431, %v437
    %v439 = vlaneseq
    %v440 = vshrl.u32 %v439, 7
    %v441 = vsub.s32 0, %v440
    %v442 = vrot.slane %v432, %v441
    %v445 = vadd.f32 %v429, %v438
    %v446 = vadd.f32 %v430, %v438
    %v447 = vadd.f32 %v429, %v442
    %v448 = vadd.f32 %v430, %v442
    %v449 = vld [vmem:[%s11] sm:$0xff]
    %v450 = vcombine.low %v155, %v413
    %v451 = vcombine.low %v407, %v156
    %v452 = vcombine.low %v414, %v408
    %v456 = vpack.c.bf16 %v451, %v450
    %v457 = vpack.c.bf16 %v452, %v452
    %v458 = vld [vmem:[%s6] sm:$0xf]
    %v459 = vld [vmem:[%s6 + $0x4] sm:$0xf]
    %v460 = vld [vmem:[%s6 + $0x8] sm:$0xf]
    %v461 = vld [vmem:[%s6 + $0xc] sm:$0xf]
    %v462 = vlaneseq
    %v463 = vshrl.u32 %v462, 7
    %v464 = vsub.s32 0, %v463
    %v465 = vrot.slane %v449, %v464
    %v470 = vunpack.c.l.b16 %v458
    %v471 = vunpack.c.l.b16 %v459
    %v472 = vunpack.c.l.b16 %v460
    %v473 = vunpack.c.l.b16 %v461
    %v474 = vpack.c.b16 %v471, %v470
    %v475 = vpack.c.b16 %v473, %v472
    %vm478 = vcmask 261120
    %v480 = vsel %vm478, %v456, 0
    %v483 = vsel %vm478, %v457, 0
    %485 = vmatprep.subr.bf16.mxu0 0
    %486 = vmatpush1.bf16.msra.mxu0 0
    %487 = vmatprep.subr.bf16.mxu0 0
    %488 = vmatpush1.bf16.msra.mxu0 0
    %489 = vmatprep.subr.bf16.mxu0 0
    %490 = vmatpush1.bf16.msra.mxu0 0
    %491 = vmatprep.subr.bf16.mxu0 0
    %492 = vmatpush1.bf16.msra.mxu0 0
    %493 = vmatprep.subr.bf16.mxu0 0
    %494 = vmatpush1.bf16.msra.mxu0 0
    %495 = vmatprep.subr.bf16.mxu0 0
    %496 = vmatpush1.bf16.msra.mxu0 0
    %497 = vmatprep.subr.bf16.mxu0 0
    %498 = vmatpush1.bf16.msra.mxu0 %v475
    %499 = vmatprep.subr.bf16.mxu0 0
    %500 = vmatpush1.bf16.msra.mxu0 %v474
    %501 = vmatprep.subr.bf16.mxu0 0
    %502 = vmatpush2.bf16.msra.mxu0 0
    %503 = vmatprep.subr.bf16.mxu0 0
    %504 = vmatpush2.bf16.msra.mxu0 0
    %505 = vmatprep.subr.bf16.mxu0 0
    %506 = vmatpush2.bf16.msra.mxu0 0
    %507 = vmatprep.subr.bf16.mxu0 0
    %508 = vmatpush2.bf16.msra.mxu0 0
    %509 = vmatprep.subr.bf16.mxu0 0
    %510 = vmatpush2.bf16.msra.mxu0 0
    %511 = vmatprep.subr.bf16.mxu0 0
    %512 = vmatpush2.bf16.msra.mxu0 0
    %513 = vmatprep.subr.bf16.mxu0 0
    %514 = vmatpush2.bf16.msra.mxu0 0
    %515 = vmatprep.subr.bf16.mxu0 0
    %516 = vmatpush2.bf16.msra.mxu0 0
    %517 = vmatprep.mubr.bf16.mxu0 0
    %518 = vmatmul.mubr.bf16.gmra.mxu0 %v480
    %v519 = vpop.f32.mrf.mxu0
    %v520 = vadd.f32 %v465, %v519
    %v521 = vpop.f32.mrf.mxu0
    %v522 = vpop.f32.mrf.mxu0
    %v523 = vadd.f32 %v465, %v522
    %v524 = vpop.f32.mrf.mxu0
    %525 = vmatprep.mubr.bf16.mxu0 0
    %526 = vmatmul.mubr.bf16.gmra.mxu0 %v483
    %v527 = vpop.f32.mrf.mxu0
    %v528 = vadd.f32 %v465, %v527
    %v529 = vpop.f32.mrf.mxu0
    %v530 = vpop.f32.mrf.mxu0
    %v531 = vpop.f32.mrf.mxu0
    %532 = vdwg.mxu0
    %v536 = vcombine.high %v520, %v520
    %v537 = vcombine.high %v523, %v523
    %v538 = vcombine.high %v528, %v528
    %v539 = vcombine.low %v520, %v536
    %540 = vrot.lane.b32.xlu0 %v539, 96
    %v541 = vpop.permute.xlu0 %540
    %542 = vrot.lane.b32.xlu0 %v523, 96
    %v543 = vpop.permute.xlu0 %542
    %vm544 = vcmask 64512
    %v545 = vsel %vm544, %v539, 0
    %v547 = vsel %vm544, %v523, 0
    %v549 = vsel %vm544, %v541, 0
    %v551 = vsel %vm544, %v543, 0
    %553 = vmatprep.subr.mxu0 0.0
    %554 = vmatpush1.xpose.msra.mxu0 0.0
    %555 = vmatprep.subr.mxu0 0.0
    %556 = vmatpush1.xpose.msra.mxu0 0.0
    %557 = vmatprep.subr.mxu0 0.0
    %558 = vmatpush1.xpose.msra.mxu0 0.0
    %559 = vmatprep.subr.mxu0 0.0
    %560 = vmatpush1.xpose.msra.mxu0 0.0
    %561 = vmatprep.subr.mxu0 0.0
    %562 = vmatpush1.xpose.msra.mxu0 0.0
    %563 = vmatprep.subr.mxu0 0.0
    %564 = vmatpush1.xpose.msra.mxu0 0.0
    %565 = vmatprep.subr.mxu0 0.0
    %566 = vmatpush1.xpose.msra.mxu0 0.0
    %567 = vmatprep.subr.mxu0 0.0
    %568 = vmatpush1.xpose.msra.mxu0 0.0
    %569 = vmatprep.subr.mxu0 0.0
    %570 = vmatpush1.xpose.msra.mxu0 0.0
    %571 = vmatprep.subr.mxu0 0.0
    %572 = vmatpush1.xpose.msra.mxu0 0.0
    %573 = vmatprep.subr.mxu0 0.0
    %574 = vmatpush1.xpose.msra.mxu0 0.0
    %575 = vmatprep.subr.mxu0 0.0
    %576 = vmatpush1.xpose.msra.mxu0 0.0
    %577 = vmatprep.subr.mxu0 0.0
    %578 = vmatpush1.xpose.msra.mxu0 0.0
    %579 = vmatprep.subr.mxu0 0.0
    %580 = vmatpush1.xpose.msra.mxu0 0.0
    %581 = vmatprep.subr.mxu0 0.0
    %582 = vmatpush1.xpose.msra.mxu0 %v551
    %583 = vmatprep.subr.mxu0 0.0
    %584 = vmatpush1.xpose.msra.mxu0 %v549
    %585 = vmatprep.subr.mxu0 0.0
    %586 = vmatpush2.xpose.msra.mxu0 0.0
    %587 = vmatprep.subr.mxu0 0.0
    %588 = vmatpush2.xpose.msra.mxu0 0.0
    %589 = vmatprep.subr.mxu0 0.0
    %590 = vmatpush2.xpose.msra.mxu0 0.0
    %591 = vmatprep.subr.mxu0 0.0
    %592 = vmatpush2.xpose.msra.mxu0 0.0
    %593 = vmatprep.subr.mxu0 0.0
    %594 = vmatpush2.xpose.msra.mxu0 0.0
    %595 = vmatprep.subr.mxu0 0.0
    %596 = vmatpush2.xpose.msra.mxu0 0.0
    %597 = vmatprep.subr.mxu0 0.0
    %598 = vmatpush2.xpose.msra.mxu0 0.0
    %599 = vmatprep.subr.mxu0 0.0
    %600 = vmatpush2.xpose.msra.mxu0 0.0
    %601 = vmatprep.subr.mxu0 0.0
    %602 = vmatpush2.xpose.msra.mxu0 0.0
    %603 = vmatprep.subr.mxu0 0.0
    %604 = vmatpush2.xpose.msra.mxu0 0.0
    %605 = vmatprep.subr.mxu0 0.0
    %606 = vmatpush2.xpose.msra.mxu0 0.0
    %607 = vmatprep.subr.mxu0 0.0
    %608 = vmatpush2.xpose.msra.mxu0 0.0
    %609 = vmatprep.subr.mxu0 0.0
    %610 = vmatpush2.xpose.msra.mxu0 0.0
    %611 = vmatprep.subr.mxu0 0.0
    %612 = vmatpush2.xpose.msra.mxu0 0.0
    %613 = vmatprep.subr.mxu0 0.0
    %614 = vmatpush2.xpose.msra.mxu0 0.0
    %615 = vmatprep.subr.mxu0 0.0
    %616 = vmatpush2.xpose.msra.mxu0 0.0
    %617 = vmatprep.mubr.f32.mxu0 0.0
    %618 = vmatmul.mubr.f32.gmra.mxu0 %v545
    %v619 = vpop.f32.mrf.mxu0
    %v620 = vadd.f32 0.0, %v619
    %v621 = vpop.f32.mrf.mxu0
    %622 = vmatprep.mubr.f32.mxu0 0.0
    %623 = vmatmul.mubr.f32.gmra.mxu0 %v547
    %v624 = vpop.f32.mrf.mxu0
    %v625 = vadd.f32 0.0, %v624
    %v626 = vpop.f32.mrf.mxu0
    %627 = vdwg.mxu0
    %v628 = vcombine.low %v537, %v528
    %629 = vrot.lane.b32.xlu0 %v628, 96
    %v630 = vpop.permute.xlu0 %629
    %631 = vrot.lane.b32.xlu0 %v538, 96
    %v632 = vpop.permute.xlu0 %631
    %v633 = vsel %vm544, %v628, 0
    %v635 = vsel %vm544, %v538, 0
    %v637 = vsel %vm544, %v630, 0
    %v639 = vsel %vm544, %v632, 0
    %641 = vmatprep.subr.mxu0 0.0
    %642 = vmatpush1.xpose.msra.mxu0 0.0
    %643 = vmatprep.subr.mxu0 0.0
    %644 = vmatpush1.xpose.msra.mxu0 0.0
    %645 = vmatprep.subr.mxu0 0.0
    %646 = vmatpush1.xpose.msra.mxu0 0.0
    %647 = vmatprep.subr.mxu0 0.0
    %648 = vmatpush1.xpose.msra.mxu0 0.0
    %649 = vmatprep.subr.mxu0 0.0
    %650 = vmatpush1.xpose.msra.mxu0 0.0
    %651 = vmatprep.subr.mxu0 0.0
    %652 = vmatpush1.xpose.msra.mxu0 0.0
    %653 = vmatprep.subr.mxu0 0.0
    %654 = vmatpush1.xpose.msra.mxu0 0.0
    %655 = vmatprep.subr.mxu0 0.0
    %656 = vmatpush1.xpose.msra.mxu0 0.0
    %657 = vmatprep.subr.mxu0 0.0
    %658 = vmatpush1.xpose.msra.mxu0 0.0
    %659 = vmatprep.subr.mxu0 0.0
    %660 = vmatpush1.xpose.msra.mxu0 0.0
    %661 = vmatprep.subr.mxu0 0.0
    %662 = vmatpush1.xpose.msra.mxu0 0.0
    %663 = vmatprep.subr.mxu0 0.0
    %664 = vmatpush1.xpose.msra.mxu0 0.0
    %665 = vmatprep.subr.mxu0 0.0
    %666 = vmatpush1.xpose.msra.mxu0 0.0
    %667 = vmatprep.subr.mxu0 0.0
    %668 = vmatpush1.xpose.msra.mxu0 0.0
    %669 = vmatprep.subr.mxu0 0.0
    %670 = vmatpush1.xpose.msra.mxu0 %v639
    %671 = vmatprep.subr.mxu0 0.0
    %672 = vmatpush1.xpose.msra.mxu0 %v637
    %673 = vmatprep.subr.mxu0 0.0
    %674 = vmatpush2.xpose.msra.mxu0 0.0
    %675 = vmatprep.subr.mxu0 0.0
    %676 = vmatpush2.xpose.msra.mxu0 0.0
    %677 = vmatprep.subr.mxu0 0.0
    %678 = vmatpush2.xpose.msra.mxu0 0.0
    %679 = vmatprep.subr.mxu0 0.0
    %680 = vmatpush2.xpose.msra.mxu0 0.0
    %681 = vmatprep.subr.mxu0 0.0
    %682 = vmatpush2.xpose.msra.mxu0 0.0
    %683 = vmatprep.subr.mxu0 0.0
    %684 = vmatpush2.xpose.msra.mxu0 0.0
    %685 = vmatprep.subr.mxu0 0.0
    %686 = vmatpush2.xpose.msra.mxu0 0.0
    %687 = vmatprep.subr.mxu0 0.0
    %688 = vmatpush2.xpose.msra.mxu0 0.0
    %689 = vmatprep.subr.mxu0 0.0
    %690 = vmatpush2.xpose.msra.mxu0 0.0
    %691 = vmatprep.subr.mxu0 0.0
    %692 = vmatpush2.xpose.msra.mxu0 0.0
    %693 = vmatprep.subr.mxu0 0.0
    %694 = vmatpush2.xpose.msra.mxu0 0.0
    %695 = vmatprep.subr.mxu0 0.0
    %696 = vmatpush2.xpose.msra.mxu0 0.0
    %697 = vmatprep.subr.mxu0 0.0
    %698 = vmatpush2.xpose.msra.mxu0 0.0
    %699 = vmatprep.subr.mxu0 0.0
    %700 = vmatpush2.xpose.msra.mxu0 0.0
    %701 = vmatprep.subr.mxu0 0.0
    %702 = vmatpush2.xpose.msra.mxu0 0.0
    %703 = vmatprep.subr.mxu0 0.0
    %704 = vmatpush2.xpose.msra.mxu0 0.0
    %705 = vmatprep.mubr.f32.mxu0 0.0
    %706 = vmatmul.mubr.f32.gmra.mxu0 %v633
    %v707 = vpop.f32.mrf.mxu0
    %v708 = vadd.f32 0.0, %v707
    %v709 = vpop.f32.mrf.mxu0
    %710 = vmatprep.mubr.f32.mxu0 0.0
    %711 = vmatmul.mubr.f32.gmra.mxu0 %v635
    %v712 = vpop.f32.mrf.mxu0
    %v713 = vadd.f32 0.0, %v712
    %v714 = vpop.f32.mrf.mxu0
    %715 = vdwg.mxu0
    %v716 = vmul.f32 %v620, 0.35355338
    %v717 = vmul.f32 %v625, 0.35355338
    %v718 = vmul.f32 %v708, 0.35355338
    %v719 = vmul.f32 %v713, 0.35355338
    %v720 = vadd.f32 %v716, %v445
    %v721 = vadd.f32 %v717, %v446
    %v722 = vadd.f32 %v718, %v447
    %v723 = vadd.f32 %v719, %v448
    %vm724 = vcmask 97280
    %v725 = vsel %vm724, %v720, -inf
    %726 = vmax.xlane.f32.xlu0 %v725
    %v727 = vpop.xlane.xlu0 %726
    %vm728 = vcmask 93184
    %v729 = vsel %vm728, %v721, -inf
    %730 = vmax.xlane.f32.xlu0 %v729
    %v731 = vpop.xlane.xlu0 %730
    %v732 = vsel %vm724, %v722, -inf
    %733 = vmax.xlane.f32.xlu0 %v732
    %v734 = vpop.xlane.xlu0 %733
    %v735 = vsel %vm728, %v723, -inf
    %736 = vmax.xlane.f32.xlu0 %v735
    %v737 = vpop.xlane.xlu0 %736
    %v738 = vsub.f32 %v720, %v727
    %v739 = vsub.f32 %v721, %v731
    %v740 = vsub.f32 %v722, %v734
    %v741 = vsub.f32 %v723, %v737
    %v742 = vmul.f32 %v738, 1.442695
    %v743 = vpow.pop %v742
    %v744 = vmul.f32 %v739, 1.442695
    %v745 = vpow.pop %v744
    %v746 = vmul.f32 %v740, 1.442695
    %v747 = vpow.pop %v746
    %v748 = vmul.f32 %v741, 1.442695
    %v749 = vpow.pop %v748
    %v750 = vsel %vm724, %v743, 0.0
    %751 = vadd.xlane.f32.xlu0 %v750
    %v752 = vpop.xlane.xlu0 %751
    %v753 = vsel %vm728, %v745, 0.0
    %754 = vadd.xlane.f32.xlu0 %v753
    %v755 = vpop.xlane.xlu0 %754
    %v756 = vsel %vm724, %v747, 0.0
    %757 = vadd.xlane.f32.xlu0 %v756
    %v758 = vpop.xlane.xlu0 %757
    %v759 = vsel %vm728, %v749, 0.0
    %760 = vadd.xlane.f32.xlu0 %v759
    %v761 = vpop.xlane.xlu0 %760
    %v762 = vrcp.pop %v752
    %v763 = vrcp.pop %v755
    %v764 = vrcp.pop %v758
    %v765 = vrcp.pop %v761
    %v766 = vmul.f32 %v743, %v762
    %v767 = vmul.f32 %v745, %v763
    %v768 = vmul.f32 %v747, %v764
    %v769 = vmul.f32 %v749, %v765
    %770 = vrot.lane.b32.xlu0 %v539, 64
    %v771 = vpop.permute.xlu0 %770
    %772 = vrot.lane.b32.xlu0 %v523, 64
    %v773 = vpop.permute.xlu0 %772
    %v776 = vsel %vm724, %v766, 0
    %v779 = vsel %vm724, %v767, 0
    %vm781 = vcmask 1043456
    %v782 = vsel %vm781, %v773, 0
    %784 = vmatprep.subr.mxu0 0.0
    %785 = vmatpush1.msra.mxu0 0.0
    %786 = vmatprep.subr.mxu0 0.0
    %787 = vmatpush1.msra.mxu0 0.0
    %788 = vmatprep.subr.mxu0 0.0
    %789 = vmatpush1.msra.mxu0 0.0
    %790 = vmatprep.subr.mxu0 0.0
    %791 = vmatpush1.msra.mxu0 0.0
    %792 = vmatprep.subr.mxu0 0.0
    %793 = vmatpush1.msra.mxu0 0.0
    %794 = vmatprep.subr.mxu0 0.0
    %795 = vmatpush1.msra.mxu0 0.0
    %796 = vmatprep.subr.mxu0 0.0
    %797 = vmatpush1.msra.mxu0 0.0
    %798 = vmatprep.subr.mxu0 0.0
    %799 = vmatpush1.msra.mxu0 0.0
    %800 = vmatprep.subr.mxu0 0.0
    %801 = vmatpush1.msra.mxu0 0.0
    %802 = vmatprep.subr.mxu0 0.0
    %803 = vmatpush1.msra.mxu0 0.0
    %804 = vmatprep.subr.mxu0 0.0
    %805 = vmatpush1.msra.mxu0 0.0
    %806 = vmatprep.subr.mxu0 0.0
    %807 = vmatpush1.msra.mxu0 0.0
    %808 = vmatprep.subr.mxu0 0.0
    %809 = vmatpush1.msra.mxu0 0.0
    %810 = vmatprep.subr.mxu0 0.0
    %811 = vmatpush1.msra.mxu0 0.0
    %812 = vmatprep.subr.mxu0 0.0
    %813 = vmatpush1.msra.mxu0 %v782
    %814 = vmatprep.subr.mxu0 0.0
    %815 = vmatpush1.msra.mxu0 %v771
    %816 = vmatprep.subr.mxu0 0.0
    %817 = vmatpush2.msra.mxu0 0.0
    %818 = vmatprep.subr.mxu0 0.0
    %819 = vmatpush2.msra.mxu0 0.0
    %820 = vmatprep.subr.mxu0 0.0
    %821 = vmatpush2.msra.mxu0 0.0
    %822 = vmatprep.subr.mxu0 0.0
    %823 = vmatpush2.msra.mxu0 0.0
    %824 = vmatprep.subr.mxu0 0.0
    %825 = vmatpush2.msra.mxu0 0.0
    %826 = vmatprep.subr.mxu0 0.0
    %827 = vmatpush2.msra.mxu0 0.0
    %828 = vmatprep.subr.mxu0 0.0
    %829 = vmatpush2.msra.mxu0 0.0
    %830 = vmatprep.subr.mxu0 0.0
    %831 = vmatpush2.msra.mxu0 0.0
    %832 = vmatprep.subr.mxu0 0.0
    %833 = vmatpush2.msra.mxu0 0.0
    %834 = vmatprep.subr.mxu0 0.0
    %835 = vmatpush2.msra.mxu0 0.0
    %836 = vmatprep.subr.mxu0 0.0
    %837 = vmatpush2.msra.mxu0 0.0
    %838 = vmatprep.subr.mxu0 0.0
    %839 = vmatpush2.msra.mxu0 0.0
    %840 = vmatprep.subr.mxu0 0.0
    %841 = vmatpush2.msra.mxu0 0.0
    %842 = vmatprep.subr.mxu0 0.0
    %843 = vmatpush2.msra.mxu0 0.0
    %844 = vmatprep.subr.mxu0 0.0
    %845 = vmatpush2.msra.mxu0 0.0
    %846 = vmatprep.subr.mxu0 0.0
    %847 = vmatpush2.msra.mxu0 0.0
    %848 = vmatprep.mubr.f32.mxu0 0.0
    %849 = vmatmul.mubr.f32.gmra.mxu0 %v776
    %v850 = vpop.f32.mrf.mxu0
    %v851 = vadd.f32 0.0, %v850
    %v852 = vpop.f32.mrf.mxu0
    %853 = vmatprep.mubr.f32.mxu0 0.0
    %854 = vmatmul.mubr.f32.gmra.mxu0 %v779
    %v855 = vpop.f32.mrf.mxu0
    %v856 = vadd.f32 0.0, %v855
    %v857 = vpop.f32.mrf.mxu0
    %858 = vdwg.mxu0
    %859 = vrot.lane.b32.xlu0 %v628, 64
    %v860 = vpop.permute.xlu0 %859
    %861 = vrot.lane.b32.xlu0 %v538, 64
    %v862 = vpop.permute.xlu0 %861
    %v865 = vsel %vm724, %v768, 0
    %v868 = vsel %vm724, %v769, 0
    %v870 = vsel %vm781, %v862, 0
    %872 = vmatprep.subr.mxu0 0.0
    %873 = vmatpush1.msra.mxu0 0.0
    %874 = vmatprep.subr.mxu0 0.0
    %875 = vmatpush1.msra.mxu0 0.0
    %876 = vmatprep.subr.mxu0 0.0
    %877 = vmatpush1.msra.mxu0 0.0
    %878 = vmatprep.subr.mxu0 0.0
    %879 = vmatpush1.msra.mxu0 0.0
    %880 = vmatprep.subr.mxu0 0.0
    %881 = vmatpush1.msra.mxu0 0.0
    %882 = vmatprep.subr.mxu0 0.0
    %883 = vmatpush1.msra.mxu0 0.0
    %884 = vmatprep.subr.mxu0 0.0
    %885 = vmatpush1.msra.mxu0 0.0
    %886 = vmatprep.subr.mxu0 0.0
    %887 = vmatpush1.msra.mxu0 0.0
    %888 = vmatprep.subr.mxu0 0.0
    %889 = vmatpush1.msra.mxu0 0.0
    %890 = vmatprep.subr.mxu0 0.0
    %891 = vmatpush1.msra.mxu0 0.0
    %892 = vmatprep.subr.mxu0 0.0
    %893 = vmatpush1.msra.mxu0 0.0
    %894 = vmatprep.subr.mxu0 0.0
    %895 = vmatpush1.msra.mxu0 0.0
    %896 = vmatprep.subr.mxu0 0.0
    %897 = vmatpush1.msra.mxu0 0.0
    %898 = vmatprep.subr.mxu0 0.0
    %899 = vmatpush1.msra.mxu0 0.0
    %900 = vmatprep.subr.mxu0 0.0
    %901 = vmatpush1.msra.mxu0 %v870
    %902 = vmatprep.subr.mxu0 0.0
    %903 = vmatpush1.msra.mxu0 %v860
    %904 = vmatprep.subr.mxu0 0.0
    %905 = vmatpush2.msra.mxu0 0.0
    %906 = vmatprep.subr.mxu0 0.0
    %907 = vmatpush2.msra.mxu0 0.0
    %908 = vmatprep.subr.mxu0 0.0
    %909 = vmatpush2.msra.mxu0 0.0
    %910 = vmatprep.subr.mxu0 0.0
    %911 = vmatpush2.msra.mxu0 0.0
    %912 = vmatprep.subr.mxu0 0.0
    %913 = vmatpush2.msra.mxu0 0.0
    %914 = vmatprep.subr.mxu0 0.0
    %915 = vmatpush2.msra.mxu0 0.0
    %916 = vmatprep.subr.mxu0 0.0
    %917 = vmatpush2.msra.mxu0 0.0
    %918 = vmatprep.subr.mxu0 0.0
    %919 = vmatpush2.msra.mxu0 0.0
    %920 = vmatprep.subr.mxu0 0.0
    %921 = vmatpush2.msra.mxu0 0.0
    %922 = vmatprep.subr.mxu0 0.0
    %923 = vmatpush2.msra.mxu0 0.0
    %924 = vmatprep.subr.mxu0 0.0
    %925 = vmatpush2.msra.mxu0 0.0
    %926 = vmatprep.subr.mxu0 0.0
    %927 = vmatpush2.msra.mxu0 0.0
    %928 = vmatprep.subr.mxu0 0.0
    %929 = vmatpush2.msra.mxu0 0.0
    %930 = vmatprep.subr.mxu0 0.0
    %931 = vmatpush2.msra.mxu0 0.0
    %932 = vmatprep.subr.mxu0 0.0
    %933 = vmatpush2.msra.mxu0 0.0
    %934 = vmatprep.subr.mxu0 0.0
    %935 = vmatpush2.msra.mxu0 0.0
    %936 = vmatprep.mubr.f32.mxu0 0.0
    %937 = vmatmul.mubr.f32.gmra.mxu0 %v865
    %v938 = vpop.f32.mrf.mxu0
    %v939 = vadd.f32 0.0, %v938
    %v940 = vpop.f32.mrf.mxu0
    %941 = vmatprep.mubr.f32.mxu0 0.0
    %942 = vmatmul.mubr.f32.gmra.mxu0 %v868
    %v943 = vpop.f32.mrf.mxu0
    %v944 = vadd.f32 0.0, %v943
    %v945 = vpop.f32.mrf.mxu0
    %946 = vdwg.mxu0
    %947 = vrot.lane.b32.xlu0 %v539, 120
    %v948 = vpop.permute.xlu0 %947
    %949 = vrot.lane.b32.xlu0 %v523, 120
    %v950 = vpop.permute.xlu0 %949
    %951 = vrot.lane.b32.xlu0 %v539, 88
    %v952 = vpop.permute.xlu0 %951
    %953 = vrot.lane.b32.xlu0 %v523, 88
    %v954 = vpop.permute.xlu0 %953
    %v955 = vsel %vm544, %v948, 0
    %v957 = vsel %vm544, %v950, 0
    %v959 = vsel %vm544, %v952, 0
    %v961 = vsel %vm544, %v954, 0
    %963 = vmatprep.subr.mxu0 0.0
    %964 = vmatpush1.xpose.msra.mxu0 0.0
    %965 = vmatprep.subr.mxu0 0.0
    %966 = vmatpush1.xpose.msra.mxu0 0.0
    %967 = vmatprep.subr.mxu0 0.0
    %968 = vmatpush1.xpose.msra.mxu0 0.0
    %969 = vmatprep.subr.mxu0 0.0
    %970 = vmatpush1.xpose.msra.mxu0 0.0
    %971 = vmatprep.subr.mxu0 0.0
    %972 = vmatpush1.xpose.msra.mxu0 0.0
    %973 = vmatprep.subr.mxu0 0.0
    %974 = vmatpush1.xpose.msra.mxu0 0.0
    %975 = vmatprep.subr.mxu0 0.0
    %976 = vmatpush1.xpose.msra.mxu0 0.0
    %977 = vmatprep.subr.mxu0 0.0
    %978 = vmatpush1.xpose.msra.mxu0 0.0
    %979 = vmatprep.subr.mxu0 0.0
    %980 = vmatpush1.xpose.msra.mxu0 0.0
    %981 = vmatprep.subr.mxu0 0.0
    %982 = vmatpush1.xpose.msra.mxu0 0.0
    %983 = vmatprep.subr.mxu0 0.0
    %984 = vmatpush1.xpose.msra.mxu0 0.0
    %985 = vmatprep.subr.mxu0 0.0
    %986 = vmatpush1.xpose.msra.mxu0 0.0
    %987 = vmatprep.subr.mxu0 0.0
    %988 = vmatpush1.xpose.msra.mxu0 0.0
    %989 = vmatprep.subr.mxu0 0.0
    %990 = vmatpush1.xpose.msra.mxu0 0.0
    %991 = vmatprep.subr.mxu0 0.0
    %992 = vmatpush1.xpose.msra.mxu0 %v961
    %993 = vmatprep.subr.mxu0 0.0
    %994 = vmatpush1.xpose.msra.mxu0 %v959
    %995 = vmatprep.subr.mxu0 0.0
    %996 = vmatpush2.xpose.msra.mxu0 0.0
    %997 = vmatprep.subr.mxu0 0.0
    %998 = vmatpush2.xpose.msra.mxu0 0.0
    %999 = vmatprep.subr.mxu0 0.0
    %1000 = vmatpush2.xpose.msra.mxu0 0.0
    %1001 = vmatprep.subr.mxu0 0.0
    %1002 = vmatpush2.xpose.msra.mxu0 0.0
    %1003 = vmatprep.subr.mxu0 0.0
    %1004 = vmatpush2.xpose.msra.mxu0 0.0
    %1005 = vmatprep.subr.mxu0 0.0
    %1006 = vmatpush2.xpose.msra.mxu0 0.0
    %1007 = vmatprep.subr.mxu0 0.0
    %1008 = vmatpush2.xpose.msra.mxu0 0.0
    %1009 = vmatprep.subr.mxu0 0.0
    %1010 = vmatpush2.xpose.msra.mxu0 0.0
    %1011 = vmatprep.subr.mxu0 0.0
    %1012 = vmatpush2.xpose.msra.mxu0 0.0
    %1013 = vmatprep.subr.mxu0 0.0
    %1014 = vmatpush2.xpose.msra.mxu0 0.0
    %1015 = vmatprep.subr.mxu0 0.0
    %1016 = vmatpush2.xpose.msra.mxu0 0.0
    %1017 = vmatprep.subr.mxu0 0.0
    %1018 = vmatpush2.xpose.msra.mxu0 0.0
    %1019 = vmatprep.subr.mxu0 0.0
    %1020 = vmatpush2.xpose.msra.mxu0 0.0
    %1021 = vmatprep.subr.mxu0 0.0
    %1022 = vmatpush2.xpose.msra.mxu0 0.0
    %1023 = vmatprep.subr.mxu0 0.0
    %1024 = vmatpush2.xpose.msra.mxu0 0.0
    %1025 = vmatprep.subr.mxu0 0.0
    %1026 = vmatpush2.xpose.msra.mxu0 0.0
    %1027 = vmatprep.mubr.f32.mxu0 0.0
    %1028 = vmatmul.mubr.f32.gmra.mxu0 %v955
    %v1029 = vpop.f32.mrf.mxu0
    %v1030 = vadd.f32 0.0, %v1029
    %v1031 = vpop.f32.mrf.mxu0
    %1032 = vmatprep.mubr.f32.mxu0 0.0
    %1033 = vmatmul.mubr.f32.gmra.mxu0 %v957
    %v1034 = vpop.f32.mrf.mxu0
    %v1035 = vadd.f32 0.0, %v1034
    %v1036 = vpop.f32.mrf.mxu0
    %1037 = vdwg.mxu0
    %1038 = vrot.lane.b32.xlu0 %v628, 120
    %v1039 = vpop.permute.xlu0 %1038
    %1040 = vrot.lane.b32.xlu0 %v538, 120
    %v1041 = vpop.permute.xlu0 %1040
    %1042 = vrot.lane.b32.xlu0 %v628, 88
    %v1043 = vpop.permute.xlu0 %1042
    %1044 = vrot.lane.b32.xlu0 %v538, 88
    %v1045 = vpop.permute.xlu0 %1044
    %v1046 = vsel %vm544, %v1039, 0
    %v1048 = vsel %vm544, %v1041, 0
    %v1050 = vsel %vm544, %v1043, 0
    %v1052 = vsel %vm544, %v1045, 0
    %1054 = vmatprep.subr.mxu0 0.0
    %1055 = vmatpush1.xpose.msra.mxu0 0.0
    %1056 = vmatprep.subr.mxu0 0.0
    %1057 = vmatpush1.xpose.msra.mxu0 0.0
    %1058 = vmatprep.subr.mxu0 0.0
    %1059 = vmatpush1.xpose.msra.mxu0 0.0
    %1060 = vmatprep.subr.mxu0 0.0
    %1061 = vmatpush1.xpose.msra.mxu0 0.0
    %1062 = vmatprep.subr.mxu0 0.0
    %1063 = vmatpush1.xpose.msra.mxu0 0.0
    %1064 = vmatprep.subr.mxu0 0.0
    %1065 = vmatpush1.xpose.msra.mxu0 0.0
    %1066 = vmatprep.subr.mxu0 0.0
    %1067 = vmatpush1.xpose.msra.mxu0 0.0
    %1068 = vmatprep.subr.mxu0 0.0
    %1069 = vmatpush1.xpose.msra.mxu0 0.0
    %1070 = vmatprep.subr.mxu0 0.0
    %1071 = vmatpush1.xpose.msra.mxu0 0.0
    %1072 = vmatprep.subr.mxu0 0.0
    %1073 = vmatpush1.xpose.msra.mxu0 0.0
    %1074 = vmatprep.subr.mxu0 0.0
    %1075 = vmatpush1.xpose.msra.mxu0 0.0
    %1076 = vmatprep.subr.mxu0 0.0
    %1077 = vmatpush1.xpose.msra.mxu0 0.0
    %1078 = vmatprep.subr.mxu0 0.0
    %1079 = vmatpush1.xpose.msra.mxu0 0.0
    %1080 = vmatprep.subr.mxu0 0.0
    %1081 = vmatpush1.xpose.msra.mxu0 0.0
    %1082 = vmatprep.subr.mxu0 0.0
    %1083 = vmatpush1.xpose.msra.mxu0 %v1052
    %1084 = vmatprep.subr.mxu0 0.0
    %1085 = vmatpush1.xpose.msra.mxu0 %v1050
    %1086 = vmatprep.subr.mxu0 0.0
    %1087 = vmatpush2.xpose.msra.mxu0 0.0
    %1088 = vmatprep.subr.mxu0 0.0
    %1089 = vmatpush2.xpose.msra.mxu0 0.0
    %1090 = vmatprep.subr.mxu0 0.0
    %1091 = vmatpush2.xpose.msra.mxu0 0.0
    %1092 = vmatprep.subr.mxu0 0.0
    %1093 = vmatpush2.xpose.msra.mxu0 0.0
    %1094 = vmatprep.subr.mxu0 0.0
    %1095 = vmatpush2.xpose.msra.mxu0 0.0
    %1096 = vmatprep.subr.mxu0 0.0
    %1097 = vmatpush2.xpose.msra.mxu0 0.0
    %1098 = vmatprep.subr.mxu0 0.0
    %1099 = vmatpush2.xpose.msra.mxu0 0.0
    %1100 = vmatprep.subr.mxu0 0.0
    %1101 = vmatpush2.xpose.msra.mxu0 0.0
    %1102 = vmatprep.subr.mxu0 0.0
    %1103 = vmatpush2.xpose.msra.mxu0 0.0
    %1104 = vmatprep.subr.mxu0 0.0
    %1105 = vmatpush2.xpose.msra.mxu0 0.0
    %1106 = vmatprep.subr.mxu0 0.0
    %1107 = vmatpush2.xpose.msra.mxu0 0.0
    %1108 = vmatprep.subr.mxu0 0.0
    %1109 = vmatpush2.xpose.msra.mxu0 0.0
    %1110 = vmatprep.subr.mxu0 0.0
    %1111 = vmatpush2.xpose.msra.mxu0 0.0
    %1112 = vmatprep.subr.mxu0 0.0
    %1113 = vmatpush2.xpose.msra.mxu0 0.0
    %1114 = vmatprep.subr.mxu0 0.0
    %1115 = vmatpush2.xpose.msra.mxu0 0.0
    %1116 = vmatprep.subr.mxu0 0.0
    %1117 = vmatpush2.xpose.msra.mxu0 0.0
    %1118 = vmatprep.mubr.f32.mxu0 0.0
    %1119 = vmatmul.mubr.f32.gmra.mxu0 %v1046
    %v1120 = vpop.f32.mrf.mxu0
    %v1121 = vadd.f32 0.0, %v1120
    %v1122 = vpop.f32.mrf.mxu0
    %1123 = vmatprep.mubr.f32.mxu0 0.0
    %1124 = vmatmul.mubr.f32.gmra.mxu0 %v1048
    %v1125 = vpop.f32.mrf.mxu0
    %v1126 = vadd.f32 0.0, %v1125
    %v1127 = vpop.f32.mrf.mxu0
    %1128 = vdwg.mxu0
    %v1129 = vmul.f32 %v1030, 0.35355338
    %v1130 = vmul.f32 %v1035, 0.35355338
    %v1131 = vmul.f32 %v1121, 0.35355338
    %v1132 = vmul.f32 %v1126, 0.35355338
    %v1133 = vadd.f32 %v1129, %v445
    %v1134 = vadd.f32 %v1130, %v446
    %v1135 = vadd.f32 %v1131, %v447
    %v1136 = vadd.f32 %v1132, %v448
    %v1137 = vsel %vm724, %v1133, -inf
    %1138 = vmax.xlane.f32.xlu0 %v1137
    %v1139 = vpop.xlane.xlu0 %1138
    %v1140 = vsel %vm728, %v1134, -inf
    %1141 = vmax.xlane.f32.xlu0 %v1140
    %v1142 = vpop.xlane.xlu0 %1141
    %v1143 = vsel %vm724, %v1135, -inf
    %1144 = vmax.xlane.f32.xlu0 %v1143
    %v1145 = vpop.xlane.xlu0 %1144
    %v1146 = vsel %vm728, %v1136, -inf
    %1147 = vmax.xlane.f32.xlu0 %v1146
    %v1148 = vpop.xlane.xlu0 %1147
    %v1149 = vsub.f32 %v1133, %v1139
    %v1150 = vsub.f32 %v1134, %v1142
    %v1151 = vsub.f32 %v1135, %v1145
    %v1152 = vsub.f32 %v1136, %v1148
    %v1153 = vmul.f32 %v1149, 1.442695
    %v1154 = vpow.pop %v1153
    %v1155 = vmul.f32 %v1150, 1.442695
    %v1156 = vpow.pop %v1155
    %v1157 = vmul.f32 %v1151, 1.442695
    %v1158 = vpow.pop %v1157
    %v1159 = vmul.f32 %v1152, 1.442695
    %v1160 = vpow.pop %v1159
    %v1161 = vsel %vm724, %v1154, 0.0
    %1162 = vadd.xlane.f32.xlu0 %v1161
    %v1163 = vpop.xlane.xlu0 %1162
    %v1164 = vsel %vm728, %v1156, 0.0
    %1165 = vadd.xlane.f32.xlu0 %v1164
    %v1166 = vpop.xlane.xlu0 %1165
    %v1167 = vsel %vm724, %v1158, 0.0
    %1168 = vadd.xlane.f32.xlu0 %v1167
    %v1169 = vpop.xlane.xlu0 %1168
    %v1170 = vsel %vm728, %v1160, 0.0
    %1171 = vadd.xlane.f32.xlu0 %v1170
    %v1172 = vpop.xlane.xlu0 %1171
    %v1173 = vrcp.pop %v1163
    %v1174 = vrcp.pop %v1166
    %v1175 = vrcp.pop %v1169
    %v1176 = vrcp.pop %v1172
    %v1177 = vmul.f32 %v1154, %v1173
    %v1178 = vmul.f32 %v1156, %v1174
    %v1179 = vmul.f32 %v1158, %v1175
    %v1180 = vmul.f32 %v1160, %v1176
    %1181 = vrot.lane.b32.xlu0 %v539, 56
    %v1182 = vpop.permute.xlu0 %1181
    %1183 = vrot.lane.b32.xlu0 %v523, 56
    %v1184 = vpop.permute.xlu0 %1183
    %v1187 = vsel %vm724, %v1177, 0
    %v1190 = vsel %vm724, %v1178, 0
    %v1192 = vsel %vm781, %v1184, 0
    %1194 = vmatprep.subr.mxu0 0.0
    %1195 = vmatpush1.msra.mxu0 0.0
    %1196 = vmatprep.subr.mxu0 0.0
    %1197 = vmatpush1.msra.mxu0 0.0
    %1198 = vmatprep.subr.mxu0 0.0
    %1199 = vmatpush1.msra.mxu0 0.0
    %1200 = vmatprep.subr.mxu0 0.0
    %1201 = vmatpush1.msra.mxu0 0.0
    %1202 = vmatprep.subr.mxu0 0.0
    %1203 = vmatpush1.msra.mxu0 0.0
    %1204 = vmatprep.subr.mxu0 0.0
    %1205 = vmatpush1.msra.mxu0 0.0
    %1206 = vmatprep.subr.mxu0 0.0
    %1207 = vmatpush1.msra.mxu0 0.0
    %1208 = vmatprep.subr.mxu0 0.0
    %1209 = vmatpush1.msra.mxu0 0.0
    %1210 = vmatprep.subr.mxu0 0.0
    %1211 = vmatpush1.msra.mxu0 0.0
    %1212 = vmatprep.subr.mxu0 0.0
    %1213 = vmatpush1.msra.mxu0 0.0
    %1214 = vmatprep.subr.mxu0 0.0
    %1215 = vmatpush1.msra.mxu0 0.0
    %1216 = vmatprep.subr.mxu0 0.0
    %1217 = vmatpush1.msra.mxu0 0.0
    %1218 = vmatprep.subr.mxu0 0.0
    %1219 = vmatpush1.msra.mxu0 0.0
    %1220 = vmatprep.subr.mxu0 0.0
    %1221 = vmatpush1.msra.mxu0 0.0
    %1222 = vmatprep.subr.mxu0 0.0
    %1223 = vmatpush1.msra.mxu0 %v1192
    %1224 = vmatprep.subr.mxu0 0.0
    %1225 = vmatpush1.msra.mxu0 %v1182
    %1226 = vmatprep.subr.mxu0 0.0
    %1227 = vmatpush2.msra.mxu0 0.0
    %1228 = vmatprep.subr.mxu0 0.0
    %1229 = vmatpush2.msra.mxu0 0.0
    %1230 = vmatprep.subr.mxu0 0.0
    %1231 = vmatpush2.msra.mxu0 0.0
    %1232 = vmatprep.subr.mxu0 0.0
    %1233 = vmatpush2.msra.mxu0 0.0
    %1234 = vmatprep.subr.mxu0 0.0
    %1235 = vmatpush2.msra.mxu0 0.0
    %1236 = vmatprep.subr.mxu0 0.0
    %1237 = vmatpush2.msra.mxu0 0.0
    %1238 = vmatprep.subr.mxu0 0.0
    %1239 = vmatpush2.msra.mxu0 0.0
    %1240 = vmatprep.subr.mxu0 0.0
    %1241 = vmatpush2.msra.mxu0 0.0
    %1242 = vmatprep.subr.mxu0 0.0
    %1243 = vmatpush2.msra.mxu0 0.0
    %1244 = vmatprep.subr.mxu0 0.0
    %1245 = vmatpush2.msra.mxu0 0.0
    %1246 = vmatprep.subr.mxu0 0.0
    %1247 = vmatpush2.msra.mxu0 0.0
    %1248 = vmatprep.subr.mxu0 0.0
    %1249 = vmatpush2.msra.mxu0 0.0
    %1250 = vmatprep.subr.mxu0 0.0
    %1251 = vmatpush2.msra.mxu0 0.0
    %1252 = vmatprep.subr.mxu0 0.0
    %1253 = vmatpush2.msra.mxu0 0.0
    %1254 = vmatprep.subr.mxu0 0.0
    %1255 = vmatpush2.msra.mxu0 0.0
    %1256 = vmatprep.subr.mxu0 0.0
    %1257 = vmatpush2.msra.mxu0 0.0
    %1258 = vmatprep.mubr.f32.mxu0 0.0
    %1259 = vmatmul.mubr.f32.gmra.mxu0 %v1187
    %v1260 = vpop.f32.mrf.mxu0
    %v1261 = vadd.f32 0.0, %v1260
    %v1262 = vpop.f32.mrf.mxu0
    %1263 = vmatprep.mubr.f32.mxu0 0.0
    %1264 = vmatmul.mubr.f32.gmra.mxu0 %v1190
    %v1265 = vpop.f32.mrf.mxu0
    %v1266 = vadd.f32 0.0, %v1265
    %v1267 = vpop.f32.mrf.mxu0
    %1268 = vdwg.mxu0
    %1269 = vrot.lane.b32.xlu0 %v628, 56
    %v1270 = vpop.permute.xlu0 %1269
    %1271 = vrot.lane.b32.xlu0 %v538, 56
    %v1272 = vpop.permute.xlu0 %1271
    %v1275 = vsel %vm724, %v1179, 0
    %v1278 = vsel %vm724, %v1180, 0
    %v1280 = vsel %vm781, %v1272, 0
    %1282 = vmatprep.subr.mxu0 0.0
    %1283 = vmatpush1.msra.mxu0 0.0
    %1284 = vmatprep.subr.mxu0 0.0
    %1285 = vmatpush1.msra.mxu0 0.0
    %1286 = vmatprep.subr.mxu0 0.0
    %1287 = vmatpush1.msra.mxu0 0.0
    %1288 = vmatprep.subr.mxu0 0.0
    %1289 = vmatpush1.msra.mxu0 0.0
    %1290 = vmatprep.subr.mxu0 0.0
    %1291 = vmatpush1.msra.mxu0 0.0
    %1292 = vmatprep.subr.mxu0 0.0
    %1293 = vmatpush1.msra.mxu0 0.0
    %1294 = vmatprep.subr.mxu0 0.0
    %1295 = vmatpush1.msra.mxu0 0.0
    %1296 = vmatprep.subr.mxu0 0.0
    %1297 = vmatpush1.msra.mxu0 0.0
    %1298 = vmatprep.subr.mxu0 0.0
    %1299 = vmatpush1.msra.mxu0 0.0
    %1300 = vmatprep.subr.mxu0 0.0
    %1301 = vmatpush1.msra.mxu0 0.0
    %1302 = vmatprep.subr.mxu0 0.0
    %1303 = vmatpush1.msra.mxu0 0.0
    %1304 = vmatprep.subr.mxu0 0.0
    %1305 = vmatpush1.msra.mxu0 0.0
    %1306 = vmatprep.subr.mxu0 0.0
    %1307 = vmatpush1.msra.mxu0 0.0
    %1308 = vmatprep.subr.mxu0 0.0
    %1309 = vmatpush1.msra.mxu0 0.0
    %1310 = vmatprep.subr.mxu0 0.0
    %1311 = vmatpush1.msra.mxu0 %v1280
    %1312 = vmatprep.subr.mxu0 0.0
    %1313 = vmatpush1.msra.mxu0 %v1270
    %1314 = vmatprep.subr.mxu0 0.0
    %1315 = vmatpush2.msra.mxu0 0.0
    %1316 = vmatprep.subr.mxu0 0.0
    %1317 = vmatpush2.msra.mxu0 0.0
    %1318 = vmatprep.subr.mxu0 0.0
    %1319 = vmatpush2.msra.mxu0 0.0
    %1320 = vmatprep.subr.mxu0 0.0
    %1321 = vmatpush2.msra.mxu0 0.0
    %1322 = vmatprep.subr.mxu0 0.0
    %1323 = vmatpush2.msra.mxu0 0.0
    %1324 = vmatprep.subr.mxu0 0.0
    %1325 = vmatpush2.msra.mxu0 0.0
    %1326 = vmatprep.subr.mxu0 0.0
    %1327 = vmatpush2.msra.mxu0 0.0
    %1328 = vmatprep.subr.mxu0 0.0
    %1329 = vmatpush2.msra.mxu0 0.0
    %1330 = vmatprep.subr.mxu0 0.0
    %1331 = vmatpush2.msra.mxu0 0.0
    %1332 = vmatprep.subr.mxu0 0.0
    %1333 = vmatpush2.msra.mxu0 0.0
    %1334 = vmatprep.subr.mxu0 0.0
    %1335 = vmatpush2.msra.mxu0 0.0
    %1336 = vmatprep.subr.mxu0 0.0
    %1337 = vmatpush2.msra.mxu0 0.0
    %1338 = vmatprep.subr.mxu0 0.0
    %1339 = vmatpush2.msra.mxu0 0.0
    %1340 = vmatprep.subr.mxu0 0.0
    %1341 = vmatpush2.msra.mxu0 0.0
    %1342 = vmatprep.subr.mxu0 0.0
    %1343 = vmatpush2.msra.mxu0 0.0
    %1344 = vmatprep.subr.mxu0 0.0
    %1345 = vmatpush2.msra.mxu0 0.0
    %1346 = vmatprep.mubr.f32.mxu0 0.0
    %1347 = vmatmul.mubr.f32.gmra.mxu0 %v1275
    %v1348 = vpop.f32.mrf.mxu0
    %v1349 = vadd.f32 0.0, %v1348
    %v1350 = vpop.f32.mrf.mxu0
    %1351 = vmatprep.mubr.f32.mxu0 0.0
    %1352 = vmatmul.mubr.f32.gmra.mxu0 %v1278
    %v1353 = vpop.f32.mrf.mxu0
    %v1354 = vadd.f32 0.0, %v1353
    %v1355 = vpop.f32.mrf.mxu0
    %1356 = vdwg.mxu0
    %1357 = vrot.lane.b32.xlu0 %v539, 112
    %v1358 = vpop.permute.xlu0 %1357
    %1359 = vrot.lane.b32.xlu0 %v523, 112
    %v1360 = vpop.permute.xlu0 %1359
    %1361 = vrot.lane.b32.xlu0 %v539, 80
    %v1362 = vpop.permute.xlu0 %1361
    %1363 = vrot.lane.b32.xlu0 %v523, 80
    %v1364 = vpop.permute.xlu0 %1363
    %v1365 = vsel %vm544, %v1358, 0
    %v1367 = vsel %vm544, %v1360, 0
    %v1369 = vsel %vm544, %v1362, 0
    %v1371 = vsel %vm544, %v1364, 0
    %1373 = vmatprep.subr.mxu0 0.0
    %1374 = vmatpush1.xpose.msra.mxu0 0.0
    %1375 = vmatprep.subr.mxu0 0.0
    %1376 = vmatpush1.xpose.msra.mxu0 0.0
    %1377 = vmatprep.subr.mxu0 0.0
    %1378 = vmatpush1.xpose.msra.mxu0 0.0
    %1379 = vmatprep.subr.mxu0 0.0
    %1380 = vmatpush1.xpose.msra.mxu0 0.0
    %1381 = vmatprep.subr.mxu0 0.0
    %1382 = vmatpush1.xpose.msra.mxu0 0.0
    %1383 = vmatprep.subr.mxu0 0.0
    %1384 = vmatpush1.xpose.msra.mxu0 0.0
    %1385 = vmatprep.subr.mxu0 0.0
    %1386 = vmatpush1.xpose.msra.mxu0 0.0
    %1387 = vmatprep.subr.mxu0 0.0
    %1388 = vmatpush1.xpose.msra.mxu0 0.0
    %1389 = vmatprep.subr.mxu0 0.0
    %1390 = vmatpush1.xpose.msra.mxu0 0.0
    %1391 = vmatprep.subr.mxu0 0.0
    %1392 = vmatpush1.xpose.msra.mxu0 0.0
    %1393 = vmatprep.subr.mxu0 0.0
    %1394 = vmatpush1.xpose.msra.mxu0 0.0
    %1395 = vmatprep.subr.mxu0 0.0
    %1396 = vmatpush1.xpose.msra.mxu0 0.0
    %1397 = vmatprep.subr.mxu0 0.0
    %1398 = vmatpush1.xpose.msra.mxu0 0.0
    %1399 = vmatprep.subr.mxu0 0.0
    %1400 = vmatpush1.xpose.msra.mxu0 0.0
    %1401 = vmatprep.subr.mxu0 0.0
    %1402 = vmatpush1.xpose.msra.mxu0 %v1371
    %1403 = vmatprep.subr.mxu0 0.0
    %1404 = vmatpush1.xpose.msra.mxu0 %v1369
    %1405 = vmatprep.subr.mxu0 0.0
    %1406 = vmatpush2.xpose.msra.mxu0 0.0
    %1407 = vmatprep.subr.mxu0 0.0
    %1408 = vmatpush2.xpose.msra.mxu0 0.0
    %1409 = vmatprep.subr.mxu0 0.0
    %1410 = vmatpush2.xpose.msra.mxu0 0.0
    %1411 = vmatprep.subr.mxu0 0.0
    %1412 = vmatpush2.xpose.msra.mxu0 0.0
    %1413 = vmatprep.subr.mxu0 0.0
    %1414 = vmatpush2.xpose.msra.mxu0 0.0
    %1415 = vmatprep.subr.mxu0 0.0
    %1416 = vmatpush2.xpose.msra.mxu0 0.0
    %1417 = vmatprep.subr.mxu0 0.0
    %1418 = vmatpush2.xpose.msra.mxu0 0.0
    %1419 = vmatprep.subr.mxu0 0.0
    %1420 = vmatpush2.xpose.msra.mxu0 0.0
    %1421 = vmatprep.subr.mxu0 0.0
    %1422 = vmatpush2.xpose.msra.mxu0 0.0
    %1423 = vmatprep.subr.mxu0 0.0
    %1424 = vmatpush2.xpose.msra.mxu0 0.0
    %1425 = vmatprep.subr.mxu0 0.0
    %1426 = vmatpush2.xpose.msra.mxu0 0.0
    %1427 = vmatprep.subr.mxu0 0.0
    %1428 = vmatpush2.xpose.msra.mxu0 0.0
    %1429 = vmatprep.subr.mxu0 0.0
    %1430 = vmatpush2.xpose.msra.mxu0 0.0
    %1431 = vmatprep.subr.mxu0 0.0
    %1432 = vmatpush2.xpose.msra.mxu0 0.0
    %1433 = vmatprep.subr.mxu0 0.0
    %1434 = vmatpush2.xpose.msra.mxu0 0.0
    %1435 = vmatprep.subr.mxu0 0.0
    %1436 = vmatpush2.xpose.msra.mxu0 0.0
    %1437 = vmatprep.mubr.f32.mxu0 0.0
    %1438 = vmatmul.mubr.f32.gmra.mxu0 %v1365
    %v1439 = vpop.f32.mrf.mxu0
    %v1440 = vadd.f32 0.0, %v1439
    %v1441 = vpop.f32.mrf.mxu0
    %1442 = vmatprep.mubr.f32.mxu0 0.0
    %1443 = vmatmul.mubr.f32.gmra.mxu0 %v1367
    %v1444 = vpop.f32.mrf.mxu0
    %v1445 = vadd.f32 0.0, %v1444
    %v1446 = vpop.f32.mrf.mxu0
    %1447 = vdwg.mxu0
    %1448 = vrot.lane.b32.xlu0 %v628, 112
    %v1449 = vpop.permute.xlu0 %1448
    %1450 = vrot.lane.b32.xlu0 %v538, 112
    %v1451 = vpop.permute.xlu0 %1450
    %1452 = vrot.lane.b32.xlu0 %v628, 80
    %v1453 = vpop.permute.xlu0 %1452
    %1454 = vrot.lane.b32.xlu0 %v538, 80
    %v1455 = vpop.permute.xlu0 %1454
    %v1456 = vsel %vm544, %v1449, 0
    %v1458 = vsel %vm544, %v1451, 0
    %v1460 = vsel %vm544, %v1453, 0
    %v1462 = vsel %vm544, %v1455, 0
    %1464 = vmatprep.subr.mxu0 0.0
    %1465 = vmatpush1.xpose.msra.mxu0 0.0
    %1466 = vmatprep.subr.mxu0 0.0
    %1467 = vmatpush1.xpose.msra.mxu0 0.0
    %1468 = vmatprep.subr.mxu0 0.0
    %1469 = vmatpush1.xpose.msra.mxu0 0.0
    %1470 = vmatprep.subr.mxu0 0.0
    %1471 = vmatpush1.xpose.msra.mxu0 0.0
    %1472 = vmatprep.subr.mxu0 0.0
    %1473 = vmatpush1.xpose.msra.mxu0 0.0
    %1474 = vmatprep.subr.mxu0 0.0
    %1475 = vmatpush1.xpose.msra.mxu0 0.0
    %1476 = vmatprep.subr.mxu0 0.0
    %1477 = vmatpush1.xpose.msra.mxu0 0.0
    %1478 = vmatprep.subr.mxu0 0.0
    %1479 = vmatpush1.xpose.msra.mxu0 0.0
    %1480 = vmatprep.subr.mxu0 0.0
    %1481 = vmatpush1.xpose.msra.mxu0 0.0
    %1482 = vmatprep.subr.mxu0 0.0
    %1483 = vmatpush1.xpose.msra.mxu0 0.0
    %1484 = vmatprep.subr.mxu0 0.0
    %1485 = vmatpush1.xpose.msra.mxu0 0.0
    %1486 = vmatprep.subr.mxu0 0.0
    %1487 = vmatpush1.xpose.msra.mxu0 0.0
    %1488 = vmatprep.subr.mxu0 0.0
    %1489 = vmatpush1.xpose.msra.mxu0 0.0
    %1490 = vmatprep.subr.mxu0 0.0
    %1491 = vmatpush1.xpose.msra.mxu0 0.0
    %1492 = vmatprep.subr.mxu0 0.0
    %1493 = vmatpush1.xpose.msra.mxu0 %v1462
    %1494 = vmatprep.subr.mxu0 0.0
    %1495 = vmatpush1.xpose.msra.mxu0 %v1460
    %1496 = vmatprep.subr.mxu0 0.0
    %1497 = vmatpush2.xpose.msra.mxu0 0.0
    %1498 = vmatprep.subr.mxu0 0.0
    %1499 = vmatpush2.xpose.msra.mxu0 0.0
    %1500 = vmatprep.subr.mxu0 0.0
    %1501 = vmatpush2.xpose.msra.mxu0 0.0
    %1502 = vmatprep.subr.mxu0 0.0
    %1503 = vmatpush2.xpose.msra.mxu0 0.0
    %1504 = vmatprep.subr.mxu0 0.0
    %1505 = vmatpush2.xpose.msra.mxu0 0.0
    %1506 = vmatprep.subr.mxu0 0.0
    %1507 = vmatpush2.xpose.msra.mxu0 0.0
    %1508 = vmatprep.subr.mxu0 0.0
    %1509 = vmatpush2.xpose.msra.mxu0 0.0
    %1510 = vmatprep.subr.mxu0 0.0
    %1511 = vmatpush2.xpose.msra.mxu0 0.0
    %1512 = vmatprep.subr.mxu0 0.0
    %1513 = vmatpush2.xpose.msra.mxu0 0.0
    %1514 = vmatprep.subr.mxu0 0.0
    %1515 = vmatpush2.xpose.msra.mxu0 0.0
    %1516 = vmatprep.subr.mxu0 0.0
    %1517 = vmatpush2.xpose.msra.mxu0 0.0
    %1518 = vmatprep.subr.mxu0 0.0
    %1519 = vmatpush2.xpose.msra.mxu0 0.0
    %1520 = vmatprep.subr.mxu0 0.0
    %1521 = vmatpush2.xpose.msra.mxu0 0.0
    %1522 = vmatprep.subr.mxu0 0.0
    %1523 = vmatpush2.xpose.msra.mxu0 0.0
    %1524 = vmatprep.subr.mxu0 0.0
    %1525 = vmatpush2.xpose.msra.mxu0 0.0
    %1526 = vmatprep.subr.mxu0 0.0
    %1527 = vmatpush2.xpose.msra.mxu0 0.0
    %1528 = vmatprep.mubr.f32.mxu0 0.0
    %1529 = vmatmul.mubr.f32.gmra.mxu0 %v1456
    %v1530 = vpop.f32.mrf.mxu0
    %v1531 = vadd.f32 0.0, %v1530
    %v1532 = vpop.f32.mrf.mxu0
    %1533 = vmatprep.mubr.f32.mxu0 0.0
    %1534 = vmatmul.mubr.f32.gmra.mxu0 %v1458
    %v1535 = vpop.f32.mrf.mxu0
    %v1536 = vadd.f32 0.0, %v1535
    %v1537 = vpop.f32.mrf.mxu0
    %1538 = vdwg.mxu0
    %v1539 = vmul.f32 %v1440, 0.35355338
    %v1540 = vmul.f32 %v1445, 0.35355338
    %v1541 = vmul.f32 %v1531, 0.35355338
    %v1542 = vmul.f32 %v1536, 0.35355338
    %v1543 = vadd.f32 %v1539, %v445
    %v1544 = vadd.f32 %v1540, %v446
    %v1545 = vadd.f32 %v1541, %v447
    %v1546 = vadd.f32 %v1542, %v448
    %v1547 = vsel %vm724, %v1543, -inf
    %1548 = vmax.xlane.f32.xlu0 %v1547
    %v1549 = vpop.xlane.xlu0 %1548
    %v1550 = vsel %vm728, %v1544, -inf
    %1551 = vmax.xlane.f32.xlu0 %v1550
    %v1552 = vpop.xlane.xlu0 %1551
    %v1553 = vsel %vm724, %v1545, -inf
    %1554 = vmax.xlane.f32.xlu0 %v1553
    %v1555 = vpop.xlane.xlu0 %1554
    %v1556 = vsel %vm728, %v1546, -inf
    %1557 = vmax.xlane.f32.xlu0 %v1556
    %v1558 = vpop.xlane.xlu0 %1557
    %v1559 = vsub.f32 %v1543, %v1549
    %v1560 = vsub.f32 %v1544, %v1552
    %v1561 = vsub.f32 %v1545, %v1555
    %v1562 = vsub.f32 %v1546, %v1558
    %v1563 = vmul.f32 %v1559, 1.442695
    %v1564 = vpow.pop %v1563
    %v1565 = vmul.f32 %v1560, 1.442695
    %v1566 = vpow.pop %v1565
    %v1567 = vmul.f32 %v1561, 1.442695
    %v1568 = vpow.pop %v1567
    %v1569 = vmul.f32 %v1562, 1.442695
    %v1570 = vpow.pop %v1569
    %v1571 = vsel %vm724, %v1564, 0.0
    %1572 = vadd.xlane.f32.xlu0 %v1571
    %v1573 = vpop.xlane.xlu0 %1572
    %v1574 = vsel %vm728, %v1566, 0.0
    %1575 = vadd.xlane.f32.xlu0 %v1574
    %v1576 = vpop.xlane.xlu0 %1575
    %v1577 = vsel %vm724, %v1568, 0.0
    %1578 = vadd.xlane.f32.xlu0 %v1577
    %v1579 = vpop.xlane.xlu0 %1578
    %v1580 = vsel %vm728, %v1570, 0.0
    %1581 = vadd.xlane.f32.xlu0 %v1580
    %v1582 = vpop.xlane.xlu0 %1581
    %v1583 = vrcp.pop %v1573
    %v1584 = vrcp.pop %v1576
    %v1585 = vrcp.pop %v1579
    %v1586 = vrcp.pop %v1582
    %v1587 = vmul.f32 %v1564, %v1583
    %v1588 = vmul.f32 %v1566, %v1584
    %v1589 = vmul.f32 %v1568, %v1585
    %v1590 = vmul.f32 %v1570, %v1586
    %1591 = vrot.lane.b32.xlu0 %v539, 48
    %v1592 = vpop.permute.xlu0 %1591
    %1593 = vrot.lane.b32.xlu0 %v523, 48
    %v1594 = vpop.permute.xlu0 %1593
    %v1597 = vsel %vm724, %v1587, 0
    %v1600 = vsel %vm724, %v1588, 0
    %v1602 = vsel %vm781, %v1594, 0
    %1604 = vmatprep.subr.mxu0 0.0
    %1605 = vmatpush1.msra.mxu0 0.0
    %1606 = vmatprep.subr.mxu0 0.0
    %1607 = vmatpush1.msra.mxu0 0.0
    %1608 = vmatprep.subr.mxu0 0.0
    %1609 = vmatpush1.msra.mxu0 0.0
    %1610 = vmatprep.subr.mxu0 0.0
    %1611 = vmatpush1.msra.mxu0 0.0
    %1612 = vmatprep.subr.mxu0 0.0
    %1613 = vmatpush1.msra.mxu0 0.0
    %1614 = vmatprep.subr.mxu0 0.0
    %1615 = vmatpush1.msra.mxu0 0.0
    %1616 = vmatprep.subr.mxu0 0.0
    %1617 = vmatpush1.msra.mxu0 0.0
    %1618 = vmatprep.subr.mxu0 0.0
    %1619 = vmatpush1.msra.mxu0 0.0
    %1620 = vmatprep.subr.mxu0 0.0
    %1621 = vmatpush1.msra.mxu0 0.0
    %1622 = vmatprep.subr.mxu0 0.0
    %1623 = vmatpush1.msra.mxu0 0.0
    %1624 = vmatprep.subr.mxu0 0.0
    %1625 = vmatpush1.msra.mxu0 0.0
    %1626 = vmatprep.subr.mxu0 0.0
    %1627 = vmatpush1.msra.mxu0 0.0
    %1628 = vmatprep.subr.mxu0 0.0
    %1629 = vmatpush1.msra.mxu0 0.0
    %1630 = vmatprep.subr.mxu0 0.0
    %1631 = vmatpush1.msra.mxu0 0.0
    %1632 = vmatprep.subr.mxu0 0.0
    %1633 = vmatpush1.msra.mxu0 %v1602
    %1634 = vmatprep.subr.mxu0 0.0
    %1635 = vmatpush1.msra.mxu0 %v1592
    %1636 = vmatprep.subr.mxu0 0.0
    %1637 = vmatpush2.msra.mxu0 0.0
    %1638 = vmatprep.subr.mxu0 0.0
    %1639 = vmatpush2.msra.mxu0 0.0
    %1640 = vmatprep.subr.mxu0 0.0
    %1641 = vmatpush2.msra.mxu0 0.0
    %1642 = vmatprep.subr.mxu0 0.0
    %1643 = vmatpush2.msra.mxu0 0.0
    %1644 = vmatprep.subr.mxu0 0.0
    %1645 = vmatpush2.msra.mxu0 0.0
    %1646 = vmatprep.subr.mxu0 0.0
    %1647 = vmatpush2.msra.mxu0 0.0
    %1648 = vmatprep.subr.mxu0 0.0
    %1649 = vmatpush2.msra.mxu0 0.0
    %1650 = vmatprep.subr.mxu0 0.0
    %1651 = vmatpush2.msra.mxu0 0.0
    %1652 = vmatprep.subr.mxu0 0.0
    %1653 = vmatpush2.msra.mxu0 0.0
    %1654 = vmatprep.subr.mxu0 0.0
    %1655 = vmatpush2.msra.mxu0 0.0
    %1656 = vmatprep.subr.mxu0 0.0
    %1657 = vmatpush2.msra.mxu0 0.0
    %1658 = vmatprep.subr.mxu0 0.0
    %1659 = vmatpush2.msra.mxu0 0.0
    %1660 = vmatprep.subr.mxu0 0.0
    %1661 = vmatpush2.msra.mxu0 0.0
    %1662 = vmatprep.subr.mxu0 0.0
    %1663 = vmatpush2.msra.mxu0 0.0
    %1664 = vmatprep.subr.mxu0 0.0
    %1665 = vmatpush2.msra.mxu0 0.0
    %1666 = vmatprep.subr.mxu0 0.0
    %1667 = vmatpush2.msra.mxu0 0.0
    %1668 = vmatprep.mubr.f32.mxu0 0.0
    %1669 = vmatmul.mubr.f32.gmra.mxu0 %v1597
    %v1670 = vpop.f32.mrf.mxu0
    %v1671 = vadd.f32 0.0, %v1670
    %v1672 = vpop.f32.mrf.mxu0
    %1673 = vmatprep.mubr.f32.mxu0 0.0
    %1674 = vmatmul.mubr.f32.gmra.mxu0 %v1600
    %v1675 = vpop.f32.mrf.mxu0
    %v1676 = vadd.f32 0.0, %v1675
    %v1677 = vpop.f32.mrf.mxu0
    %1678 = vdwg.mxu0
    %1679 = vrot.lane.b32.xlu0 %v628, 48
    %v1680 = vpop.permute.xlu0 %1679
    %1681 = vrot.lane.b32.xlu0 %v538, 48
    %v1682 = vpop.permute.xlu0 %1681
    %v1685 = vsel %vm724, %v1589, 0
    %v1688 = vsel %vm724, %v1590, 0
    %v1690 = vsel %vm781, %v1682, 0
    %1692 = vmatprep.subr.mxu0 0.0
    %1693 = vmatpush1.msra.mxu0 0.0
    %1694 = vmatprep.subr.mxu0 0.0
    %1695 = vmatpush1.msra.mxu0 0.0
    %1696 = vmatprep.subr.mxu0 0.0
    %1697 = vmatpush1.msra.mxu0 0.0
    %1698 = vmatprep.subr.mxu0 0.0
    %1699 = vmatpush1.msra.mxu0 0.0
    %1700 = vmatprep.subr.mxu0 0.0
    %1701 = vmatpush1.msra.mxu0 0.0
    %1702 = vmatprep.subr.mxu0 0.0
    %1703 = vmatpush1.msra.mxu0 0.0
    %1704 = vmatprep.subr.mxu0 0.0
    %1705 = vmatpush1.msra.mxu0 0.0
    %1706 = vmatprep.subr.mxu0 0.0
    %1707 = vmatpush1.msra.mxu0 0.0
    %1708 = vmatprep.subr.mxu0 0.0
    %1709 = vmatpush1.msra.mxu0 0.0
    %1710 = vmatprep.subr.mxu0 0.0
    %1711 = vmatpush1.msra.mxu0 0.0
    %1712 = vmatprep.subr.mxu0 0.0
    %1713 = vmatpush1.msra.mxu0 0.0
    %1714 = vmatprep.subr.mxu0 0.0
    %1715 = vmatpush1.msra.mxu0 0.0
    %1716 = vmatprep.subr.mxu0 0.0
    %1717 = vmatpush1.msra.mxu0 0.0
    %1718 = vmatprep.subr.mxu0 0.0
    %1719 = vmatpush1.msra.mxu0 0.0
    %1720 = vmatprep.subr.mxu0 0.0
    %1721 = vmatpush1.msra.mxu0 %v1690
    %1722 = vmatprep.subr.mxu0 0.0
    %1723 = vmatpush1.msra.mxu0 %v1680
    %1724 = vmatprep.subr.mxu0 0.0
    %1725 = vmatpush2.msra.mxu0 0.0
    %1726 = vmatprep.subr.mxu0 0.0
    %1727 = vmatpush2.msra.mxu0 0.0
    %1728 = vmatprep.subr.mxu0 0.0
    %1729 = vmatpush2.msra.mxu0 0.0
    %1730 = vmatprep.subr.mxu0 0.0
    %1731 = vmatpush2.msra.mxu0 0.0
    %1732 = vmatprep.subr.mxu0 0.0
    %1733 = vmatpush2.msra.mxu0 0.0
    %1734 = vmatprep.subr.mxu0 0.0
    %1735 = vmatpush2.msra.mxu0 0.0
    %1736 = vmatprep.subr.mxu0 0.0
    %1737 = vmatpush2.msra.mxu0 0.0
    %1738 = vmatprep.subr.mxu0 0.0
    %1739 = vmatpush2.msra.mxu0 0.0
    %1740 = vmatprep.subr.mxu0 0.0
    %1741 = vmatpush2.msra.mxu0 0.0
    %1742 = vmatprep.subr.mxu0 0.0
    %1743 = vmatpush2.msra.mxu0 0.0
    %1744 = vmatprep.subr.mxu0 0.0
    %1745 = vmatpush2.msra.mxu0 0.0
    %1746 = vmatprep.subr.mxu0 0.0
    %1747 = vmatpush2.msra.mxu0 0.0
    %1748 = vmatprep.subr.mxu0 0.0
    %1749 = vmatpush2.msra.mxu0 0.0
    %1750 = vmatprep.subr.mxu0 0.0
    %1751 = vmatpush2.msra.mxu0 0.0
    %1752 = vmatprep.subr.mxu0 0.0
    %1753 = vmatpush2.msra.mxu0 0.0
    %1754 = vmatprep.subr.mxu0 0.0
    %1755 = vmatpush2.msra.mxu0 0.0
    %1756 = vmatprep.mubr.f32.mxu0 0.0
    %1757 = vmatmul.mubr.f32.gmra.mxu0 %v1685
    %v1758 = vpop.f32.mrf.mxu0
    %v1759 = vadd.f32 0.0, %v1758
    %v1760 = vpop.f32.mrf.mxu0
    %1761 = vmatprep.mubr.f32.mxu0 0.0
    %1762 = vmatmul.mubr.f32.gmra.mxu0 %v1688
    %v1763 = vpop.f32.mrf.mxu0
    %v1764 = vadd.f32 0.0, %v1763
    %v1765 = vpop.f32.mrf.mxu0
    %1766 = vdwg.mxu0
    %1767 = vrot.lane.b32.xlu0 %v539, 104
    %v1768 = vpop.permute.xlu0 %1767
    %1769 = vrot.lane.b32.xlu0 %v523, 104
    %v1770 = vpop.permute.xlu0 %1769
    %1771 = vrot.lane.b32.xlu0 %v539, 72
    %v1772 = vpop.permute.xlu0 %1771
    %1773 = vrot.lane.b32.xlu0 %v523, 72
    %v1774 = vpop.permute.xlu0 %1773
    %v1775 = vsel %vm544, %v1768, 0
    %v1777 = vsel %vm544, %v1770, 0
    %v1779 = vsel %vm544, %v1772, 0
    %v1781 = vsel %vm544, %v1774, 0
    %1783 = vmatprep.subr.mxu0 0.0
    %1784 = vmatpush1.xpose.msra.mxu0 0.0
    %1785 = vmatprep.subr.mxu0 0.0
    %1786 = vmatpush1.xpose.msra.mxu0 0.0
    %1787 = vmatprep.subr.mxu0 0.0
    %1788 = vmatpush1.xpose.msra.mxu0 0.0
    %1789 = vmatprep.subr.mxu0 0.0
    %1790 = vmatpush1.xpose.msra.mxu0 0.0
    %1791 = vmatprep.subr.mxu0 0.0
    %1792 = vmatpush1.xpose.msra.mxu0 0.0
    %1793 = vmatprep.subr.mxu0 0.0
    %1794 = vmatpush1.xpose.msra.mxu0 0.0
    %1795 = vmatprep.subr.mxu0 0.0
    %1796 = vmatpush1.xpose.msra.mxu0 0.0
    %1797 = vmatprep.subr.mxu0 0.0
    %1798 = vmatpush1.xpose.msra.mxu0 0.0
    %1799 = vmatprep.subr.mxu0 0.0
    %1800 = vmatpush1.xpose.msra.mxu0 0.0
    %1801 = vmatprep.subr.mxu0 0.0
    %1802 = vmatpush1.xpose.msra.mxu0 0.0
    %1803 = vmatprep.subr.mxu0 0.0
    %1804 = vmatpush1.xpose.msra.mxu0 0.0
    %1805 = vmatprep.subr.mxu0 0.0
    %1806 = vmatpush1.xpose.msra.mxu0 0.0
    %1807 = vmatprep.subr.mxu0 0.0
    %1808 = vmatpush1.xpose.msra.mxu0 0.0
    %1809 = vmatprep.subr.mxu0 0.0
    %1810 = vmatpush1.xpose.msra.mxu0 0.0
    %1811 = vmatprep.subr.mxu0 0.0
    %1812 = vmatpush1.xpose.msra.mxu0 %v1781
    %1813 = vmatprep.subr.mxu0 0.0
    %1814 = vmatpush1.xpose.msra.mxu0 %v1779
    %1815 = vmatprep.subr.mxu0 0.0
    %1816 = vmatpush2.xpose.msra.mxu0 0.0
    %1817 = vmatprep.subr.mxu0 0.0
    %1818 = vmatpush2.xpose.msra.mxu0 0.0
    %1819 = vmatprep.subr.mxu0 0.0
    %1820 = vmatpush2.xpose.msra.mxu0 0.0
    %1821 = vmatprep.subr.mxu0 0.0
    %1822 = vmatpush2.xpose.msra.mxu0 0.0
    %1823 = vmatprep.subr.mxu0 0.0
    %1824 = vmatpush2.xpose.msra.mxu0 0.0
    %1825 = vmatprep.subr.mxu0 0.0
    %1826 = vmatpush2.xpose.msra.mxu0 0.0
    %1827 = vmatprep.subr.mxu0 0.0
    %1828 = vmatpush2.xpose.msra.mxu0 0.0
    %1829 = vmatprep.subr.mxu0 0.0
    %1830 = vmatpush2.xpose.msra.mxu0 0.0
    %1831 = vmatprep.subr.mxu0 0.0
    %1832 = vmatpush2.xpose.msra.mxu0 0.0
    %1833 = vmatprep.subr.mxu0 0.0
    %1834 = vmatpush2.xpose.msra.mxu0 0.0
    %1835 = vmatprep.subr.mxu0 0.0
    %1836 = vmatpush2.xpose.msra.mxu0 0.0
    %1837 = vmatprep.subr.mxu0 0.0
    %1838 = vmatpush2.xpose.msra.mxu0 0.0
    %1839 = vmatprep.subr.mxu0 0.0
    %1840 = vmatpush2.xpose.msra.mxu0 0.0
    %1841 = vmatprep.subr.mxu0 0.0
    %1842 = vmatpush2.xpose.msra.mxu0 0.0
    %1843 = vmatprep.subr.mxu0 0.0
    %1844 = vmatpush2.xpose.msra.mxu0 0.0
    %1845 = vmatprep.subr.mxu0 0.0
    %1846 = vmatpush2.xpose.msra.mxu0 0.0
    %1847 = vmatprep.mubr.f32.mxu0 0.0
    %1848 = vmatmul.mubr.f32.gmra.mxu0 %v1775
    %v1849 = vpop.f32.mrf.mxu0
    %v1850 = vadd.f32 0.0, %v1849
    %v1851 = vpop.f32.mrf.mxu0
    %1852 = vmatprep.mubr.f32.mxu0 0.0
    %1853 = vmatmul.mubr.f32.gmra.mxu0 %v1777
    %v1854 = vpop.f32.mrf.mxu0
    %v1855 = vadd.f32 0.0, %v1854
    %v1856 = vpop.f32.mrf.mxu0
    %1857 = vdwg.mxu0
    %1858 = vrot.lane.b32.xlu0 %v628, 104
    %v1859 = vpop.permute.xlu0 %1858
    %1860 = vrot.lane.b32.xlu0 %v538, 104
    %v1861 = vpop.permute.xlu0 %1860
    %1862 = vrot.lane.b32.xlu0 %v628, 72
    %v1863 = vpop.permute.xlu0 %1862
    %1864 = vrot.lane.b32.xlu0 %v538, 72
    %v1865 = vpop.permute.xlu0 %1864
    %v1866 = vsel %vm544, %v1859, 0
    %v1868 = vsel %vm544, %v1861, 0
    %v1870 = vsel %vm544, %v1863, 0
    %v1872 = vsel %vm544, %v1865, 0
    %1874 = vmatprep.subr.mxu0 0.0
    %1875 = vmatpush1.xpose.msra.mxu0 0.0
    %1876 = vmatprep.subr.mxu0 0.0
    %1877 = vmatpush1.xpose.msra.mxu0 0.0
    %1878 = vmatprep.subr.mxu0 0.0
    %1879 = vmatpush1.xpose.msra.mxu0 0.0
    %1880 = vmatprep.subr.mxu0 0.0
    %1881 = vmatpush1.xpose.msra.mxu0 0.0
    %1882 = vmatprep.subr.mxu0 0.0
    %1883 = vmatpush1.xpose.msra.mxu0 0.0
    %1884 = vmatprep.subr.mxu0 0.0
    %1885 = vmatpush1.xpose.msra.mxu0 0.0
    %1886 = vmatprep.subr.mxu0 0.0
    %1887 = vmatpush1.xpose.msra.mxu0 0.0
    %1888 = vmatprep.subr.mxu0 0.0
    %1889 = vmatpush1.xpose.msra.mxu0 0.0
    %1890 = vmatprep.subr.mxu0 0.0
    %1891 = vmatpush1.xpose.msra.mxu0 0.0
    %1892 = vmatprep.subr.mxu0 0.0
    %1893 = vmatpush1.xpose.msra.mxu0 0.0
    %1894 = vmatprep.subr.mxu0 0.0
    %1895 = vmatpush1.xpose.msra.mxu0 0.0
    %1896 = vmatprep.subr.mxu0 0.0
    %1897 = vmatpush1.xpose.msra.mxu0 0.0
    %1898 = vmatprep.subr.mxu0 0.0
    %1899 = vmatpush1.xpose.msra.mxu0 0.0
    %1900 = vmatprep.subr.mxu0 0.0
    %1901 = vmatpush1.xpose.msra.mxu0 0.0
    %1902 = vmatprep.subr.mxu0 0.0
    %1903 = vmatpush1.xpose.msra.mxu0 %v1872
    %1904 = vmatprep.subr.mxu0 0.0
    %1905 = vmatpush1.xpose.msra.mxu0 %v1870
    %1906 = vmatprep.subr.mxu0 0.0
    %1907 = vmatpush2.xpose.msra.mxu0 0.0
    %1908 = vmatprep.subr.mxu0 0.0
    %1909 = vmatpush2.xpose.msra.mxu0 0.0
    %1910 = vmatprep.subr.mxu0 0.0
    %1911 = vmatpush2.xpose.msra.mxu0 0.0
    %1912 = vmatprep.subr.mxu0 0.0
    %1913 = vmatpush2.xpose.msra.mxu0 0.0
    %1914 = vmatprep.subr.mxu0 0.0
    %1915 = vmatpush2.xpose.msra.mxu0 0.0
    %1916 = vmatprep.subr.mxu0 0.0
    %1917 = vmatpush2.xpose.msra.mxu0 0.0
    %1918 = vmatprep.subr.mxu0 0.0
    %1919 = vmatpush2.xpose.msra.mxu0 0.0
    %1920 = vmatprep.subr.mxu0 0.0
    %1921 = vmatpush2.xpose.msra.mxu0 0.0
    %1922 = vmatprep.subr.mxu0 0.0
    %1923 = vmatpush2.xpose.msra.mxu0 0.0
    %1924 = vmatprep.subr.mxu0 0.0
    %1925 = vmatpush2.xpose.msra.mxu0 0.0
    %1926 = vmatprep.subr.mxu0 0.0
    %1927 = vmatpush2.xpose.msra.mxu0 0.0
    %1928 = vmatprep.subr.mxu0 0.0
    %1929 = vmatpush2.xpose.msra.mxu0 0.0
    %1930 = vmatprep.subr.mxu0 0.0
    %1931 = vmatpush2.xpose.msra.mxu0 0.0
    %1932 = vmatprep.subr.mxu0 0.0
    %1933 = vmatpush2.xpose.msra.mxu0 0.0
    %1934 = vmatprep.subr.mxu0 0.0
    %1935 = vmatpush2.xpose.msra.mxu0 0.0
    %1936 = vmatprep.subr.mxu0 0.0
    %1937 = vmatpush2.xpose.msra.mxu0 0.0
    %1938 = vmatprep.mubr.f32.mxu0 0.0
    %1939 = vmatmul.mubr.f32.gmra.mxu0 %v1866
    %v1940 = vpop.f32.mrf.mxu0
    %v1941 = vadd.f32 0.0, %v1940
    %v1942 = vpop.f32.mrf.mxu0
    %1943 = vmatprep.mubr.f32.mxu0 0.0
    %1944 = vmatmul.mubr.f32.gmra.mxu0 %v1868
    %v1945 = vpop.f32.mrf.mxu0
    %v1946 = vadd.f32 0.0, %v1945
    %v1947 = vpop.f32.mrf.mxu0
    %1948 = vdwg.mxu0
    %v1949 = vmul.f32 %v1850, 0.35355338
    %v1950 = vmul.f32 %v1855, 0.35355338
    %v1951 = vmul.f32 %v1941, 0.35355338
    %v1952 = vmul.f32 %v1946, 0.35355338
    %v1953 = vadd.f32 %v1949, %v445
    %v1954 = vadd.f32 %v1950, %v446
    %v1955 = vadd.f32 %v1951, %v447
    %v1956 = vadd.f32 %v1952, %v448
    %v1957 = vsel %vm724, %v1953, -inf
    %1958 = vmax.xlane.f32.xlu0 %v1957
    %v1959 = vpop.xlane.xlu0 %1958
    %v1960 = vsel %vm728, %v1954, -inf
    %1961 = vmax.xlane.f32.xlu0 %v1960
    %v1962 = vpop.xlane.xlu0 %1961
    %v1963 = vsel %vm724, %v1955, -inf
    %1964 = vmax.xlane.f32.xlu0 %v1963
    %v1965 = vpop.xlane.xlu0 %1964
    %v1966 = vsel %vm728, %v1956, -inf
    %1967 = vmax.xlane.f32.xlu0 %v1966
    %v1968 = vpop.xlane.xlu0 %1967
    %v1969 = vsub.f32 %v1953, %v1959
    %v1970 = vsub.f32 %v1954, %v1962
    %v1971 = vsub.f32 %v1955, %v1965
    %v1972 = vsub.f32 %v1956, %v1968
    %v1973 = vmul.f32 %v1969, 1.442695
    %v1974 = vpow.pop %v1973
    %v1975 = vmul.f32 %v1970, 1.442695
    %v1976 = vpow.pop %v1975
    %v1977 = vmul.f32 %v1971, 1.442695
    %v1978 = vpow.pop %v1977
    %v1979 = vmul.f32 %v1972, 1.442695
    %v1980 = vpow.pop %v1979
    %v1981 = vsel %vm724, %v1974, 0.0
    %1982 = vadd.xlane.f32.xlu0 %v1981
    %v1983 = vpop.xlane.xlu0 %1982
    %v1984 = vsel %vm728, %v1976, 0.0
    %1985 = vadd.xlane.f32.xlu0 %v1984
    %v1986 = vpop.xlane.xlu0 %1985
    %v1987 = vsel %vm724, %v1978, 0.0
    %1988 = vadd.xlane.f32.xlu0 %v1987
    %v1989 = vpop.xlane.xlu0 %1988
    %v1990 = vsel %vm728, %v1980, 0.0
    %1991 = vadd.xlane.f32.xlu0 %v1990
    %v1992 = vpop.xlane.xlu0 %1991
    %v1993 = vrcp.pop %v1983
    %v1994 = vrcp.pop %v1986
    %v1995 = vrcp.pop %v1989
    %v1996 = vrcp.pop %v1992
    %v1997 = vmul.f32 %v1974, %v1993
    %v1998 = vmul.f32 %v1976, %v1994
    %v1999 = vmul.f32 %v1978, %v1995
    %v2000 = vmul.f32 %v1980, %v1996
    %2001 = vrot.lane.b32.xlu0 %v539, 40
    %v2002 = vpop.permute.xlu0 %2001
    %2003 = vrot.lane.b32.xlu0 %v523, 40
    %v2004 = vpop.permute.xlu0 %2003
    %v2007 = vsel %vm724, %v1997, 0
    %v2010 = vsel %vm724, %v1998, 0
    %v2012 = vsel %vm781, %v2004, 0
    %2014 = vmatprep.subr.mxu0 0.0
    %2015 = vmatpush1.msra.mxu0 0.0
    %2016 = vmatprep.subr.mxu0 0.0
    %2017 = vmatpush1.msra.mxu0 0.0
    %2018 = vmatprep.subr.mxu0 0.0
    %2019 = vmatpush1.msra.mxu0 0.0
    %2020 = vmatprep.subr.mxu0 0.0
    %2021 = vmatpush1.msra.mxu0 0.0
    %2022 = vmatprep.subr.mxu0 0.0
    %2023 = vmatpush1.msra.mxu0 0.0
    %2024 = vmatprep.subr.mxu0 0.0
    %2025 = vmatpush1.msra.mxu0 0.0
    %2026 = vmatprep.subr.mxu0 0.0
    %2027 = vmatpush1.msra.mxu0 0.0
    %2028 = vmatprep.subr.mxu0 0.0
    %2029 = vmatpush1.msra.mxu0 0.0
    %2030 = vmatprep.subr.mxu0 0.0
    %2031 = vmatpush1.msra.mxu0 0.0
    %2032 = vmatprep.subr.mxu0 0.0
    %2033 = vmatpush1.msra.mxu0 0.0
    %2034 = vmatprep.subr.mxu0 0.0
    %2035 = vmatpush1.msra.mxu0 0.0
    %2036 = vmatprep.subr.mxu0 0.0
    %2037 = vmatpush1.msra.mxu0 0.0
    %2038 = vmatprep.subr.mxu0 0.0
    %2039 = vmatpush1.msra.mxu0 0.0
    %2040 = vmatprep.subr.mxu0 0.0
    %2041 = vmatpush1.msra.mxu0 0.0
    %2042 = vmatprep.subr.mxu0 0.0
    %2043 = vmatpush1.msra.mxu0 %v2012
    %2044 = vmatprep.subr.mxu0 0.0
    %2045 = vmatpush1.msra.mxu0 %v2002
    %2046 = vmatprep.subr.mxu0 0.0
    %2047 = vmatpush2.msra.mxu0 0.0
    %2048 = vmatprep.subr.mxu0 0.0
    %2049 = vmatpush2.msra.mxu0 0.0
    %2050 = vmatprep.subr.mxu0 0.0
    %2051 = vmatpush2.msra.mxu0 0.0
    %2052 = vmatprep.subr.mxu0 0.0
    %2053 = vmatpush2.msra.mxu0 0.0
    %2054 = vmatprep.subr.mxu0 0.0
    %2055 = vmatpush2.msra.mxu0 0.0
    %2056 = vmatprep.subr.mxu0 0.0
    %2057 = vmatpush2.msra.mxu0 0.0
    %2058 = vmatprep.subr.mxu0 0.0
    %2059 = vmatpush2.msra.mxu0 0.0
    %2060 = vmatprep.subr.mxu0 0.0
    %2061 = vmatpush2.msra.mxu0 0.0
    %2062 = vmatprep.subr.mxu0 0.0
    %2063 = vmatpush2.msra.mxu0 0.0
    %2064 = vmatprep.subr.mxu0 0.0
    %2065 = vmatpush2.msra.mxu0 0.0
    %2066 = vmatprep.subr.mxu0 0.0
    %2067 = vmatpush2.msra.mxu0 0.0
    %2068 = vmatprep.subr.mxu0 0.0
    %2069 = vmatpush2.msra.mxu0 0.0
    %2070 = vmatprep.subr.mxu0 0.0
    %2071 = vmatpush2.msra.mxu0 0.0
    %2072 = vmatprep.subr.mxu0 0.0
    %2073 = vmatpush2.msra.mxu0 0.0
    %2074 = vmatprep.subr.mxu0 0.0
    %2075 = vmatpush2.msra.mxu0 0.0
    %2076 = vmatprep.subr.mxu0 0.0
    %2077 = vmatpush2.msra.mxu0 0.0
    %2078 = vmatprep.mubr.f32.mxu0 0.0
    %2079 = vmatmul.mubr.f32.gmra.mxu0 %v2007
    %v2080 = vpop.f32.mrf.mxu0
    %v2081 = vadd.f32 0.0, %v2080
    %v2082 = vpop.f32.mrf.mxu0
    %2083 = vmatprep.mubr.f32.mxu0 0.0
    %2084 = vmatmul.mubr.f32.gmra.mxu0 %v2010
    %v2085 = vpop.f32.mrf.mxu0
    %v2086 = vadd.f32 0.0, %v2085
    %v2087 = vpop.f32.mrf.mxu0
    %2088 = vdwg.mxu0
    %2089 = vrot.lane.b32.xlu0 %v628, 40
    %v2090 = vpop.permute.xlu0 %2089
    %2091 = vrot.lane.b32.xlu0 %v538, 40
    %v2092 = vpop.permute.xlu0 %2091
    %v2095 = vsel %vm724, %v1999, 0
    %v2098 = vsel %vm724, %v2000, 0
    %v2100 = vsel %vm781, %v2092, 0
    %2102 = vmatprep.subr.mxu0 0.0
    %2103 = vmatpush1.msra.mxu0 0.0
    %2104 = vmatprep.subr.mxu0 0.0
    %2105 = vmatpush1.msra.mxu0 0.0
    %2106 = vmatprep.subr.mxu0 0.0
    %2107 = vmatpush1.msra.mxu0 0.0
    %2108 = vmatprep.subr.mxu0 0.0
    %2109 = vmatpush1.msra.mxu0 0.0
    %2110 = vmatprep.subr.mxu0 0.0
    %2111 = vmatpush1.msra.mxu0 0.0
    %2112 = vmatprep.subr.mxu0 0.0
    %2113 = vmatpush1.msra.mxu0 0.0
    %2114 = vmatprep.subr.mxu0 0.0
    %2115 = vmatpush1.msra.mxu0 0.0
    %2116 = vmatprep.subr.mxu0 0.0
    %2117 = vmatpush1.msra.mxu0 0.0
    %2118 = vmatprep.subr.mxu0 0.0
    %2119 = vmatpush1.msra.mxu0 0.0
    %2120 = vmatprep.subr.mxu0 0.0
    %2121 = vmatpush1.msra.mxu0 0.0
    %2122 = vmatprep.subr.mxu0 0.0
    %2123 = vmatpush1.msra.mxu0 0.0
    %2124 = vmatprep.subr.mxu0 0.0
    %2125 = vmatpush1.msra.mxu0 0.0
    %2126 = vmatprep.subr.mxu0 0.0
    %2127 = vmatpush1.msra.mxu0 0.0
    %2128 = vmatprep.subr.mxu0 0.0
    %2129 = vmatpush1.msra.mxu0 0.0
    %2130 = vmatprep.subr.mxu0 0.0
    %2131 = vmatpush1.msra.mxu0 %v2100
    %2132 = vmatprep.subr.mxu0 0.0
    %2133 = vmatpush1.msra.mxu0 %v2090
    %2134 = vmatprep.subr.mxu0 0.0
    %2135 = vmatpush2.msra.mxu0 0.0
    %2136 = vmatprep.subr.mxu0 0.0
    %2137 = vmatpush2.msra.mxu0 0.0
    %2138 = vmatprep.subr.mxu0 0.0
    %2139 = vmatpush2.msra.mxu0 0.0
    %2140 = vmatprep.subr.mxu0 0.0
    %2141 = vmatpush2.msra.mxu0 0.0
    %2142 = vmatprep.subr.mxu0 0.0
    %2143 = vmatpush2.msra.mxu0 0.0
    %2144 = vmatprep.subr.mxu0 0.0
    %2145 = vmatpush2.msra.mxu0 0.0
    %2146 = vmatprep.subr.mxu0 0.0
    %2147 = vmatpush2.msra.mxu0 0.0
    %2148 = vmatprep.subr.mxu0 0.0
    %2149 = vmatpush2.msra.mxu0 0.0
    %2150 = vmatprep.subr.mxu0 0.0
    %2151 = vmatpush2.msra.mxu0 0.0
    %2152 = vmatprep.subr.mxu0 0.0
    %2153 = vmatpush2.msra.mxu0 0.0
    %2154 = vmatprep.subr.mxu0 0.0
    %2155 = vmatpush2.msra.mxu0 0.0
    %2156 = vmatprep.subr.mxu0 0.0
    %2157 = vmatpush2.msra.mxu0 0.0
    %2158 = vmatprep.subr.mxu0 0.0
    %2159 = vmatpush2.msra.mxu0 0.0
    %2160 = vmatprep.subr.mxu0 0.0
    %2161 = vmatpush2.msra.mxu0 0.0
    %2162 = vmatprep.subr.mxu0 0.0
    %2163 = vmatpush2.msra.mxu0 0.0
    %2164 = vmatprep.subr.mxu0 0.0
    %2165 = vmatpush2.msra.mxu0 0.0
    %2166 = vmatprep.mubr.f32.mxu0 0.0
    %2167 = vmatmul.mubr.f32.gmra.mxu0 %v2095
    %v2168 = vpop.f32.mrf.mxu0
    %v2169 = vadd.f32 0.0, %v2168
    %v2170 = vpop.f32.mrf.mxu0
    %2171 = vmatprep.mubr.f32.mxu0 0.0
    %2172 = vmatmul.mubr.f32.gmra.mxu0 %v2098
    %v2173 = vpop.f32.mrf.mxu0
    %v2174 = vadd.f32 0.0, %v2173
    %v2175 = vpop.f32.mrf.mxu0
    %2176 = vdwg.mxu0
    %2181 = vrot.lane.b32.xlu0 %v1261, 8
    %v2182 = vpop.permute.xlu0 %2181
    %2183 = vrot.lane.b32.xlu0 %v1266, 8
    %v2184 = vpop.permute.xlu0 %2183
    %2185 = vrot.lane.b32.xlu0 %v1349, 8
    %v2186 = vpop.permute.xlu0 %2185
    %2187 = vrot.lane.b32.xlu0 %v1354, 8
    %v2188 = vpop.permute.xlu0 %2187
    %2197 = vrot.lane.b32.xlu0 %v1671, 16
    %v2198 = vpop.permute.xlu0 %2197
    %2199 = vrot.lane.b32.xlu0 %v1676, 16
    %v2200 = vpop.permute.xlu0 %2199
    %2201 = vrot.lane.b32.xlu0 %v1759, 16
    %v2202 = vpop.permute.xlu0 %2201
    %2203 = vrot.lane.b32.xlu0 %v1764, 16
    %v2204 = vpop.permute.xlu0 %2203
    %2213 = vrot.lane.b32.xlu0 %v2081, 24
    %v2214 = vpop.permute.xlu0 %2213
    %2215 = vrot.lane.b32.xlu0 %v2086, 24
    %v2216 = vpop.permute.xlu0 %2215
    %2217 = vrot.lane.b32.xlu0 %v2169, 24
    %v2218 = vpop.permute.xlu0 %2217
    %2219 = vrot.lane.b32.xlu0 %v2174, 24
    %v2220 = vpop.permute.xlu0 %2219
    %v2225 = vsel %vm544, %v851, %v2182
    %v2226 = vsel %vm544, %v856, %v2184
    %v2227 = vsel %vm544, %v939, %v2186
    %v2228 = vsel %vm544, %v944, %v2188
    %vm2229 = vcmask 130048
    %v2230 = vsel %vm2229, %v2225, %v2198
    %v2231 = vsel %vm2229, %v2226, %v2200
    %v2232 = vsel %vm2229, %v2227, %v2202
    %v2233 = vsel %vm2229, %v2228, %v2204
    %vm2234 = vcmask 195584
    %v2235 = vsel %vm2234, %v2230, %v2214
    %v2236 = vsel %vm2234, %v2231, %v2216
    %v2237 = vsel %vm2234, %v2232, %v2218
    %v2238 = vsel %vm2234, %v2233, %v2220
    %v2243 = vcombine.high %v2235, %v2235
    %v2244 = vcombine.high %v2237, %v2237
    %v2245 = vcombine.low %v2235, %v2243
    %v2246 = vcombine.low %v2236, %v2237
    %v2247 = vcombine.low %v2244, %v2238
    %v2251 = vpack.c.bf16 %v2246, %v2245
    %v2252 = vpack.c.bf16 %v2247, %v2247
    %v2253 = vld [vmem:[%s7] sm:$0xf]
    %v2254 = vld [vmem:[%s7 + $0x4] sm:$0xf]
    %v2255 = vld [vmem:[%s7 + $0x8] sm:$0xf]
    %v2256 = vld [vmem:[%s7 + $0xc] sm:$0xf]
    %v2257 = vlaneseq
    %v2258 = vshrl.u32 %v2257, 7
    %v2259 = vsub.s32 2, %v2258
    %v2260 = vrot.slane %v449, %v2259
    %v2265 = vunpack.c.l.b16 %v2253
    %v2266 = vunpack.c.l.b16 %v2254
    %v2267 = vunpack.c.l.b16 %v2255
    %v2268 = vunpack.c.l.b16 %v2256
    %v2269 = vpack.c.b16 %v2266, %v2265
    %v2270 = vpack.c.b16 %v2268, %v2267
    %v2274 = vsel %vm478, %v2251, 0
    %v2277 = vsel %vm478, %v2252, 0
    %2279 = vmatprep.subr.bf16.mxu0 0
    %2280 = vmatpush1.bf16.msra.mxu0 0
    %2281 = vmatprep.subr.bf16.mxu0 0
    %2282 = vmatpush1.bf16.msra.mxu0 0
    %2283 = vmatprep.subr.bf16.mxu0 0
    %2284 = vmatpush1.bf16.msra.mxu0 0
    %2285 = vmatprep.subr.bf16.mxu0 0
    %2286 = vmatpush1.bf16.msra.mxu0 0
    %2287 = vmatprep.subr.bf16.mxu0 0
    %2288 = vmatpush1.bf16.msra.mxu0 0
    %2289 = vmatprep.subr.bf16.mxu0 0
    %2290 = vmatpush1.bf16.msra.mxu0 0
    %2291 = vmatprep.subr.bf16.mxu0 0
    %2292 = vmatpush1.bf16.msra.mxu0 %v2270
    %2293 = vmatprep.subr.bf16.mxu0 0
    %2294 = vmatpush1.bf16.msra.mxu0 %v2269
    %2295 = vmatprep.subr.bf16.mxu0 0
    %2296 = vmatpush2.bf16.msra.mxu0 0
    %2297 = vmatprep.subr.bf16.mxu0 0
    %2298 = vmatpush2.bf16.msra.mxu0 0
    %2299 = vmatprep.subr.bf16.mxu0 0
    %2300 = vmatpush2.bf16.msra.mxu0 0
    %2301 = vmatprep.subr.bf16.mxu0 0
    %2302 = vmatpush2.bf16.msra.mxu0 0
    %2303 = vmatprep.subr.bf16.mxu0 0
    %2304 = vmatpush2.bf16.msra.mxu0 0
    %2305 = vmatprep.subr.bf16.mxu0 0
    %2306 = vmatpush2.bf16.msra.mxu0 0
    %2307 = vmatprep.subr.bf16.mxu0 0
    %2308 = vmatpush2.bf16.msra.mxu0 0
    %2309 = vmatprep.subr.bf16.mxu0 0
    %2310 = vmatpush2.bf16.msra.mxu0 0
    %2311 = vmatprep.mubr.bf16.mxu0 0
    %2312 = vmatmul.mubr.bf16.gmra.mxu0 %v2274
    %v2313 = vpop.f32.mrf.mxu0
    %v2314 = vadd.f32 %v2260, %v2313
    %v2315 = vpop.f32.mrf.mxu0
    %v2316 = vpop.f32.mrf.mxu0
    %v2317 = vadd.f32 %v2260, %v2316
    %v2318 = vpop.f32.mrf.mxu0
    %2319 = vmatprep.mubr.bf16.mxu0 0
    %2320 = vmatmul.mubr.bf16.gmra.mxu0 %v2277
    %v2321 = vpop.f32.mrf.mxu0
    %v2322 = vadd.f32 %v2260, %v2321
    %v2323 = vpop.f32.mrf.mxu0
    %v2324 = vpop.f32.mrf.mxu0
    %v2325 = vpop.f32.mrf.mxu0
    %2326 = vdwg.mxu0
    %v2330 = vcombine.high %v2314, %v2314
    %v2331 = vcombine.high %v2317, %v2317
    %v2332 = vcombine.high %v2322, %v2322
    %v2336 = vadd.f32 %v155, %v2314
    %v2337 = vadd.f32 %v413, %v2330
    %v2338 = vadd.f32 %v407, %v2317
    %v2339 = vadd.f32 %v156, %v2331
    %v2340 = vadd.f32 %v414, %v2322
    %v2341 = vadd.f32 %v408, %v2332
    %v2348 = vcombine.low %v2336, %v2337
    %v2349 = vcombine.low %v2338, %v2339
    %v2350 = vcombine.low %v2340, %v2341
    %v2354 = vsel %vm478, %v2348, 0.0
    %2355 = vadd.xlane.f32.xlu0 %v2354
    %v2356 = vpop.xlane.xlu0 %2355
    %v2357 = vsel %vm478, %v2349, 0.0
    %2358 = vadd.xlane.f32.xlu0 %v2357
    %v2359 = vpop.xlane.xlu0 %2358
    %v2360 = vsel %vm478, %v2350, 0.0
    %2361 = vadd.xlane.f32.xlu0 %v2360
    %v2362 = vpop.xlane.xlu0 %2361
    %v2363 = vrcp.pop 32.0
    %v2364 = vmul.f32 %v2356, %v2363
    %v2365 = vmul.f32 %v2359, %v2363
    %v2366 = vmul.f32 %v2362, %v2363
    %v2371 = vunpack.c.l.s4 839922192
    %v2372 = vunpack.c.0.s8 %v2371
    %v2373 = vlaneseq
    %v2374 = vshrl.u32 %v2373, 7
    %v2375 = vsub.s32 %v2372, %v2374
    %v2376 = vrot.slane %v2364, %v2375
    %v2378 = vunpack.c.l.s4 1985246804
    %v2379 = vunpack.c.0.s8 %v2378
    %v2380 = vlaneseq
    %v2381 = vshrl.u32 %v2380, 7
    %v2382 = vsub.s32 %v2379, %v2381
    %v2383 = vrot.slane %v2364, %v2382
    %v2385 = vunpack.c.l.s4 839922192
    %v2386 = vunpack.c.0.s8 %v2385
    %v2387 = vlaneseq
    %v2388 = vshrl.u32 %v2387, 7
    %v2389 = vsub.s32 %v2386, %v2388
    %v2390 = vrot.slane %v2365, %v2389
    %v2392 = vunpack.c.l.s4 1985246804
    %v2393 = vunpack.c.0.s8 %v2392
    %v2394 = vlaneseq
    %v2395 = vshrl.u32 %v2394, 7
    %v2396 = vsub.s32 %v2393, %v2395
    %v2397 = vrot.slane %v2365, %v2396
    %v2399 = vunpack.c.l.s4 839922192
    %v2400 = vunpack.c.0.s8 %v2399
    %v2401 = vlaneseq
    %v2402 = vshrl.u32 %v2401, 7
    %v2403 = vsub.s32 %v2400, %v2402
    %v2404 = vrot.slane %v2366, %v2403
    %v2406 = vunpack.c.l.s4 1985246804
    %v2407 = vunpack.c.0.s8 %v2406
    %v2408 = vlaneseq
    %v2409 = vshrl.u32 %v2408, 7
    %v2410 = vsub.s32 %v2407, %v2409
    %v2411 = vrot.slane %v2366, %v2410
    %v2418 = vsub.f32 %v2336, %v2376
    %v2419 = vsub.f32 %v2337, %v2383
    %v2420 = vsub.f32 %v2338, %v2390
    %v2421 = vsub.f32 %v2339, %v2397
    %v2422 = vsub.f32 %v2340, %v2404
    %v2423 = vsub.f32 %v2341, %v2411
    %v2424 = vmul.f32 %v2418, %v2418
    %v2425 = vmul.f32 %v2419, %v2419
    %v2426 = vmul.f32 %v2420, %v2420
    %v2427 = vmul.f32 %v2421, %v2421
    %v2428 = vmul.f32 %v2422, %v2422
    %v2429 = vmul.f32 %v2423, %v2423
    %v2436 = vcombine.low %v2424, %v2425
    %v2437 = vcombine.low %v2426, %v2427
    %v2438 = vcombine.low %v2428, %v2429
    %v2442 = vsel %vm478, %v2436, 0.0
    %2443 = vadd.xlane.f32.xlu0 %v2442
    %v2444 = vpop.xlane.xlu0 %2443
    %v2445 = vsel %vm478, %v2437, 0.0
    %2446 = vadd.xlane.f32.xlu0 %v2445
    %v2447 = vpop.xlane.xlu0 %2446
    %v2448 = vsel %vm478, %v2438, 0.0
    %2449 = vadd.xlane.f32.xlu0 %v2448
    %v2450 = vpop.xlane.xlu0 %2449
    %v2451 = vmul.f32 %v2444, %v2363
    %v2452 = vmul.f32 %v2447, %v2363
    %v2453 = vmul.f32 %v2450, %v2363
    %v2454 = vadd.f32 %v2451, 1e-05
    %v2455 = vadd.f32 %v2452, 1e-05
    %v2456 = vadd.f32 %v2453, 1e-05
    %v2457 = vrsqrt.pop %v2454
    %v2458 = vrsqrt.pop %v2455
    %v2459 = vrsqrt.pop %v2456
    %v2464 = vunpack.c.l.s4 839922192
    %v2465 = vunpack.c.0.s8 %v2464
    %v2466 = vlaneseq
    %v2467 = vshrl.u32 %v2466, 7
    %v2468 = vsub.s32 %v2465, %v2467
    %v2469 = vrot.slane %v2457, %v2468
    %v2471 = vunpack.c.l.s4 1985246804
    %v2472 = vunpack.c.0.s8 %v2471
    %v2473 = vlaneseq
    %v2474 = vshrl.u32 %v2473, 7
    %v2475 = vsub.s32 %v2472, %v2474
    %v2476 = vrot.slane %v2457, %v2475
    %v2478 = vunpack.c.l.s4 839922192
    %v2479 = vunpack.c.0.s8 %v2478
    %v2480 = vlaneseq
    %v2481 = vshrl.u32 %v2480, 7
    %v2482 = vsub.s32 %v2479, %v2481
    %v2483 = vrot.slane %v2458, %v2482
    %v2485 = vunpack.c.l.s4 1985246804
    %v2486 = vunpack.c.0.s8 %v2485
    %v2487 = vlaneseq
    %v2488 = vshrl.u32 %v2487, 7
    %v2489 = vsub.s32 %v2486, %v2488
    %v2490 = vrot.slane %v2458, %v2489
    %v2492 = vunpack.c.l.s4 839922192
    %v2493 = vunpack.c.0.s8 %v2492
    %v2494 = vlaneseq
    %v2495 = vshrl.u32 %v2494, 7
    %v2496 = vsub.s32 %v2493, %v2495
    %v2497 = vrot.slane %v2459, %v2496
    %v2499 = vunpack.c.l.s4 1985246804
    %v2500 = vunpack.c.0.s8 %v2499
    %v2501 = vlaneseq
    %v2502 = vshrl.u32 %v2501, 7
    %v2503 = vsub.s32 %v2500, %v2502
    %v2504 = vrot.slane %v2459, %v2503
    %v2511 = vmul.f32 %v2418, %v2469
    %v2512 = vmul.f32 %v2419, %v2476
    %v2513 = vmul.f32 %v2420, %v2483
    %v2514 = vmul.f32 %v2421, %v2490
    %v2515 = vmul.f32 %v2422, %v2497
    %v2516 = vmul.f32 %v2423, %v2504
    %v2517 = vlaneseq
    %v2518 = vshrl.u32 %v2517, 7
    %v2519 = vsub.s32 3, %v2518
    %v2520 = vrot.slane %v449, %v2519
    %v2522 = vcombine.high %v2520, %v2520
    %v2524 = vmul.f32 %v2511, %v2520
    %v2525 = vmul.f32 %v2512, %v2522
    %v2526 = vmul.f32 %v2513, %v2520
    %v2527 = vmul.f32 %v2514, %v2522
    %v2528 = vmul.f32 %v2515, %v2520
    %v2529 = vmul.f32 %v2516, %v2522
    %v2530 = vlaneseq
    %v2531 = vshrl.u32 %v2530, 7
    %v2532 = vsub.s32 4, %v2531
    %v2533 = vrot.slane %v449, %v2532
    %v2535 = vcombine.high %v2533, %v2533
    %v2537 = vadd.f32 %v2524, %v2533
    %v2538 = vadd.f32 %v2525, %v2535
    %v2539 = vadd.f32 %v2526, %v2533
    %v2540 = vadd.f32 %v2527, %v2535
    %v2541 = vadd.f32 %v2528, %v2533
    %v2542 = vadd.f32 %v2529, %v2535
    %v2549 = vcombine.low %v2537, %v2538
    %v2550 = vcombine.low %v2539, %v2540
    %v2551 = vcombine.low %v2541, %v2542
    %v2555 = vpack.c.bf16 %v2550, %v2549
    %v2556 = vpack.c.bf16 %v2551, %v2551
    %v2557 = vld [vmem:[%s8] sm:$0xf]
    %v2558 = vld [vmem:[%s8 + $0x4] sm:$0xf]
    %v2559 = vld [vmem:[%s8 + $0x8] sm:$0xf]
    %v2560 = vld [vmem:[%s8 + $0xc] sm:$0xf]
    %v2561 = vlaneseq
    %v2562 = vshrl.u32 %v2561, 7
    %v2563 = vsub.s32 1, %v2562
    %v2564 = vrot.slane %v449, %v2563
    %v2569 = vunpack.c.l.b16 %v2557
    %v2570 = vunpack.c.l.b16 %v2558
    %v2571 = vunpack.c.l.b16 %v2559
    %v2572 = vunpack.c.l.b16 %v2560
    %v2573 = vpack.c.b16 %v2570, %v2569
    %v2574 = vpack.c.b16 %v2572, %v2571
    %v2578 = vsel %vm478, %v2555, 0
    %v2581 = vsel %vm478, %v2556, 0
    %2583 = vmatprep.subr.bf16.mxu0 0
    %2584 = vmatpush1.bf16.msra.mxu0 0
    %2585 = vmatprep.subr.bf16.mxu0 0
    %2586 = vmatpush1.bf16.msra.mxu0 0
    %2587 = vmatprep.subr.bf16.mxu0 0
    %2588 = vmatpush1.bf16.msra.mxu0 0
    %2589 = vmatprep.subr.bf16.mxu0 0
    %2590 = vmatpush1.bf16.msra.mxu0 0
    %2591 = vmatprep.subr.bf16.mxu0 0
    %2592 = vmatpush1.bf16.msra.mxu0 0
    %2593 = vmatprep.subr.bf16.mxu0 0
    %2594 = vmatpush1.bf16.msra.mxu0 0
    %2595 = vmatprep.subr.bf16.mxu0 0
    %2596 = vmatpush1.bf16.msra.mxu0 %v2574
    %2597 = vmatprep.subr.bf16.mxu0 0
    %2598 = vmatpush1.bf16.msra.mxu0 %v2573
    %2599 = vmatprep.subr.bf16.mxu0 0
    %2600 = vmatpush2.bf16.msra.mxu0 0
    %2601 = vmatprep.subr.bf16.mxu0 0
    %2602 = vmatpush2.bf16.msra.mxu0 0
    %2603 = vmatprep.subr.bf16.mxu0 0
    %2604 = vmatpush2.bf16.msra.mxu0 0
    %2605 = vmatprep.subr.bf16.mxu0 0
    %2606 = vmatpush2.bf16.msra.mxu0 0
    %2607 = vmatprep.subr.bf16.mxu0 0
    %2608 = vmatpush2.bf16.msra.mxu0 0
    %2609 = vmatprep.subr.bf16.mxu0 0
    %2610 = vmatpush2.bf16.msra.mxu0 0
    %2611 = vmatprep.subr.bf16.mxu0 0
    %2612 = vmatpush2.bf16.msra.mxu0 0
    %2613 = vmatprep.subr.bf16.mxu0 0
    %2614 = vmatpush2.bf16.msra.mxu0 0
    %2615 = vmatprep.mubr.bf16.mxu0 0
    %2616 = vmatmul.mubr.bf16.gmra.mxu0 %v2578
    %v2617 = vpop.f32.mrf.mxu0
    %v2618 = vadd.f32 %v2564, %v2617
    %v2619 = vpop.f32.mrf.mxu0
    %v2620 = vpop.f32.mrf.mxu0
    %v2621 = vadd.f32 %v2564, %v2620
    %v2622 = vpop.f32.mrf.mxu0
    %2623 = vmatprep.mubr.bf16.mxu0 0
    %2624 = vmatmul.mubr.bf16.gmra.mxu0 %v2581
    %v2625 = vpop.f32.mrf.mxu0
    %v2626 = vadd.f32 %v2564, %v2625
    %v2627 = vpop.f32.mrf.mxu0
    %v2628 = vpop.f32.mrf.mxu0
    %v2629 = vpop.f32.mrf.mxu0
    %2630 = vdwg.mxu0
    %v2631 = vmax.f32 %v2618, 0.0
    %v2632 = vmax.f32 %v2621, 0.0
    %v2633 = vmax.f32 %v2626, 0.0
    %v2634 = vpack.c.bf16 %v2632, %v2631
    %v2635 = vpack.c.bf16 %v2633, %v2633
    %v2636 = vld [vmem:[%s9] sm:$0xf]
    %v2637 = vld [vmem:[%s9 + $0x4] sm:$0xf]
    %v2638 = vld [vmem:[%s9 + $0x8] sm:$0xf]
    %v2639 = vld [vmem:[%s9 + $0xc] sm:$0xf]
    %v2640 = vld [vmem:[%s9 + $0x10] sm:$0xf]
    %v2641 = vld [vmem:[%s9 + $0x14] sm:$0xf]
    %v2642 = vld [vmem:[%s9 + $0x18] sm:$0xf]
    %v2643 = vld [vmem:[%s9 + $0x1c] sm:$0xf]
    %v2644 = vlaneseq
    %v2645 = vshrl.u32 %v2644, 7
    %v2646 = vsub.s32 7, %v2645
    %v2647 = vrot.slane %v449, %v2646
    %v2656 = vunpack.c.l.b16 %v2636
    %v2657 = vunpack.c.l.b16 %v2637
    %v2658 = vunpack.c.l.b16 %v2638
    %v2659 = vunpack.c.l.b16 %v2639
    %v2660 = vunpack.c.l.b16 %v2640
    %v2661 = vunpack.c.l.b16 %v2641
    %v2662 = vunpack.c.l.b16 %v2642
    %v2663 = vunpack.c.l.b16 %v2643
    %v2664 = vpack.c.b16 %v2657, %v2656
    %v2665 = vpack.c.b16 %v2659, %v2658
    %v2666 = vpack.c.b16 %v2661, %v2660
    %v2667 = vpack.c.b16 %v2663, %v2662
    %vm2672 = vcmask 523264
    %v2674 = vsel %vm2672, %v2634, 0
    %v2677 = vsel %vm2672, %v2635, 0
    %2679 = vmatprep.subr.bf16.mxu0 0
    %2680 = vmatpush1.bf16.msra.mxu0 0
    %2681 = vmatprep.subr.bf16.mxu0 0
    %2682 = vmatpush1.bf16.msra.mxu0 0
    %2683 = vmatprep.subr.bf16.mxu0 0
    %2684 = vmatpush1.bf16.msra.mxu0 0
    %2685 = vmatprep.subr.bf16.mxu0 0
    %2686 = vmatpush1.bf16.msra.mxu0 0
    %2687 = vmatprep.subr.bf16.mxu0 0
    %2688 = vmatpush1.bf16.msra.mxu0 %v2667
    %2689 = vmatprep.subr.bf16.mxu0 0
    %2690 = vmatpush1.bf16.msra.mxu0 %v2666
    %2691 = vmatprep.subr.bf16.mxu0 0
    %2692 = vmatpush1.bf16.msra.mxu0 %v2665
    %2693 = vmatprep.subr.bf16.mxu0 0
    %2694 = vmatpush1.bf16.msra.mxu0 %v2664
    %2695 = vmatprep.subr.bf16.mxu0 0
    %2696 = vmatpush2.bf16.msra.mxu0 0
    %2697 = vmatprep.subr.bf16.mxu0 0
    %2698 = vmatpush2.bf16.msra.mxu0 0
    %2699 = vmatprep.subr.bf16.mxu0 0
    %2700 = vmatpush2.bf16.msra.mxu0 0
    %2701 = vmatprep.subr.bf16.mxu0 0
    %2702 = vmatpush2.bf16.msra.mxu0 0
    %2703 = vmatprep.subr.bf16.mxu0 0
    %2704 = vmatpush2.bf16.msra.mxu0 0
    %2705 = vmatprep.subr.bf16.mxu0 0
    %2706 = vmatpush2.bf16.msra.mxu0 0
    %2707 = vmatprep.subr.bf16.mxu0 0
    %2708 = vmatpush2.bf16.msra.mxu0 0
    %2709 = vmatprep.subr.bf16.mxu0 0
    %2710 = vmatpush2.bf16.msra.mxu0 0
    %2711 = vmatprep.mubr.bf16.mxu0 0
    %2712 = vmatmul.mubr.bf16.gmra.mxu0 %v2674
    %v2713 = vpop.f32.mrf.mxu0
    %v2714 = vadd.f32 %v2647, %v2713
    %v2715 = vpop.f32.mrf.mxu0
    %v2716 = vpop.f32.mrf.mxu0
    %v2717 = vadd.f32 %v2647, %v2716
    %v2718 = vpop.f32.mrf.mxu0
    %2719 = vmatprep.mubr.bf16.mxu0 0
    %2720 = vmatmul.mubr.bf16.gmra.mxu0 %v2677
    %v2721 = vpop.f32.mrf.mxu0
    %v2722 = vadd.f32 %v2647, %v2721
    %v2723 = vpop.f32.mrf.mxu0
    %v2724 = vpop.f32.mrf.mxu0
    %v2725 = vpop.f32.mrf.mxu0
    %2726 = vdwg.mxu0
    %v2730 = vcombine.high %v2714, %v2714
    %v2731 = vcombine.high %v2717, %v2717
    %v2732 = vcombine.high %v2722, %v2722
    %v2736 = vadd.f32 %v2537, %v2714
    %v2737 = vadd.f32 %v2538, %v2730
    %v2738 = vadd.f32 %v2539, %v2717
    %v2739 = vadd.f32 %v2540, %v2731
    %v2740 = vadd.f32 %v2541, %v2722
    %v2741 = vadd.f32 %v2542, %v2732
    %v2748 = vcombine.low %v2736, %v2737
    %v2749 = vcombine.low %v2738, %v2739
    %v2750 = vcombine.low %v2740, %v2741
    %v2754 = vsel %vm478, %v2748, 0.0
    %2755 = vadd.xlane.f32.xlu0 %v2754
    %v2756 = vpop.xlane.xlu0 %2755
    %v2757 = vsel %vm478, %v2749, 0.0
    %2758 = vadd.xlane.f32.xlu0 %v2757
    %v2759 = vpop.xlane.xlu0 %2758
    %v2760 = vsel %vm478, %v2750, 0.0
    %2761 = vadd.xlane.f32.xlu0 %v2760
    %v2762 = vpop.xlane.xlu0 %2761
    %v2763 = vmul.f32 %v2756, %v2363
    %v2764 = vmul.f32 %v2759, %v2363
    %v2765 = vmul.f32 %v2762, %v2363
    %v2770 = vunpack.c.l.s4 839922192
    %v2771 = vunpack.c.0.s8 %v2770
    %v2772 = vlaneseq
    %v2773 = vshrl.u32 %v2772, 7
    %v2774 = vsub.s32 %v2771, %v2773
    %v2775 = vrot.slane %v2763, %v2774
    %v2777 = vunpack.c.l.s4 1985246804
    %v2778 = vunpack.c.0.s8 %v2777
    %v2779 = vlaneseq
    %v2780 = vshrl.u32 %v2779, 7
    %v2781 = vsub.s32 %v2778, %v2780
    %v2782 = vrot.slane %v2763, %v2781
    %v2784 = vunpack.c.l.s4 839922192
    %v2785 = vunpack.c.0.s8 %v2784
    %v2786 = vlaneseq
    %v2787 = vshrl.u32 %v2786, 7
    %v2788 = vsub.s32 %v2785, %v2787
    %v2789 = vrot.slane %v2764, %v2788
    %v2791 = vunpack.c.l.s4 1985246804
    %v2792 = vunpack.c.0.s8 %v2791
    %v2793 = vlaneseq
    %v2794 = vshrl.u32 %v2793, 7
    %v2795 = vsub.s32 %v2792, %v2794
    %v2796 = vrot.slane %v2764, %v2795
    %v2798 = vunpack.c.l.s4 839922192
    %v2799 = vunpack.c.0.s8 %v2798
    %v2800 = vlaneseq
    %v2801 = vshrl.u32 %v2800, 7
    %v2802 = vsub.s32 %v2799, %v2801
    %v2803 = vrot.slane %v2765, %v2802
    %v2805 = vunpack.c.l.s4 1985246804
    %v2806 = vunpack.c.0.s8 %v2805
    %v2807 = vlaneseq
    %v2808 = vshrl.u32 %v2807, 7
    %v2809 = vsub.s32 %v2806, %v2808
    %v2810 = vrot.slane %v2765, %v2809
    %v2817 = vsub.f32 %v2736, %v2775
    %v2818 = vsub.f32 %v2737, %v2782
    %v2819 = vsub.f32 %v2738, %v2789
    %v2820 = vsub.f32 %v2739, %v2796
    %v2821 = vsub.f32 %v2740, %v2803
    %v2822 = vsub.f32 %v2741, %v2810
    %v2823 = vmul.f32 %v2817, %v2817
    %v2824 = vmul.f32 %v2818, %v2818
    %v2825 = vmul.f32 %v2819, %v2819
    %v2826 = vmul.f32 %v2820, %v2820
    %v2827 = vmul.f32 %v2821, %v2821
    %v2828 = vmul.f32 %v2822, %v2822
    %v2835 = vcombine.low %v2823, %v2824
    %v2836 = vcombine.low %v2825, %v2826
    %v2837 = vcombine.low %v2827, %v2828
    %v2841 = vsel %vm478, %v2835, 0.0
    %2842 = vadd.xlane.f32.xlu0 %v2841
    %v2843 = vpop.xlane.xlu0 %2842
    %v2844 = vsel %vm478, %v2836, 0.0
    %2845 = vadd.xlane.f32.xlu0 %v2844
    %v2846 = vpop.xlane.xlu0 %2845
    %v2847 = vsel %vm478, %v2837, 0.0
    %2848 = vadd.xlane.f32.xlu0 %v2847
    %v2849 = vpop.xlane.xlu0 %2848
    %v2850 = vmul.f32 %v2843, %v2363
    %v2851 = vmul.f32 %v2846, %v2363
    %v2852 = vmul.f32 %v2849, %v2363
    %v2853 = vadd.f32 %v2850, 1e-05
    %v2854 = vadd.f32 %v2851, 1e-05
    %v2855 = vadd.f32 %v2852, 1e-05
    %v2856 = vrsqrt.pop %v2853
    %v2857 = vrsqrt.pop %v2854
    %v2858 = vrsqrt.pop %v2855
    %v2863 = vunpack.c.l.s4 839922192
    %v2864 = vunpack.c.0.s8 %v2863
    %v2865 = vlaneseq
    %v2866 = vshrl.u32 %v2865, 7
    %v2867 = vsub.s32 %v2864, %v2866
    %v2868 = vrot.slane %v2856, %v2867
    %v2870 = vunpack.c.l.s4 1985246804
    %v2871 = vunpack.c.0.s8 %v2870
    %v2872 = vlaneseq
    %v2873 = vshrl.u32 %v2872, 7
    %v2874 = vsub.s32 %v2871, %v2873
    %v2875 = vrot.slane %v2856, %v2874
    %v2877 = vunpack.c.l.s4 839922192
    %v2878 = vunpack.c.0.s8 %v2877
    %v2879 = vlaneseq
    %v2880 = vshrl.u32 %v2879, 7
    %v2881 = vsub.s32 %v2878, %v2880
    %v2882 = vrot.slane %v2857, %v2881
    %v2884 = vunpack.c.l.s4 1985246804
    %v2885 = vunpack.c.0.s8 %v2884
    %v2886 = vlaneseq
    %v2887 = vshrl.u32 %v2886, 7
    %v2888 = vsub.s32 %v2885, %v2887
    %v2889 = vrot.slane %v2857, %v2888
    %v2891 = vunpack.c.l.s4 839922192
    %v2892 = vunpack.c.0.s8 %v2891
    %v2893 = vlaneseq
    %v2894 = vshrl.u32 %v2893, 7
    %v2895 = vsub.s32 %v2892, %v2894
    %v2896 = vrot.slane %v2858, %v2895
    %v2898 = vunpack.c.l.s4 1985246804
    %v2899 = vunpack.c.0.s8 %v2898
    %v2900 = vlaneseq
    %v2901 = vshrl.u32 %v2900, 7
    %v2902 = vsub.s32 %v2899, %v2901
    %v2903 = vrot.slane %v2858, %v2902
    %v2910 = vmul.f32 %v2817, %v2868
    %v2911 = vmul.f32 %v2818, %v2875
    %v2912 = vmul.f32 %v2819, %v2882
    %v2913 = vmul.f32 %v2820, %v2889
    %v2914 = vmul.f32 %v2821, %v2896
    %v2915 = vmul.f32 %v2822, %v2903
    %v2916 = vlaneseq
    %v2917 = vshrl.u32 %v2916, 7
    %v2918 = vsub.s32 5, %v2917
    %v2919 = vrot.slane %v449, %v2918
    %v2921 = vcombine.high %v2919, %v2919
    %v2923 = vmul.f32 %v2910, %v2919
    %v2924 = vmul.f32 %v2911, %v2921
    %v2925 = vmul.f32 %v2912, %v2919
    %v2926 = vmul.f32 %v2913, %v2921
    %v2927 = vmul.f32 %v2914, %v2919
    %v2928 = vmul.f32 %v2915, %v2921
    %v2929 = vlaneseq
    %v2930 = vshrl.u32 %v2929, 7
    %v2931 = vsub.s32 6, %v2930
    %v2932 = vrot.slane %v449, %v2931
    %v2934 = vcombine.high %v2932, %v2932
    %v2936 = vadd.f32 %v2923, %v2932
    %v2937 = vadd.f32 %v2924, %v2934
    %v2938 = vadd.f32 %v2925, %v2932
    %v2939 = vadd.f32 %v2926, %v2934
    %v2940 = vadd.f32 %v2927, %v2932
    %v2941 = vadd.f32 %v2928, %v2934
    %s2942 = scalar_lea.vmem %s11, 8
    %v2943 = vld [vmem:[%s2942] sm:$0xff]
    %v2950 = vcombine.low %v2936, %v2937
    %v2951 = vcombine.low %v2938, %v2939
    %v2952 = vcombine.low %v2940, %v2941
    %v2956 = vpack.c.bf16 %v2951, %v2950
    %v2957 = vpack.c.bf16 %v2952, %v2952
    %s2958 = scalar_lea.vmem %s6, 16
    %v2959 = vld [vmem:[%s2958] sm:$0xf]
    %v2960 = vld [vmem:[%s2958 + $0x4] sm:$0xf]
    %v2961 = vld [vmem:[%s2958 + $0x8] sm:$0xf]
    %v2962 = vld [vmem:[%s2958 + $0xc] sm:$0xf]
    %v2963 = vlaneseq
    %v2964 = vshrl.u32 %v2963, 7
    %v2965 = vsub.s32 0, %v2964
    %v2966 = vrot.slane %v2943, %v2965
    %v2971 = vunpack.c.l.b16 %v2959
    %v2972 = vunpack.c.l.b16 %v2960
    %v2973 = vunpack.c.l.b16 %v2961
    %v2974 = vunpack.c.l.b16 %v2962
    %v2975 = vpack.c.b16 %v2972, %v2971
    %v2976 = vpack.c.b16 %v2974, %v2973
    %v2980 = vsel %vm478, %v2956, 0
    %v2983 = vsel %vm478, %v2957, 0
    %2985 = vmatprep.subr.bf16.mxu0 0
    %2986 = vmatpush1.bf16.msra.mxu0 0
    %2987 = vmatprep.subr.bf16.mxu0 0
    %2988 = vmatpush1.bf16.msra.mxu0 0
    %2989 = vmatprep.subr.bf16.mxu0 0
    %2990 = vmatpush1.bf16.msra.mxu0 0
    %2991 = vmatprep.subr.bf16.mxu0 0
    %2992 = vmatpush1.bf16.msra.mxu0 0
    %2993 = vmatprep.subr.bf16.mxu0 0
    %2994 = vmatpush1.bf16.msra.mxu0 0
    %2995 = vmatprep.subr.bf16.mxu0 0
    %2996 = vmatpush1.bf16.msra.mxu0 0
    %2997 = vmatprep.subr.bf16.mxu0 0
    %2998 = vmatpush1.bf16.msra.mxu0 %v2976
    %2999 = vmatprep.subr.bf16.mxu0 0
    %3000 = vmatpush1.bf16.msra.mxu0 %v2975
    %3001 = vmatprep.subr.bf16.mxu0 0
    %3002 = vmatpush2.bf16.msra.mxu0 0
    %3003 = vmatprep.subr.bf16.mxu0 0
    %3004 = vmatpush2.bf16.msra.mxu0 0
    %3005 = vmatprep.subr.bf16.mxu0 0
    %3006 = vmatpush2.bf16.msra.mxu0 0
    %3007 = vmatprep.subr.bf16.mxu0 0
    %3008 = vmatpush2.bf16.msra.mxu0 0
    %3009 = vmatprep.subr.bf16.mxu0 0
    %3010 = vmatpush2.bf16.msra.mxu0 0
    %3011 = vmatprep.subr.bf16.mxu0 0
    %3012 = vmatpush2.bf16.msra.mxu0 0
    %3013 = vmatprep.subr.bf16.mxu0 0
    %3014 = vmatpush2.bf16.msra.mxu0 0
    %3015 = vmatprep.subr.bf16.mxu0 0
    %3016 = vmatpush2.bf16.msra.mxu0 0
    %3017 = vmatprep.mubr.bf16.mxu0 0
    %3018 = vmatmul.mubr.bf16.gmra.mxu0 %v2980
    %v3019 = vpop.f32.mrf.mxu0
    %v3020 = vadd.f32 %v2966, %v3019
    %v3021 = vpop.f32.mrf.mxu0
    %v3022 = vpop.f32.mrf.mxu0
    %v3023 = vadd.f32 %v2966, %v3022
    %v3024 = vpop.f32.mrf.mxu0
    %3025 = vmatprep.mubr.bf16.mxu0 0
    %3026 = vmatmul.mubr.bf16.gmra.mxu0 %v2983
    %v3027 = vpop.f32.mrf.mxu0
    %v3028 = vadd.f32 %v2966, %v3027
    %v3029 = vpop.f32.mrf.mxu0
    %v3030 = vpop.f32.mrf.mxu0
    %v3031 = vpop.f32.mrf.mxu0
    %3032 = vdwg.mxu0
    %v3036 = vcombine.high %v3020, %v3020
    %v3037 = vcombine.high %v3023, %v3023
    %v3038 = vcombine.high %v3028, %v3028
    %v3039 = vcombine.low %v3020, %v3036
    %3040 = vrot.lane.b32.xlu0 %v3039, 96
    %v3041 = vpop.permute.xlu0 %3040
    %3042 = vrot.lane.b32.xlu0 %v3023, 96
    %v3043 = vpop.permute.xlu0 %3042
    %v3044 = vsel %vm544, %v3039, 0
    %v3046 = vsel %vm544, %v3023, 0
    %v3048 = vsel %vm544, %v3041, 0
    %v3050 = vsel %vm544, %v3043, 0
    %3052 = vmatprep.subr.mxu0 0.0
    %3053 = vmatpush1.xpose.msra.mxu0 0.0
    %3054 = vmatprep.subr.mxu0 0.0
    %3055 = vmatpush1.xpose.msra.mxu0 0.0
    %3056 = vmatprep.subr.mxu0 0.0
    %3057 = vmatpush1.xpose.msra.mxu0 0.0
    %3058 = vmatprep.subr.mxu0 0.0
    %3059 = vmatpush1.xpose.msra.mxu0 0.0
    %3060 = vmatprep.subr.mxu0 0.0
    %3061 = vmatpush1.xpose.msra.mxu0 0.0
    %3062 = vmatprep.subr.mxu0 0.0
    %3063 = vmatpush1.xpose.msra.mxu0 0.0
    %3064 = vmatprep.subr.mxu0 0.0
    %3065 = vmatpush1.xpose.msra.mxu0 0.0
    %3066 = vmatprep.subr.mxu0 0.0
    %3067 = vmatpush1.xpose.msra.mxu0 0.0
    %3068 = vmatprep.subr.mxu0 0.0
    %3069 = vmatpush1.xpose.msra.mxu0 0.0
    %3070 = vmatprep.subr.mxu0 0.0
    %3071 = vmatpush1.xpose.msra.mxu0 0.0
    %3072 = vmatprep.subr.mxu0 0.0
    %3073 = vmatpush1.xpose.msra.mxu0 0.0
    %3074 = vmatprep.subr.mxu0 0.0
    %3075 = vmatpush1.xpose.msra.mxu0 0.0
    %3076 = vmatprep.subr.mxu0 0.0
    %3077 = vmatpush1.xpose.msra.mxu0 0.0
    %3078 = vmatprep.subr.mxu0 0.0
    %3079 = vmatpush1.xpose.msra.mxu0 0.0
    %3080 = vmatprep.subr.mxu0 0.0
    %3081 = vmatpush1.xpose.msra.mxu0 %v3050
    %3082 = vmatprep.subr.mxu0 0.0
    %3083 = vmatpush1.xpose.msra.mxu0 %v3048
    %3084 = vmatprep.subr.mxu0 0.0
    %3085 = vmatpush2.xpose.msra.mxu0 0.0
    %3086 = vmatprep.subr.mxu0 0.0
    %3087 = vmatpush2.xpose.msra.mxu0 0.0
    %3088 = vmatprep.subr.mxu0 0.0
    %3089 = vmatpush2.xpose.msra.mxu0 0.0
    %3090 = vmatprep.subr.mxu0 0.0
    %3091 = vmatpush2.xpose.msra.mxu0 0.0
    %3092 = vmatprep.subr.mxu0 0.0
    %3093 = vmatpush2.xpose.msra.mxu0 0.0
    %3094 = vmatprep.subr.mxu0 0.0
    %3095 = vmatpush2.xpose.msra.mxu0 0.0
    %3096 = vmatprep.subr.mxu0 0.0
    %3097 = vmatpush2.xpose.msra.mxu0 0.0
    %3098 = vmatprep.subr.mxu0 0.0
    %3099 = vmatpush2.xpose.msra.mxu0 0.0
    %3100 = vmatprep.subr.mxu0 0.0
    %3101 = vmatpush2.xpose.msra.mxu0 0.0
    %3102 = vmatprep.subr.mxu0 0.0
    %3103 = vmatpush2.xpose.msra.mxu0 0.0
    %3104 = vmatprep.subr.mxu0 0.0
    %3105 = vmatpush2.xpose.msra.mxu0 0.0
    %3106 = vmatprep.subr.mxu0 0.0
    %3107 = vmatpush2.xpose.msra.mxu0 0.0
    %3108 = vmatprep.subr.mxu0 0.0
    %3109 = vmatpush2.xpose.msra.mxu0 0.0
    %3110 = vmatprep.subr.mxu0 0.0
    %3111 = vmatpush2.xpose.msra.mxu0 0.0
    %3112 = vmatprep.subr.mxu0 0.0
    %3113 = vmatpush2.xpose.msra.mxu0 0.0
    %3114 = vmatprep.subr.mxu0 0.0
    %3115 = vmatpush2.xpose.msra.mxu0 0.0
    %3116 = vmatprep.mubr.f32.mxu0 0.0
    %3117 = vmatmul.mubr.f32.gmra.mxu0 %v3044
    %v3118 = vpop.f32.mrf.mxu0
    %v3119 = vadd.f32 0.0, %v3118
    %v3120 = vpop.f32.mrf.mxu0
    %3121 = vmatprep.mubr.f32.mxu0 0.0
    %3122 = vmatmul.mubr.f32.gmra.mxu0 %v3046
    %v3123 = vpop.f32.mrf.mxu0
    %v3124 = vadd.f32 0.0, %v3123
    %v3125 = vpop.f32.mrf.mxu0
    %3126 = vdwg.mxu0
    %v3127 = vcombine.low %v3037, %v3028
    %3128 = vrot.lane.b32.xlu0 %v3127, 96
    %v3129 = vpop.permute.xlu0 %3128
    %3130 = vrot.lane.b32.xlu0 %v3038, 96
    %v3131 = vpop.permute.xlu0 %3130
    %v3132 = vsel %vm544, %v3127, 0
    %v3134 = vsel %vm544, %v3038, 0
    %v3136 = vsel %vm544, %v3129, 0
    %v3138 = vsel %vm544, %v3131, 0
    %3140 = vmatprep.subr.mxu0 0.0
    %3141 = vmatpush1.xpose.msra.mxu0 0.0
    %3142 = vmatprep.subr.mxu0 0.0
    %3143 = vmatpush1.xpose.msra.mxu0 0.0
    %3144 = vmatprep.subr.mxu0 0.0
    %3145 = vmatpush1.xpose.msra.mxu0 0.0
    %3146 = vmatprep.subr.mxu0 0.0
    %3147 = vmatpush1.xpose.msra.mxu0 0.0
    %3148 = vmatprep.subr.mxu0 0.0
    %3149 = vmatpush1.xpose.msra.mxu0 0.0
    %3150 = vmatprep.subr.mxu0 0.0
    %3151 = vmatpush1.xpose.msra.mxu0 0.0
    %3152 = vmatprep.subr.mxu0 0.0
    %3153 = vmatpush1.xpose.msra.mxu0 0.0
    %3154 = vmatprep.subr.mxu0 0.0
    %3155 = vmatpush1.xpose.msra.mxu0 0.0
    %3156 = vmatprep.subr.mxu0 0.0
    %3157 = vmatpush1.xpose.msra.mxu0 0.0
    %3158 = vmatprep.subr.mxu0 0.0
    %3159 = vmatpush1.xpose.msra.mxu0 0.0
    %3160 = vmatprep.subr.mxu0 0.0
    %3161 = vmatpush1.xpose.msra.mxu0 0.0
    %3162 = vmatprep.subr.mxu0 0.0
    %3163 = vmatpush1.xpose.msra.mxu0 0.0
    %3164 = vmatprep.subr.mxu0 0.0
    %3165 = vmatpush1.xpose.msra.mxu0 0.0
    %3166 = vmatprep.subr.mxu0 0.0
    %3167 = vmatpush1.xpose.msra.mxu0 0.0
    %3168 = vmatprep.subr.mxu0 0.0
    %3169 = vmatpush1.xpose.msra.mxu0 %v3138
    %3170 = vmatprep.subr.mxu0 0.0
    %3171 = vmatpush1.xpose.msra.mxu0 %v3136
    %3172 = vmatprep.subr.mxu0 0.0
    %3173 = vmatpush2.xpose.msra.mxu0 0.0
    %3174 = vmatprep.subr.mxu0 0.0
    %3175 = vmatpush2.xpose.msra.mxu0 0.0
    %3176 = vmatprep.subr.mxu0 0.0
    %3177 = vmatpush2.xpose.msra.mxu0 0.0
    %3178 = vmatprep.subr.mxu0 0.0
    %3179 = vmatpush2.xpose.msra.mxu0 0.0
    %3180 = vmatprep.subr.mxu0 0.0
    %3181 = vmatpush2.xpose.msra.mxu0 0.0
    %3182 = vmatprep.subr.mxu0 0.0
    %3183 = vmatpush2.xpose.msra.mxu0 0.0
    %3184 = vmatprep.subr.mxu0 0.0
    %3185 = vmatpush2.xpose.msra.mxu0 0.0
    %3186 = vmatprep.subr.mxu0 0.0
    %3187 = vmatpush2.xpose.msra.mxu0 0.0
    %3188 = vmatprep.subr.mxu0 0.0
    %3189 = vmatpush2.xpose.msra.mxu0 0.0
    %3190 = vmatprep.subr.mxu0 0.0
    %3191 = vmatpush2.xpose.msra.mxu0 0.0
    %3192 = vmatprep.subr.mxu0 0.0
    %3193 = vmatpush2.xpose.msra.mxu0 0.0
    %3194 = vmatprep.subr.mxu0 0.0
    %3195 = vmatpush2.xpose.msra.mxu0 0.0
    %3196 = vmatprep.subr.mxu0 0.0
    %3197 = vmatpush2.xpose.msra.mxu0 0.0
    %3198 = vmatprep.subr.mxu0 0.0
    %3199 = vmatpush2.xpose.msra.mxu0 0.0
    %3200 = vmatprep.subr.mxu0 0.0
    %3201 = vmatpush2.xpose.msra.mxu0 0.0
    %3202 = vmatprep.subr.mxu0 0.0
    %3203 = vmatpush2.xpose.msra.mxu0 0.0
    %3204 = vmatprep.mubr.f32.mxu0 0.0
    %3205 = vmatmul.mubr.f32.gmra.mxu0 %v3132
    %v3206 = vpop.f32.mrf.mxu0
    %v3207 = vadd.f32 0.0, %v3206
    %v3208 = vpop.f32.mrf.mxu0
    %3209 = vmatprep.mubr.f32.mxu0 0.0
    %3210 = vmatmul.mubr.f32.gmra.mxu0 %v3134
    %v3211 = vpop.f32.mrf.mxu0
    %v3212 = vadd.f32 0.0, %v3211
    %v3213 = vpop.f32.mrf.mxu0
    %3214 = vdwg.mxu0
    %v3215 = vmul.f32 %v3119, 0.35355338
    %v3216 = vmul.f32 %v3124, 0.35355338
    %v3217 = vmul.f32 %v3207, 0.35355338
    %v3218 = vmul.f32 %v3212, 0.35355338
    %v3219 = vadd.f32 %v3215, %v445
    %v3220 = vadd.f32 %v3216, %v446
    %v3221 = vadd.f32 %v3217, %v447
    %v3222 = vadd.f32 %v3218, %v448
    %v3223 = vsel %vm724, %v3219, -inf
    %3224 = vmax.xlane.f32.xlu0 %v3223
    %v3225 = vpop.xlane.xlu0 %3224
    %v3226 = vsel %vm728, %v3220, -inf
    %3227 = vmax.xlane.f32.xlu0 %v3226
    %v3228 = vpop.xlane.xlu0 %3227
    %v3229 = vsel %vm724, %v3221, -inf
    %3230 = vmax.xlane.f32.xlu0 %v3229
    %v3231 = vpop.xlane.xlu0 %3230
    %v3232 = vsel %vm728, %v3222, -inf
    %3233 = vmax.xlane.f32.xlu0 %v3232
    %v3234 = vpop.xlane.xlu0 %3233
    %v3235 = vsub.f32 %v3219, %v3225
    %v3236 = vsub.f32 %v3220, %v3228
    %v3237 = vsub.f32 %v3221, %v3231
    %v3238 = vsub.f32 %v3222, %v3234
    %v3239 = vmul.f32 %v3235, 1.442695
    %v3240 = vpow.pop %v3239
    %v3241 = vmul.f32 %v3236, 1.442695
    %v3242 = vpow.pop %v3241
    %v3243 = vmul.f32 %v3237, 1.442695
    %v3244 = vpow.pop %v3243
    %v3245 = vmul.f32 %v3238, 1.442695
    %v3246 = vpow.pop %v3245
    %v3247 = vsel %vm724, %v3240, 0.0
    %3248 = vadd.xlane.f32.xlu0 %v3247
    %v3249 = vpop.xlane.xlu0 %3248
    %v3250 = vsel %vm728, %v3242, 0.0
    %3251 = vadd.xlane.f32.xlu0 %v3250
    %v3252 = vpop.xlane.xlu0 %3251
    %v3253 = vsel %vm724, %v3244, 0.0
    %3254 = vadd.xlane.f32.xlu0 %v3253
    %v3255 = vpop.xlane.xlu0 %3254
    %v3256 = vsel %vm728, %v3246, 0.0
    %3257 = vadd.xlane.f32.xlu0 %v3256
    %v3258 = vpop.xlane.xlu0 %3257
    %v3259 = vrcp.pop %v3249
    %v3260 = vrcp.pop %v3252
    %v3261 = vrcp.pop %v3255
    %v3262 = vrcp.pop %v3258
    %v3263 = vmul.f32 %v3240, %v3259
    %v3264 = vmul.f32 %v3242, %v3260
    %v3265 = vmul.f32 %v3244, %v3261
    %v3266 = vmul.f32 %v3246, %v3262
    %3267 = vrot.lane.b32.xlu0 %v3039, 64
    %v3268 = vpop.permute.xlu0 %3267
    %3269 = vrot.lane.b32.xlu0 %v3023, 64
    %v3270 = vpop.permute.xlu0 %3269
    %v3273 = vsel %vm724, %v3263, 0
    %v3276 = vsel %vm724, %v3264, 0
    %v3278 = vsel %vm781, %v3270, 0
    %3280 = vmatprep.subr.mxu0 0.0
    %3281 = vmatpush1.msra.mxu0 0.0
    %3282 = vmatprep.subr.mxu0 0.0
    %3283 = vmatpush1.msra.mxu0 0.0
    %3284 = vmatprep.subr.mxu0 0.0
    %3285 = vmatpush1.msra.mxu0 0.0
    %3286 = vmatprep.subr.mxu0 0.0
    %3287 = vmatpush1.msra.mxu0 0.0
    %3288 = vmatprep.subr.mxu0 0.0
    %3289 = vmatpush1.msra.mxu0 0.0
    %3290 = vmatprep.subr.mxu0 0.0
    %3291 = vmatpush1.msra.mxu0 0.0
    %3292 = vmatprep.subr.mxu0 0.0
    %3293 = vmatpush1.msra.mxu0 0.0
    %3294 = vmatprep.subr.mxu0 0.0
    %3295 = vmatpush1.msra.mxu0 0.0
    %3296 = vmatprep.subr.mxu0 0.0
    %3297 = vmatpush1.msra.mxu0 0.0
    %3298 = vmatprep.subr.mxu0 0.0
    %3299 = vmatpush1.msra.mxu0 0.0
    %3300 = vmatprep.subr.mxu0 0.0
    %3301 = vmatpush1.msra.mxu0 0.0
    %3302 = vmatprep.subr.mxu0 0.0
    %3303 = vmatpush1.msra.mxu0 0.0
    %3304 = vmatprep.subr.mxu0 0.0
    %3305 = vmatpush1.msra.mxu0 0.0
    %3306 = vmatprep.subr.mxu0 0.0
    %3307 = vmatpush1.msra.mxu0 0.0
    %3308 = vmatprep.subr.mxu0 0.0
    %3309 = vmatpush1.msra.mxu0 %v3278
    %3310 = vmatprep.subr.mxu0 0.0
    %3311 = vmatpush1.msra.mxu0 %v3268
    %3312 = vmatprep.subr.mxu0 0.0
    %3313 = vmatpush2.msra.mxu0 0.0
    %3314 = vmatprep.subr.mxu0 0.0
    %3315 = vmatpush2.msra.mxu0 0.0
    %3316 = vmatprep.subr.mxu0 0.0
    %3317 = vmatpush2.msra.mxu0 0.0
    %3318 = vmatprep.subr.mxu0 0.0
    %3319 = vmatpush2.msra.mxu0 0.0
    %3320 = vmatprep.subr.mxu0 0.0
    %3321 = vmatpush2.msra.mxu0 0.0
    %3322 = vmatprep.subr.mxu0 0.0
    %3323 = vmatpush2.msra.mxu0 0.0
    %3324 = vmatprep.subr.mxu0 0.0
    %3325 = vmatpush2.msra.mxu0 0.0
    %3326 = vmatprep.subr.mxu0 0.0
    %3327 = vmatpush2.msra.mxu0 0.0
    %3328 = vmatprep.subr.mxu0 0.0
    %3329 = vmatpush2.msra.mxu0 0.0
    %3330 = vmatprep.subr.mxu0 0.0
    %3331 = vmatpush2.msra.mxu0 0.0
    %3332 = vmatprep.subr.mxu0 0.0
    %3333 = vmatpush2.msra.mxu0 0.0
    %3334 = vmatprep.subr.mxu0 0.0
    %3335 = vmatpush2.msra.mxu0 0.0
    %3336 = vmatprep.subr.mxu0 0.0
    %3337 = vmatpush2.msra.mxu0 0.0
    %3338 = vmatprep.subr.mxu0 0.0
    %3339 = vmatpush2.msra.mxu0 0.0
    %3340 = vmatprep.subr.mxu0 0.0
    %3341 = vmatpush2.msra.mxu0 0.0
    %3342 = vmatprep.subr.mxu0 0.0
    %3343 = vmatpush2.msra.mxu0 0.0
    %3344 = vmatprep.mubr.f32.mxu0 0.0
    %3345 = vmatmul.mubr.f32.gmra.mxu0 %v3273
    %v3346 = vpop.f32.mrf.mxu0
    %v3347 = vadd.f32 0.0, %v3346
    %v3348 = vpop.f32.mrf.mxu0
    %3349 = vmatprep.mubr.f32.mxu0 0.0
    %3350 = vmatmul.mubr.f32.gmra.mxu0 %v3276
    %v3351 = vpop.f32.mrf.mxu0
    %v3352 = vadd.f32 0.0, %v3351
    %v3353 = vpop.f32.mrf.mxu0
    %3354 = vdwg.mxu0
    %3355 = vrot.lane.b32.xlu0 %v3127, 64
    %v3356 = vpop.permute.xlu0 %3355
    %3357 = vrot.lane.b32.xlu0 %v3038, 64
    %v3358 = vpop.permute.xlu0 %3357
    %v3361 = vsel %vm724, %v3265, 0
    %v3364 = vsel %vm724, %v3266, 0
    %v3366 = vsel %vm781, %v3358, 0
    %3368 = vmatprep.subr.mxu0 0.0
    %3369 = vmatpush1.msra.mxu0 0.0
    %3370 = vmatprep.subr.mxu0 0.0
    %3371 = vmatpush1.msra.mxu0 0.0
    %3372 = vmatprep.subr.mxu0 0.0
    %3373 = vmatpush1.msra.mxu0 0.0
    %3374 = vmatprep.subr.mxu0 0.0
    %3375 = vmatpush1.msra.mxu0 0.0
    %3376 = vmatprep.subr.mxu0 0.0
    %3377 = vmatpush1.msra.mxu0 0.0
    %3378 = vmatprep.subr.mxu0 0.0
    %3379 = vmatpush1.msra.mxu0 0.0
    %3380 = vmatprep.subr.mxu0 0.0
    %3381 = vmatpush1.msra.mxu0 0.0
    %3382 = vmatprep.subr.mxu0 0.0
    %3383 = vmatpush1.msra.mxu0 0.0
    %3384 = vmatprep.subr.mxu0 0.0
    %3385 = vmatpush1.msra.mxu0 0.0
    %3386 = vmatprep.subr.mxu0 0.0
    %3387 = vmatpush1.msra.mxu0 0.0
    %3388 = vmatprep.subr.mxu0 0.0
    %3389 = vmatpush1.msra.mxu0 0.0
    %3390 = vmatprep.subr.mxu0 0.0
    %3391 = vmatpush1.msra.mxu0 0.0
    %3392 = vmatprep.subr.mxu0 0.0
    %3393 = vmatpush1.msra.mxu0 0.0
    %3394 = vmatprep.subr.mxu0 0.0
    %3395 = vmatpush1.msra.mxu0 0.0
    %3396 = vmatprep.subr.mxu0 0.0
    %3397 = vmatpush1.msra.mxu0 %v3366
    %3398 = vmatprep.subr.mxu0 0.0
    %3399 = vmatpush1.msra.mxu0 %v3356
    %3400 = vmatprep.subr.mxu0 0.0
    %3401 = vmatpush2.msra.mxu0 0.0
    %3402 = vmatprep.subr.mxu0 0.0
    %3403 = vmatpush2.msra.mxu0 0.0
    %3404 = vmatprep.subr.mxu0 0.0
    %3405 = vmatpush2.msra.mxu0 0.0
    %3406 = vmatprep.subr.mxu0 0.0
    %3407 = vmatpush2.msra.mxu0 0.0
    %3408 = vmatprep.subr.mxu0 0.0
    %3409 = vmatpush2.msra.mxu0 0.0
    %3410 = vmatprep.subr.mxu0 0.0
    %3411 = vmatpush2.msra.mxu0 0.0
    %3412 = vmatprep.subr.mxu0 0.0
    %3413 = vmatpush2.msra.mxu0 0.0
    %3414 = vmatprep.subr.mxu0 0.0
    %3415 = vmatpush2.msra.mxu0 0.0
    %3416 = vmatprep.subr.mxu0 0.0
    %3417 = vmatpush2.msra.mxu0 0.0
    %3418 = vmatprep.subr.mxu0 0.0
    %3419 = vmatpush2.msra.mxu0 0.0
    %3420 = vmatprep.subr.mxu0 0.0
    %3421 = vmatpush2.msra.mxu0 0.0
    %3422 = vmatprep.subr.mxu0 0.0
    %3423 = vmatpush2.msra.mxu0 0.0
    %3424 = vmatprep.subr.mxu0 0.0
    %3425 = vmatpush2.msra.mxu0 0.0
    %3426 = vmatprep.subr.mxu0 0.0
    %3427 = vmatpush2.msra.mxu0 0.0
    %3428 = vmatprep.subr.mxu0 0.0
    %3429 = vmatpush2.msra.mxu0 0.0
    %3430 = vmatprep.subr.mxu0 0.0
    %3431 = vmatpush2.msra.mxu0 0.0
    %3432 = vmatprep.mubr.f32.mxu0 0.0
    %3433 = vmatmul.mubr.f32.gmra.mxu0 %v3361
    %v3434 = vpop.f32.mrf.mxu0
    %v3435 = vadd.f32 0.0, %v3434
    %v3436 = vpop.f32.mrf.mxu0
    %3437 = vmatprep.mubr.f32.mxu0 0.0
    %3438 = vmatmul.mubr.f32.gmra.mxu0 %v3364
    %v3439 = vpop.f32.mrf.mxu0
    %v3440 = vadd.f32 0.0, %v3439
    %v3441 = vpop.f32.mrf.mxu0
    %3442 = vdwg.mxu0
    %3443 = vrot.lane.b32.xlu0 %v3039, 120
    %v3444 = vpop.permute.xlu0 %3443
    %3445 = vrot.lane.b32.xlu0 %v3023, 120
    %v3446 = vpop.permute.xlu0 %3445
    %3447 = vrot.lane.b32.xlu0 %v3039, 88
    %v3448 = vpop.permute.xlu0 %3447
    %3449 = vrot.lane.b32.xlu0 %v3023, 88
    %v3450 = vpop.permute.xlu0 %3449
    %v3451 = vsel %vm544, %v3444, 0
    %v3453 = vsel %vm544, %v3446, 0
    %v3455 = vsel %vm544, %v3448, 0
    %v3457 = vsel %vm544, %v3450, 0
    %3459 = vmatprep.subr.mxu0 0.0
    %3460 = vmatpush1.xpose.msra.mxu0 0.0
    %3461 = vmatprep.subr.mxu0 0.0
    %3462 = vmatpush1.xpose.msra.mxu0 0.0
    %3463 = vmatprep.subr.mxu0 0.0
    %3464 = vmatpush1.xpose.msra.mxu0 0.0
    %3465 = vmatprep.subr.mxu0 0.0
    %3466 = vmatpush1.xpose.msra.mxu0 0.0
    %3467 = vmatprep.subr.mxu0 0.0
    %3468 = vmatpush1.xpose.msra.mxu0 0.0
    %3469 = vmatprep.subr.mxu0 0.0
    %3470 = vmatpush1.xpose.msra.mxu0 0.0
    %3471 = vmatprep.subr.mxu0 0.0
    %3472 = vmatpush1.xpose.msra.mxu0 0.0
    %3473 = vmatprep.subr.mxu0 0.0
    %3474 = vmatpush1.xpose.msra.mxu0 0.0
    %3475 = vmatprep.subr.mxu0 0.0
    %3476 = vmatpush1.xpose.msra.mxu0 0.0
    %3477 = vmatprep.subr.mxu0 0.0
    %3478 = vmatpush1.xpose.msra.mxu0 0.0
    %3479 = vmatprep.subr.mxu0 0.0
    %3480 = vmatpush1.xpose.msra.mxu0 0.0
    %3481 = vmatprep.subr.mxu0 0.0
    %3482 = vmatpush1.xpose.msra.mxu0 0.0
    %3483 = vmatprep.subr.mxu0 0.0
    %3484 = vmatpush1.xpose.msra.mxu0 0.0
    %3485 = vmatprep.subr.mxu0 0.0
    %3486 = vmatpush1.xpose.msra.mxu0 0.0
    %3487 = vmatprep.subr.mxu0 0.0
    %3488 = vmatpush1.xpose.msra.mxu0 %v3457
    %3489 = vmatprep.subr.mxu0 0.0
    %3490 = vmatpush1.xpose.msra.mxu0 %v3455
    %3491 = vmatprep.subr.mxu0 0.0
    %3492 = vmatpush2.xpose.msra.mxu0 0.0
    %3493 = vmatprep.subr.mxu0 0.0
    %3494 = vmatpush2.xpose.msra.mxu0 0.0
    %3495 = vmatprep.subr.mxu0 0.0
    %3496 = vmatpush2.xpose.msra.mxu0 0.0
    %3497 = vmatprep.subr.mxu0 0.0
    %3498 = vmatpush2.xpose.msra.mxu0 0.0
    %3499 = vmatprep.subr.mxu0 0.0
    %3500 = vmatpush2.xpose.msra.mxu0 0.0
    %3501 = vmatprep.subr.mxu0 0.0
    %3502 = vmatpush2.xpose.msra.mxu0 0.0
    %3503 = vmatprep.subr.mxu0 0.0
    %3504 = vmatpush2.xpose.msra.mxu0 0.0
    %3505 = vmatprep.subr.mxu0 0.0
    %3506 = vmatpush2.xpose.msra.mxu0 0.0
    %3507 = vmatprep.subr.mxu0 0.0
    %3508 = vmatpush2.xpose.msra.mxu0 0.0
    %3509 = vmatprep.subr.mxu0 0.0
    %3510 = vmatpush2.xpose.msra.mxu0 0.0
    %3511 = vmatprep.subr.mxu0 0.0
    %3512 = vmatpush2.xpose.msra.mxu0 0.0
    %3513 = vmatprep.subr.mxu0 0.0
    %3514 = vmatpush2.xpose.msra.mxu0 0.0
    %3515 = vmatprep.subr.mxu0 0.0
    %3516 = vmatpush2.xpose.msra.mxu0 0.0
    %3517 = vmatprep.subr.mxu0 0.0
    %3518 = vmatpush2.xpose.msra.mxu0 0.0
    %3519 = vmatprep.subr.mxu0 0.0
    %3520 = vmatpush2.xpose.msra.mxu0 0.0
    %3521 = vmatprep.subr.mxu0 0.0
    %3522 = vmatpush2.xpose.msra.mxu0 0.0
    %3523 = vmatprep.mubr.f32.mxu0 0.0
    %3524 = vmatmul.mubr.f32.gmra.mxu0 %v3451
    %v3525 = vpop.f32.mrf.mxu0
    %v3526 = vadd.f32 0.0, %v3525
    %v3527 = vpop.f32.mrf.mxu0
    %3528 = vmatprep.mubr.f32.mxu0 0.0
    %3529 = vmatmul.mubr.f32.gmra.mxu0 %v3453
    %v3530 = vpop.f32.mrf.mxu0
    %v3531 = vadd.f32 0.0, %v3530
    %v3532 = vpop.f32.mrf.mxu0
    %3533 = vdwg.mxu0
    %3534 = vrot.lane.b32.xlu0 %v3127, 120
    %v3535 = vpop.permute.xlu0 %3534
    %3536 = vrot.lane.b32.xlu0 %v3038, 120
    %v3537 = vpop.permute.xlu0 %3536
    %3538 = vrot.lane.b32.xlu0 %v3127, 88
    %v3539 = vpop.permute.xlu0 %3538
    %3540 = vrot.lane.b32.xlu0 %v3038, 88
    %v3541 = vpop.permute.xlu0 %3540
    %v3542 = vsel %vm544, %v3535, 0
    %v3544 = vsel %vm544, %v3537, 0
    %v3546 = vsel %vm544, %v3539, 0
    %v3548 = vsel %vm544, %v3541, 0
    %3550 = vmatprep.subr.mxu0 0.0
    %3551 = vmatpush1.xpose.msra.mxu0 0.0
    %3552 = vmatprep.subr.mxu0 0.0
    %3553 = vmatpush1.xpose.msra.mxu0 0.0
    %3554 = vmatprep.subr.mxu0 0.0
    %3555 = vmatpush1.xpose.msra.mxu0 0.0
    %3556 = vmatprep.subr.mxu0 0.0
    %3557 = vmatpush1.xpose.msra.mxu0 0.0
    %3558 = vmatprep.subr.mxu0 0.0
    %3559 = vmatpush1.xpose.msra.mxu0 0.0
    %3560 = vmatprep.subr.mxu0 0.0
    %3561 = vmatpush1.xpose.msra.mxu0 0.0
    %3562 = vmatprep.subr.mxu0 0.0
    %3563 = vmatpush1.xpose.msra.mxu0 0.0
    %3564 = vmatprep.subr.mxu0 0.0
    %3565 = vmatpush1.xpose.msra.mxu0 0.0
    %3566 = vmatprep.subr.mxu0 0.0
    %3567 = vmatpush1.xpose.msra.mxu0 0.0
    %3568 = vmatprep.subr.mxu0 0.0
    %3569 = vmatpush1.xpose.msra.mxu0 0.0
    %3570 = vmatprep.subr.mxu0 0.0
    %3571 = vmatpush1.xpose.msra.mxu0 0.0
    %3572 = vmatprep.subr.mxu0 0.0
    %3573 = vmatpush1.xpose.msra.mxu0 0.0
    %3574 = vmatprep.subr.mxu0 0.0
    %3575 = vmatpush1.xpose.msra.mxu0 0.0
    %3576 = vmatprep.subr.mxu0 0.0
    %3577 = vmatpush1.xpose.msra.mxu0 0.0
    %3578 = vmatprep.subr.mxu0 0.0
    %3579 = vmatpush1.xpose.msra.mxu0 %v3548
    %3580 = vmatprep.subr.mxu0 0.0
    %3581 = vmatpush1.xpose.msra.mxu0 %v3546
    %3582 = vmatprep.subr.mxu0 0.0
    %3583 = vmatpush2.xpose.msra.mxu0 0.0
    %3584 = vmatprep.subr.mxu0 0.0
    %3585 = vmatpush2.xpose.msra.mxu0 0.0
    %3586 = vmatprep.subr.mxu0 0.0
    %3587 = vmatpush2.xpose.msra.mxu0 0.0
    %3588 = vmatprep.subr.mxu0 0.0
    %3589 = vmatpush2.xpose.msra.mxu0 0.0
    %3590 = vmatprep.subr.mxu0 0.0
    %3591 = vmatpush2.xpose.msra.mxu0 0.0
    %3592 = vmatprep.subr.mxu0 0.0
    %3593 = vmatpush2.xpose.msra.mxu0 0.0
    %3594 = vmatprep.subr.mxu0 0.0
    %3595 = vmatpush2.xpose.msra.mxu0 0.0
    %3596 = vmatprep.subr.mxu0 0.0
    %3597 = vmatpush2.xpose.msra.mxu0 0.0
    %3598 = vmatprep.subr.mxu0 0.0
    %3599 = vmatpush2.xpose.msra.mxu0 0.0
    %3600 = vmatprep.subr.mxu0 0.0
    %3601 = vmatpush2.xpose.msra.mxu0 0.0
    %3602 = vmatprep.subr.mxu0 0.0
    %3603 = vmatpush2.xpose.msra.mxu0 0.0
    %3604 = vmatprep.subr.mxu0 0.0
    %3605 = vmatpush2.xpose.msra.mxu0 0.0
    %3606 = vmatprep.subr.mxu0 0.0
    %3607 = vmatpush2.xpose.msra.mxu0 0.0
    %3608 = vmatprep.subr.mxu0 0.0
    %3609 = vmatpush2.xpose.msra.mxu0 0.0
    %3610 = vmatprep.subr.mxu0 0.0
    %3611 = vmatpush2.xpose.msra.mxu0 0.0
    %3612 = vmatprep.subr.mxu0 0.0
    %3613 = vmatpush2.xpose.msra.mxu0 0.0
    %3614 = vmatprep.mubr.f32.mxu0 0.0
    %3615 = vmatmul.mubr.f32.gmra.mxu0 %v3542
    %v3616 = vpop.f32.mrf.mxu0
    %v3617 = vadd.f32 0.0, %v3616
    %v3618 = vpop.f32.mrf.mxu0
    %3619 = vmatprep.mubr.f32.mxu0 0.0
    %3620 = vmatmul.mubr.f32.gmra.mxu0 %v3544
    %v3621 = vpop.f32.mrf.mxu0
    %v3622 = vadd.f32 0.0, %v3621
    %v3623 = vpop.f32.mrf.mxu0
    %3624 = vdwg.mxu0
    %v3625 = vmul.f32 %v3526, 0.35355338
    %v3626 = vmul.f32 %v3531, 0.35355338
    %v3627 = vmul.f32 %v3617, 0.35355338
    %v3628 = vmul.f32 %v3622, 0.35355338
    %v3629 = vadd.f32 %v3625, %v445
    %v3630 = vadd.f32 %v3626, %v446
    %v3631 = vadd.f32 %v3627, %v447
    %v3632 = vadd.f32 %v3628, %v448
    %v3633 = vsel %vm724, %v3629, -inf
    %3634 = vmax.xlane.f32.xlu0 %v3633
    %v3635 = vpop.xlane.xlu0 %3634
    %v3636 = vsel %vm728, %v3630, -inf
    %3637 = vmax.xlane.f32.xlu0 %v3636
    %v3638 = vpop.xlane.xlu0 %3637
    %v3639 = vsel %vm724, %v3631, -inf
    %3640 = vmax.xlane.f32.xlu0 %v3639
    %v3641 = vpop.xlane.xlu0 %3640
    %v3642 = vsel %vm728, %v3632, -inf
    %3643 = vmax.xlane.f32.xlu0 %v3642
    %v3644 = vpop.xlane.xlu0 %3643
    %v3645 = vsub.f32 %v3629, %v3635
    %v3646 = vsub.f32 %v3630, %v3638
    %v3647 = vsub.f32 %v3631, %v3641
    %v3648 = vsub.f32 %v3632, %v3644
    %v3649 = vmul.f32 %v3645, 1.442695
    %v3650 = vpow.pop %v3649
    %v3651 = vmul.f32 %v3646, 1.442695
    %v3652 = vpow.pop %v3651
    %v3653 = vmul.f32 %v3647, 1.442695
    %v3654 = vpow.pop %v3653
    %v3655 = vmul.f32 %v3648, 1.442695
    %v3656 = vpow.pop %v3655
    %v3657 = vsel %vm724, %v3650, 0.0
    %3658 = vadd.xlane.f32.xlu0 %v3657
    %v3659 = vpop.xlane.xlu0 %3658
    %v3660 = vsel %vm728, %v3652, 0.0
    %3661 = vadd.xlane.f32.xlu0 %v3660
    %v3662 = vpop.xlane.xlu0 %3661
    %v3663 = vsel %vm724, %v3654, 0.0
    %3664 = vadd.xlane.f32.xlu0 %v3663
    %v3665 = vpop.xlane.xlu0 %3664
    %v3666 = vsel %vm728, %v3656, 0.0
    %3667 = vadd.xlane.f32.xlu0 %v3666
    %v3668 = vpop.xlane.xlu0 %3667
    %v3669 = vrcp.pop %v3659
    %v3670 = vrcp.pop %v3662
    %v3671 = vrcp.pop %v3665
    %v3672 = vrcp.pop %v3668
    %v3673 = vmul.f32 %v3650, %v3669
    %v3674 = vmul.f32 %v3652, %v3670
    %v3675 = vmul.f32 %v3654, %v3671
    %v3676 = vmul.f32 %v3656, %v3672
    %3677 = vrot.lane.b32.xlu0 %v3039, 56
    %v3678 = vpop.permute.xlu0 %3677
    %3679 = vrot.lane.b32.xlu0 %v3023, 56
    %v3680 = vpop.permute.xlu0 %3679
    %v3683 = vsel %vm724, %v3673, 0
    %v3686 = vsel %vm724, %v3674, 0
    %v3688 = vsel %vm781, %v3680, 0
    %3690 = vmatprep.subr.mxu0 0.0
    %3691 = vmatpush1.msra.mxu0 0.0
    %3692 = vmatprep.subr.mxu0 0.0
    %3693 = vmatpush1.msra.mxu0 0.0
    %3694 = vmatprep.subr.mxu0 0.0
    %3695 = vmatpush1.msra.mxu0 0.0
    %3696 = vmatprep.subr.mxu0 0.0
    %3697 = vmatpush1.msra.mxu0 0.0
    %3698 = vmatprep.subr.mxu0 0.0
    %3699 = vmatpush1.msra.mxu0 0.0
    %3700 = vmatprep.subr.mxu0 0.0
    %3701 = vmatpush1.msra.mxu0 0.0
    %3702 = vmatprep.subr.mxu0 0.0
    %3703 = vmatpush1.msra.mxu0 0.0
    %3704 = vmatprep.subr.mxu0 0.0
    %3705 = vmatpush1.msra.mxu0 0.0
    %3706 = vmatprep.subr.mxu0 0.0
    %3707 = vmatpush1.msra.mxu0 0.0
    %3708 = vmatprep.subr.mxu0 0.0
    %3709 = vmatpush1.msra.mxu0 0.0
    %3710 = vmatprep.subr.mxu0 0.0
    %3711 = vmatpush1.msra.mxu0 0.0
    %3712 = vmatprep.subr.mxu0 0.0
    %3713 = vmatpush1.msra.mxu0 0.0
    %3714 = vmatprep.subr.mxu0 0.0
    %3715 = vmatpush1.msra.mxu0 0.0
    %3716 = vmatprep.subr.mxu0 0.0
    %3717 = vmatpush1.msra.mxu0 0.0
    %3718 = vmatprep.subr.mxu0 0.0
    %3719 = vmatpush1.msra.mxu0 %v3688
    %3720 = vmatprep.subr.mxu0 0.0
    %3721 = vmatpush1.msra.mxu0 %v3678
    %3722 = vmatprep.subr.mxu0 0.0
    %3723 = vmatpush2.msra.mxu0 0.0
    %3724 = vmatprep.subr.mxu0 0.0
    %3725 = vmatpush2.msra.mxu0 0.0
    %3726 = vmatprep.subr.mxu0 0.0
    %3727 = vmatpush2.msra.mxu0 0.0
    %3728 = vmatprep.subr.mxu0 0.0
    %3729 = vmatpush2.msra.mxu0 0.0
    %3730 = vmatprep.subr.mxu0 0.0
    %3731 = vmatpush2.msra.mxu0 0.0
    %3732 = vmatprep.subr.mxu0 0.0
    %3733 = vmatpush2.msra.mxu0 0.0
    %3734 = vmatprep.subr.mxu0 0.0
    %3735 = vmatpush2.msra.mxu0 0.0
    %3736 = vmatprep.subr.mxu0 0.0
    %3737 = vmatpush2.msra.mxu0 0.0
    %3738 = vmatprep.subr.mxu0 0.0
    %3739 = vmatpush2.msra.mxu0 0.0
    %3740 = vmatprep.subr.mxu0 0.0
    %3741 = vmatpush2.msra.mxu0 0.0
    %3742 = vmatprep.subr.mxu0 0.0
    %3743 = vmatpush2.msra.mxu0 0.0
    %3744 = vmatprep.subr.mxu0 0.0
    %3745 = vmatpush2.msra.mxu0 0.0
    %3746 = vmatprep.subr.mxu0 0.0
    %3747 = vmatpush2.msra.mxu0 0.0
    %3748 = vmatprep.subr.mxu0 0.0
    %3749 = vmatpush2.msra.mxu0 0.0
    %3750 = vmatprep.subr.mxu0 0.0
    %3751 = vmatpush2.msra.mxu0 0.0
    %3752 = vmatprep.subr.mxu0 0.0
    %3753 = vmatpush2.msra.mxu0 0.0
    %3754 = vmatprep.mubr.f32.mxu0 0.0
    %3755 = vmatmul.mubr.f32.gmra.mxu0 %v3683
    %v3756 = vpop.f32.mrf.mxu0
    %v3757 = vadd.f32 0.0, %v3756
    %v3758 = vpop.f32.mrf.mxu0
    %3759 = vmatprep.mubr.f32.mxu0 0.0
    %3760 = vmatmul.mubr.f32.gmra.mxu0 %v3686
    %v3761 = vpop.f32.mrf.mxu0
    %v3762 = vadd.f32 0.0, %v3761
    %v3763 = vpop.f32.mrf.mxu0
    %3764 = vdwg.mxu0
    %3765 = vrot.lane.b32.xlu0 %v3127, 56
    %v3766 = vpop.permute.xlu0 %3765
    %3767 = vrot.lane.b32.xlu0 %v3038, 56
    %v3768 = vpop.permute.xlu0 %3767
    %v3771 = vsel %vm724, %v3675, 0
    %v3774 = vsel %vm724, %v3676, 0
    %v3776 = vsel %vm781, %v3768, 0
    %3778 = vmatprep.subr.mxu0 0.0
    %3779 = vmatpush1.msra.mxu0 0.0
    %3780 = vmatprep.subr.mxu0 0.0
    %3781 = vmatpush1.msra.mxu0 0.0
    %3782 = vmatprep.subr.mxu0 0.0
    %3783 = vmatpush1.msra.mxu0 0.0
    %3784 = vmatprep.subr.mxu0 0.0
    %3785 = vmatpush1.msra.mxu0 0.0
    %3786 = vmatprep.subr.mxu0 0.0
    %3787 = vmatpush1.msra.mxu0 0.0
    %3788 = vmatprep.subr.mxu0 0.0
    %3789 = vmatpush1.msra.mxu0 0.0
    %3790 = vmatprep.subr.mxu0 0.0
    %3791 = vmatpush1.msra.mxu0 0.0
    %3792 = vmatprep.subr.mxu0 0.0
    %3793 = vmatpush1.msra.mxu0 0.0
    %3794 = vmatprep.subr.mxu0 0.0
    %3795 = vmatpush1.msra.mxu0 0.0
    %3796 = vmatprep.subr.mxu0 0.0
    %3797 = vmatpush1.msra.mxu0 0.0
    %3798 = vmatprep.subr.mxu0 0.0
    %3799 = vmatpush1.msra.mxu0 0.0
    %3800 = vmatprep.subr.mxu0 0.0
    %3801 = vmatpush1.msra.mxu0 0.0
    %3802 = vmatprep.subr.mxu0 0.0
    %3803 = vmatpush1.msra.mxu0 0.0
    %3804 = vmatprep.subr.mxu0 0.0
    %3805 = vmatpush1.msra.mxu0 0.0
    %3806 = vmatprep.subr.mxu0 0.0
    %3807 = vmatpush1.msra.mxu0 %v3776
    %3808 = vmatprep.subr.mxu0 0.0
    %3809 = vmatpush1.msra.mxu0 %v3766
    %3810 = vmatprep.subr.mxu0 0.0
    %3811 = vmatpush2.msra.mxu0 0.0
    %3812 = vmatprep.subr.mxu0 0.0
    %3813 = vmatpush2.msra.mxu0 0.0
    %3814 = vmatprep.subr.mxu0 0.0
    %3815 = vmatpush2.msra.mxu0 0.0
    %3816 = vmatprep.subr.mxu0 0.0
    %3817 = vmatpush2.msra.mxu0 0.0
    %3818 = vmatprep.subr.mxu0 0.0
    %3819 = vmatpush2.msra.mxu0 0.0
    %3820 = vmatprep.subr.mxu0 0.0
    %3821 = vmatpush2.msra.mxu0 0.0
    %3822 = vmatprep.subr.mxu0 0.0
    %3823 = vmatpush2.msra.mxu0 0.0
    %3824 = vmatprep.subr.mxu0 0.0
    %3825 = vmatpush2.msra.mxu0 0.0
    %3826 = vmatprep.subr.mxu0 0.0
    %3827 = vmatpush2.msra.mxu0 0.0
    %3828 = vmatprep.subr.mxu0 0.0
    %3829 = vmatpush2.msra.mxu0 0.0
    %3830 = vmatprep.subr.mxu0 0.0
    %3831 = vmatpush2.msra.mxu0 0.0
    %3832 = vmatprep.subr.mxu0 0.0
    %3833 = vmatpush2.msra.mxu0 0.0
    %3834 = vmatprep.subr.mxu0 0.0
    %3835 = vmatpush2.msra.mxu0 0.0
    %3836 = vmatprep.subr.mxu0 0.0
    %3837 = vmatpush2.msra.mxu0 0.0
    %3838 = vmatprep.subr.mxu0 0.0
    %3839 = vmatpush2.msra.mxu0 0.0
    %3840 = vmatprep.subr.mxu0 0.0
    %3841 = vmatpush2.msra.mxu0 0.0
    %3842 = vmatprep.mubr.f32.mxu0 0.0
    %3843 = vmatmul.mubr.f32.gmra.mxu0 %v3771
    %v3844 = vpop.f32.mrf.mxu0
    %v3845 = vadd.f32 0.0, %v3844
    %v3846 = vpop.f32.mrf.mxu0
    %3847 = vmatprep.mubr.f32.mxu0 0.0
    %3848 = vmatmul.mubr.f32.gmra.mxu0 %v3774
    %v3849 = vpop.f32.mrf.mxu0
    %v3850 = vadd.f32 0.0, %v3849
    %v3851 = vpop.f32.mrf.mxu0
    %3852 = vdwg.mxu0
    %3853 = vrot.lane.b32.xlu0 %v3039, 112
    %v3854 = vpop.permute.xlu0 %3853
    %3855 = vrot.lane.b32.xlu0 %v3023, 112
    %v3856 = vpop.permute.xlu0 %3855
    %3857 = vrot.lane.b32.xlu0 %v3039, 80
    %v3858 = vpop.permute.xlu0 %3857
    %3859 = vrot.lane.b32.xlu0 %v3023, 80
    %v3860 = vpop.permute.xlu0 %3859
    %v3861 = vsel %vm544, %v3854, 0
    %v3863 = vsel %vm544, %v3856, 0
    %v3865 = vsel %vm544, %v3858, 0
    %v3867 = vsel %vm544, %v3860, 0
    %3869 = vmatprep.subr.mxu0 0.0
    %3870 = vmatpush1.xpose.msra.mxu0 0.0
    %3871 = vmatprep.subr.mxu0 0.0
    %3872 = vmatpush1.xpose.msra.mxu0 0.0
    %3873 = vmatprep.subr.mxu0 0.0
    %3874 = vmatpush1.xpose.msra.mxu0 0.0
    %3875 = vmatprep.subr.mxu0 0.0
    %3876 = vmatpush1.xpose.msra.mxu0 0.0
    %3877 = vmatprep.subr.mxu0 0.0
    %3878 = vmatpush1.xpose.msra.mxu0 0.0
    %3879 = vmatprep.subr.mxu0 0.0
    %3880 = vmatpush1.xpose.msra.mxu0 0.0
    %3881 = vmatprep.subr.mxu0 0.0
    %3882 = vmatpush1.xpose.msra.mxu0 0.0
    %3883 = vmatprep.subr.mxu0 0.0
    %3884 = vmatpush1.xpose.msra.mxu0 0.0
    %3885 = vmatprep.subr.mxu0 0.0
    %3886 = vmatpush1.xpose.msra.mxu0 0.0
    %3887 = vmatprep.subr.mxu0 0.0
    %3888 = vmatpush1.xpose.msra.mxu0 0.0
    %3889 = vmatprep.subr.mxu0 0.0
    %3890 = vmatpush1.xpose.msra.mxu0 0.0
    %3891 = vmatprep.subr.mxu0 0.0
    %3892 = vmatpush1.xpose.msra.mxu0 0.0
    %3893 = vmatprep.subr.mxu0 0.0
    %3894 = vmatpush1.xpose.msra.mxu0 0.0
    %3895 = vmatprep.subr.mxu0 0.0
    %3896 = vmatpush1.xpose.msra.mxu0 0.0
    %3897 = vmatprep.subr.mxu0 0.0
    %3898 = vmatpush1.xpose.msra.mxu0 %v3867
    %3899 = vmatprep.subr.mxu0 0.0
    %3900 = vmatpush1.xpose.msra.mxu0 %v3865
    %3901 = vmatprep.subr.mxu0 0.0
    %3902 = vmatpush2.xpose.msra.mxu0 0.0
    %3903 = vmatprep.subr.mxu0 0.0
    %3904 = vmatpush2.xpose.msra.mxu0 0.0
    %3905 = vmatprep.subr.mxu0 0.0
    %3906 = vmatpush2.xpose.msra.mxu0 0.0
    %3907 = vmatprep.subr.mxu0 0.0
    %3908 = vmatpush2.xpose.msra.mxu0 0.0
    %3909 = vmatprep.subr.mxu0 0.0
    %3910 = vmatpush2.xpose.msra.mxu0 0.0
    %3911 = vmatprep.subr.mxu0 0.0
    %3912 = vmatpush2.xpose.msra.mxu0 0.0
    %3913 = vmatprep.subr.mxu0 0.0
    %3914 = vmatpush2.xpose.msra.mxu0 0.0
    %3915 = vmatprep.subr.mxu0 0.0
    %3916 = vmatpush2.xpose.msra.mxu0 0.0
    %3917 = vmatprep.subr.mxu0 0.0
    %3918 = vmatpush2.xpose.msra.mxu0 0.0
    %3919 = vmatprep.subr.mxu0 0.0
    %3920 = vmatpush2.xpose.msra.mxu0 0.0
    %3921 = vmatprep.subr.mxu0 0.0
    %3922 = vmatpush2.xpose.msra.mxu0 0.0
    %3923 = vmatprep.subr.mxu0 0.0
    %3924 = vmatpush2.xpose.msra.mxu0 0.0
    %3925 = vmatprep.subr.mxu0 0.0
    %3926 = vmatpush2.xpose.msra.mxu0 0.0
    %3927 = vmatprep.subr.mxu0 0.0
    %3928 = vmatpush2.xpose.msra.mxu0 0.0
    %3929 = vmatprep.subr.mxu0 0.0
    %3930 = vmatpush2.xpose.msra.mxu0 0.0
    %3931 = vmatprep.subr.mxu0 0.0
    %3932 = vmatpush2.xpose.msra.mxu0 0.0
    %3933 = vmatprep.mubr.f32.mxu0 0.0
    %3934 = vmatmul.mubr.f32.gmra.mxu0 %v3861
    %v3935 = vpop.f32.mrf.mxu0
    %v3936 = vadd.f32 0.0, %v3935
    %v3937 = vpop.f32.mrf.mxu0
    %3938 = vmatprep.mubr.f32.mxu0 0.0
    %3939 = vmatmul.mubr.f32.gmra.mxu0 %v3863
    %v3940 = vpop.f32.mrf.mxu0
    %v3941 = vadd.f32 0.0, %v3940
    %v3942 = vpop.f32.mrf.mxu0
    %3943 = vdwg.mxu0
    %3944 = vrot.lane.b32.xlu0 %v3127, 112
    %v3945 = vpop.permute.xlu0 %3944
    %3946 = vrot.lane.b32.xlu0 %v3038, 112
    %v3947 = vpop.permute.xlu0 %3946
    %3948 = vrot.lane.b32.xlu0 %v3127, 80
    %v3949 = vpop.permute.xlu0 %3948
    %3950 = vrot.lane.b32.xlu0 %v3038, 80
    %v3951 = vpop.permute.xlu0 %3950
    %v3952 = vsel %vm544, %v3945, 0
    %v3954 = vsel %vm544, %v3947, 0
    %v3956 = vsel %vm544, %v3949, 0
    %v3958 = vsel %vm544, %v3951, 0
    %3960 = vmatprep.subr.mxu0 0.0
    %3961 = vmatpush1.xpose.msra.mxu0 0.0
    %3962 = vmatprep.subr.mxu0 0.0
    %3963 = vmatpush1.xpose.msra.mxu0 0.0
    %3964 = vmatprep.subr.mxu0 0.0
    %3965 = vmatpush1.xpose.msra.mxu0 0.0
    %3966 = vmatprep.subr.mxu0 0.0
    %3967 = vmatpush1.xpose.msra.mxu0 0.0
    %3968 = vmatprep.subr.mxu0 0.0
    %3969 = vmatpush1.xpose.msra.mxu0 0.0
    %3970 = vmatprep.subr.mxu0 0.0
    %3971 = vmatpush1.xpose.msra.mxu0 0.0
    %3972 = vmatprep.subr.mxu0 0.0
    %3973 = vmatpush1.xpose.msra.mxu0 0.0
    %3974 = vmatprep.subr.mxu0 0.0
    %3975 = vmatpush1.xpose.msra.mxu0 0.0
    %3976 = vmatprep.subr.mxu0 0.0
    %3977 = vmatpush1.xpose.msra.mxu0 0.0
    %3978 = vmatprep.subr.mxu0 0.0
    %3979 = vmatpush1.xpose.msra.mxu0 0.0
    %3980 = vmatprep.subr.mxu0 0.0
    %3981 = vmatpush1.xpose.msra.mxu0 0.0
    %3982 = vmatprep.subr.mxu0 0.0
    %3983 = vmatpush1.xpose.msra.mxu0 0.0
    %3984 = vmatprep.subr.mxu0 0.0
    %3985 = vmatpush1.xpose.msra.mxu0 0.0
    %3986 = vmatprep.subr.mxu0 0.0
    %3987 = vmatpush1.xpose.msra.mxu0 0.0
    %3988 = vmatprep.subr.mxu0 0.0
    %3989 = vmatpush1.xpose.msra.mxu0 %v3958
    %3990 = vmatprep.subr.mxu0 0.0
    %3991 = vmatpush1.xpose.msra.mxu0 %v3956
    %3992 = vmatprep.subr.mxu0 0.0
    %3993 = vmatpush2.xpose.msra.mxu0 0.0
    %3994 = vmatprep.subr.mxu0 0.0
    %3995 = vmatpush2.xpose.msra.mxu0 0.0
    %3996 = vmatprep.subr.mxu0 0.0
    %3997 = vmatpush2.xpose.msra.mxu0 0.0
    %3998 = vmatprep.subr.mxu0 0.0
    %3999 = vmatpush2.xpose.msra.mxu0 0.0
    %4000 = vmatprep.subr.mxu0 0.0
    %4001 = vmatpush2.xpose.msra.mxu0 0.0
    %4002 = vmatprep.subr.mxu0 0.0
    %4003 = vmatpush2.xpose.msra.mxu0 0.0
    %4004 = vmatprep.subr.mxu0 0.0
    %4005 = vmatpush2.xpose.msra.mxu0 0.0
    %4006 = vmatprep.subr.mxu0 0.0
    %4007 = vmatpush2.xpose.msra.mxu0 0.0
    %4008 = vmatprep.subr.mxu0 0.0
    %4009 = vmatpush2.xpose.msra.mxu0 0.0
    %4010 = vmatprep.subr.mxu0 0.0
    %4011 = vmatpush2.xpose.msra.mxu0 0.0
    %4012 = vmatprep.subr.mxu0 0.0
    %4013 = vmatpush2.xpose.msra.mxu0 0.0
    %4014 = vmatprep.subr.mxu0 0.0
    %4015 = vmatpush2.xpose.msra.mxu0 0.0
    %4016 = vmatprep.subr.mxu0 0.0
    %4017 = vmatpush2.xpose.msra.mxu0 0.0
    %4018 = vmatprep.subr.mxu0 0.0
    %4019 = vmatpush2.xpose.msra.mxu0 0.0
    %4020 = vmatprep.subr.mxu0 0.0
    %4021 = vmatpush2.xpose.msra.mxu0 0.0
    %4022 = vmatprep.subr.mxu0 0.0
    %4023 = vmatpush2.xpose.msra.mxu0 0.0
    %4024 = vmatprep.mubr.f32.mxu0 0.0
    %4025 = vmatmul.mubr.f32.gmra.mxu0 %v3952
    %v4026 = vpop.f32.mrf.mxu0
    %v4027 = vadd.f32 0.0, %v4026
    %v4028 = vpop.f32.mrf.mxu0
    %4029 = vmatprep.mubr.f32.mxu0 0.0
    %4030 = vmatmul.mubr.f32.gmra.mxu0 %v3954
    %v4031 = vpop.f32.mrf.mxu0
    %v4032 = vadd.f32 0.0, %v4031
    %v4033 = vpop.f32.mrf.mxu0
    %4034 = vdwg.mxu0
    %v4035 = vmul.f32 %v3936, 0.35355338
    %v4036 = vmul.f32 %v3941, 0.35355338
    %v4037 = vmul.f32 %v4027, 0.35355338
    %v4038 = vmul.f32 %v4032, 0.35355338
    %v4039 = vadd.f32 %v4035, %v445
    %v4040 = vadd.f32 %v4036, %v446
    %v4041 = vadd.f32 %v4037, %v447
    %v4042 = vadd.f32 %v4038, %v448
    %v4043 = vsel %vm724, %v4039, -inf
    %4044 = vmax.xlane.f32.xlu0 %v4043
    %v4045 = vpop.xlane.xlu0 %4044
    %v4046 = vsel %vm728, %v4040, -inf
    %4047 = vmax.xlane.f32.xlu0 %v4046
    %v4048 = vpop.xlane.xlu0 %4047
    %v4049 = vsel %vm724, %v4041, -inf
    %4050 = vmax.xlane.f32.xlu0 %v4049
    %v4051 = vpop.xlane.xlu0 %4050
    %v4052 = vsel %vm728, %v4042, -inf
    %4053 = vmax.xlane.f32.xlu0 %v4052
    %v4054 = vpop.xlane.xlu0 %4053
    %v4055 = vsub.f32 %v4039, %v4045
    %v4056 = vsub.f32 %v4040, %v4048
    %v4057 = vsub.f32 %v4041, %v4051
    %v4058 = vsub.f32 %v4042, %v4054
    %v4059 = vmul.f32 %v4055, 1.442695
    %v4060 = vpow.pop %v4059
    %v4061 = vmul.f32 %v4056, 1.442695
    %v4062 = vpow.pop %v4061
    %v4063 = vmul.f32 %v4057, 1.442695
    %v4064 = vpow.pop %v4063
    %v4065 = vmul.f32 %v4058, 1.442695
    %v4066 = vpow.pop %v4065
    %v4067 = vsel %vm724, %v4060, 0.0
    %4068 = vadd.xlane.f32.xlu0 %v4067
    %v4069 = vpop.xlane.xlu0 %4068
    %v4070 = vsel %vm728, %v4062, 0.0
    %4071 = vadd.xlane.f32.xlu0 %v4070
    %v4072 = vpop.xlane.xlu0 %4071
    %v4073 = vsel %vm724, %v4064, 0.0
    %4074 = vadd.xlane.f32.xlu0 %v4073
    %v4075 = vpop.xlane.xlu0 %4074
    %v4076 = vsel %vm728, %v4066, 0.0
    %4077 = vadd.xlane.f32.xlu0 %v4076
    %v4078 = vpop.xlane.xlu0 %4077
    %v4079 = vrcp.pop %v4069
    %v4080 = vrcp.pop %v4072
    %v4081 = vrcp.pop %v4075
    %v4082 = vrcp.pop %v4078
    %v4083 = vmul.f32 %v4060, %v4079
    %v4084 = vmul.f32 %v4062, %v4080
    %v4085 = vmul.f32 %v4064, %v4081
    %v4086 = vmul.f32 %v4066, %v4082
    %4087 = vrot.lane.b32.xlu0 %v3039, 48
    %v4088 = vpop.permute.xlu0 %4087
    %4089 = vrot.lane.b32.xlu0 %v3023, 48
    %v4090 = vpop.permute.xlu0 %4089
    %v4093 = vsel %vm724, %v4083, 0
    %v4096 = vsel %vm724, %v4084, 0
    %v4098 = vsel %vm781, %v4090, 0
    %4100 = vmatprep.subr.mxu0 0.0
    %4101 = vmatpush1.msra.mxu0 0.0
    %4102 = vmatprep.subr.mxu0 0.0
    %4103 = vmatpush1.msra.mxu0 0.0
    %4104 = vmatprep.subr.mxu0 0.0
    %4105 = vmatpush1.msra.mxu0 0.0
    %4106 = vmatprep.subr.mxu0 0.0
    %4107 = vmatpush1.msra.mxu0 0.0
    %4108 = vmatprep.subr.mxu0 0.0
    %4109 = vmatpush1.msra.mxu0 0.0
    %4110 = vmatprep.subr.mxu0 0.0
    %4111 = vmatpush1.msra.mxu0 0.0
    %4112 = vmatprep.subr.mxu0 0.0
    %4113 = vmatpush1.msra.mxu0 0.0
    %4114 = vmatprep.subr.mxu0 0.0
    %4115 = vmatpush1.msra.mxu0 0.0
    %4116 = vmatprep.subr.mxu0 0.0
    %4117 = vmatpush1.msra.mxu0 0.0
    %4118 = vmatprep.subr.mxu0 0.0
    %4119 = vmatpush1.msra.mxu0 0.0
    %4120 = vmatprep.subr.mxu0 0.0
    %4121 = vmatpush1.msra.mxu0 0.0
    %4122 = vmatprep.subr.mxu0 0.0
    %4123 = vmatpush1.msra.mxu0 0.0
    %4124 = vmatprep.subr.mxu0 0.0
    %4125 = vmatpush1.msra.mxu0 0.0
    %4126 = vmatprep.subr.mxu0 0.0
    %4127 = vmatpush1.msra.mxu0 0.0
    %4128 = vmatprep.subr.mxu0 0.0
    %4129 = vmatpush1.msra.mxu0 %v4098
    %4130 = vmatprep.subr.mxu0 0.0
    %4131 = vmatpush1.msra.mxu0 %v4088
    %4132 = vmatprep.subr.mxu0 0.0
    %4133 = vmatpush2.msra.mxu0 0.0
    %4134 = vmatprep.subr.mxu0 0.0
    %4135 = vmatpush2.msra.mxu0 0.0
    %4136 = vmatprep.subr.mxu0 0.0
    %4137 = vmatpush2.msra.mxu0 0.0
    %4138 = vmatprep.subr.mxu0 0.0
    %4139 = vmatpush2.msra.mxu0 0.0
    %4140 = vmatprep.subr.mxu0 0.0
    %4141 = vmatpush2.msra.mxu0 0.0
    %4142 = vmatprep.subr.mxu0 0.0
    %4143 = vmatpush2.msra.mxu0 0.0
    %4144 = vmatprep.subr.mxu0 0.0
    %4145 = vmatpush2.msra.mxu0 0.0
    %4146 = vmatprep.subr.mxu0 0.0
    %4147 = vmatpush2.msra.mxu0 0.0
    %4148 = vmatprep.subr.mxu0 0.0
    %4149 = vmatpush2.msra.mxu0 0.0
    %4150 = vmatprep.subr.mxu0 0.0
    %4151 = vmatpush2.msra.mxu0 0.0
    %4152 = vmatprep.subr.mxu0 0.0
    %4153 = vmatpush2.msra.mxu0 0.0
    %4154 = vmatprep.subr.mxu0 0.0
    %4155 = vmatpush2.msra.mxu0 0.0
    %4156 = vmatprep.subr.mxu0 0.0
    %4157 = vmatpush2.msra.mxu0 0.0
    %4158 = vmatprep.subr.mxu0 0.0
    %4159 = vmatpush2.msra.mxu0 0.0
    %4160 = vmatprep.subr.mxu0 0.0
    %4161 = vmatpush2.msra.mxu0 0.0
    %4162 = vmatprep.subr.mxu0 0.0
    %4163 = vmatpush2.msra.mxu0 0.0
    %4164 = vmatprep.mubr.f32.mxu0 0.0
    %4165 = vmatmul.mubr.f32.gmra.mxu0 %v4093
    %v4166 = vpop.f32.mrf.mxu0
    %v4167 = vadd.f32 0.0, %v4166
    %v4168 = vpop.f32.mrf.mxu0
    %4169 = vmatprep.mubr.f32.mxu0 0.0
    %4170 = vmatmul.mubr.f32.gmra.mxu0 %v4096
    %v4171 = vpop.f32.mrf.mxu0
    %v4172 = vadd.f32 0.0, %v4171
    %v4173 = vpop.f32.mrf.mxu0
    %4174 = vdwg.mxu0
    %4175 = vrot.lane.b32.xlu0 %v3127, 48
    %v4176 = vpop.permute.xlu0 %4175
    %4177 = vrot.lane.b32.xlu0 %v3038, 48
    %v4178 = vpop.permute.xlu0 %4177
    %v4181 = vsel %vm724, %v4085, 0
    %v4184 = vsel %vm724, %v4086, 0
    %v4186 = vsel %vm781, %v4178, 0
    %4188 = vmatprep.subr.mxu0 0.0
    %4189 = vmatpush1.msra.mxu0 0.0
    %4190 = vmatprep.subr.mxu0 0.0
    %4191 = vmatpush1.msra.mxu0 0.0
    %4192 = vmatprep.subr.mxu0 0.0
    %4193 = vmatpush1.msra.mxu0 0.0
    %4194 = vmatprep.subr.mxu0 0.0
    %4195 = vmatpush1.msra.mxu0 0.0
    %4196 = vmatprep.subr.mxu0 0.0
    %4197 = vmatpush1.msra.mxu0 0.0
    %4198 = vmatprep.subr.mxu0 0.0
    %4199 = vmatpush1.msra.mxu0 0.0
    %4200 = vmatprep.subr.mxu0 0.0
    %4201 = vmatpush1.msra.mxu0 0.0
    %4202 = vmatprep.subr.mxu0 0.0
    %4203 = vmatpush1.msra.mxu0 0.0
    %4204 = vmatprep.subr.mxu0 0.0
    %4205 = vmatpush1.msra.mxu0 0.0
    %4206 = vmatprep.subr.mxu0 0.0
    %4207 = vmatpush1.msra.mxu0 0.0
    %4208 = vmatprep.subr.mxu0 0.0
    %4209 = vmatpush1.msra.mxu0 0.0
    %4210 = vmatprep.subr.mxu0 0.0
    %4211 = vmatpush1.msra.mxu0 0.0
    %4212 = vmatprep.subr.mxu0 0.0
    %4213 = vmatpush1.msra.mxu0 0.0
    %4214 = vmatprep.subr.mxu0 0.0
    %4215 = vmatpush1.msra.mxu0 0.0
    %4216 = vmatprep.subr.mxu0 0.0
    %4217 = vmatpush1.msra.mxu0 %v4186
    %4218 = vmatprep.subr.mxu0 0.0
    %4219 = vmatpush1.msra.mxu0 %v4176
    %4220 = vmatprep.subr.mxu0 0.0
    %4221 = vmatpush2.msra.mxu0 0.0
    %4222 = vmatprep.subr.mxu0 0.0
    %4223 = vmatpush2.msra.mxu0 0.0
    %4224 = vmatprep.subr.mxu0 0.0
    %4225 = vmatpush2.msra.mxu0 0.0
    %4226 = vmatprep.subr.mxu0 0.0
    %4227 = vmatpush2.msra.mxu0 0.0
    %4228 = vmatprep.subr.mxu0 0.0
    %4229 = vmatpush2.msra.mxu0 0.0
    %4230 = vmatprep.subr.mxu0 0.0
    %4231 = vmatpush2.msra.mxu0 0.0
    %4232 = vmatprep.subr.mxu0 0.0
    %4233 = vmatpush2.msra.mxu0 0.0
    %4234 = vmatprep.subr.mxu0 0.0
    %4235 = vmatpush2.msra.mxu0 0.0
    %4236 = vmatprep.subr.mxu0 0.0
    %4237 = vmatpush2.msra.mxu0 0.0
    %4238 = vmatprep.subr.mxu0 0.0
    %4239 = vmatpush2.msra.mxu0 0.0
    %4240 = vmatprep.subr.mxu0 0.0
    %4241 = vmatpush2.msra.mxu0 0.0
    %4242 = vmatprep.subr.mxu0 0.0
    %4243 = vmatpush2.msra.mxu0 0.0
    %4244 = vmatprep.subr.mxu0 0.0
    %4245 = vmatpush2.msra.mxu0 0.0
    %4246 = vmatprep.subr.mxu0 0.0
    %4247 = vmatpush2.msra.mxu0 0.0
    %4248 = vmatprep.subr.mxu0 0.0
    %4249 = vmatpush2.msra.mxu0 0.0
    %4250 = vmatprep.subr.mxu0 0.0
    %4251 = vmatpush2.msra.mxu0 0.0
    %4252 = vmatprep.mubr.f32.mxu0 0.0
    %4253 = vmatmul.mubr.f32.gmra.mxu0 %v4181
    %v4254 = vpop.f32.mrf.mxu0
    %v4255 = vadd.f32 0.0, %v4254
    %v4256 = vpop.f32.mrf.mxu0
    %4257 = vmatprep.mubr.f32.mxu0 0.0
    %4258 = vmatmul.mubr.f32.gmra.mxu0 %v4184
    %v4259 = vpop.f32.mrf.mxu0
    %v4260 = vadd.f32 0.0, %v4259
    %v4261 = vpop.f32.mrf.mxu0
    %4262 = vdwg.mxu0
    %4263 = vrot.lane.b32.xlu0 %v3039, 104
    %v4264 = vpop.permute.xlu0 %4263
    %4265 = vrot.lane.b32.xlu0 %v3023, 104
    %v4266 = vpop.permute.xlu0 %4265
    %4267 = vrot.lane.b32.xlu0 %v3039, 72
    %v4268 = vpop.permute.xlu0 %4267
    %4269 = vrot.lane.b32.xlu0 %v3023, 72
    %v4270 = vpop.permute.xlu0 %4269
    %v4271 = vsel %vm544, %v4264, 0
    %v4273 = vsel %vm544, %v4266, 0
    %v4275 = vsel %vm544, %v4268, 0
    %v4277 = vsel %vm544, %v4270, 0
    %4279 = vmatprep.subr.mxu0 0.0
    %4280 = vmatpush1.xpose.msra.mxu0 0.0
    %4281 = vmatprep.subr.mxu0 0.0
    %4282 = vmatpush1.xpose.msra.mxu0 0.0
    %4283 = vmatprep.subr.mxu0 0.0
    %4284 = vmatpush1.xpose.msra.mxu0 0.0
    %4285 = vmatprep.subr.mxu0 0.0
    %4286 = vmatpush1.xpose.msra.mxu0 0.0
    %4287 = vmatprep.subr.mxu0 0.0
    %4288 = vmatpush1.xpose.msra.mxu0 0.0
    %4289 = vmatprep.subr.mxu0 0.0
    %4290 = vmatpush1.xpose.msra.mxu0 0.0
    %4291 = vmatprep.subr.mxu0 0.0
    %4292 = vmatpush1.xpose.msra.mxu0 0.0
    %4293 = vmatprep.subr.mxu0 0.0
    %4294 = vmatpush1.xpose.msra.mxu0 0.0
    %4295 = vmatprep.subr.mxu0 0.0
    %4296 = vmatpush1.xpose.msra.mxu0 0.0
    %4297 = vmatprep.subr.mxu0 0.0
    %4298 = vmatpush1.xpose.msra.mxu0 0.0
    %4299 = vmatprep.subr.mxu0 0.0
    %4300 = vmatpush1.xpose.msra.mxu0 0.0
    %4301 = vmatprep.subr.mxu0 0.0
    %4302 = vmatpush1.xpose.msra.mxu0 0.0
    %4303 = vmatprep.subr.mxu0 0.0
    %4304 = vmatpush1.xpose.msra.mxu0 0.0
    %4305 = vmatprep.subr.mxu0 0.0
    %4306 = vmatpush1.xpose.msra.mxu0 0.0
    %4307 = vmatprep.subr.mxu0 0.0
    %4308 = vmatpush1.xpose.msra.mxu0 %v4277
    %4309 = vmatprep.subr.mxu0 0.0
    %4310 = vmatpush1.xpose.msra.mxu0 %v4275
    %4311 = vmatprep.subr.mxu0 0.0
    %4312 = vmatpush2.xpose.msra.mxu0 0.0
    %4313 = vmatprep.subr.mxu0 0.0
    %4314 = vmatpush2.xpose.msra.mxu0 0.0
    %4315 = vmatprep.subr.mxu0 0.0
    %4316 = vmatpush2.xpose.msra.mxu0 0.0
    %4317 = vmatprep.subr.mxu0 0.0
    %4318 = vmatpush2.xpose.msra.mxu0 0.0
    %4319 = vmatprep.subr.mxu0 0.0
    %4320 = vmatpush2.xpose.msra.mxu0 0.0
    %4321 = vmatprep.subr.mxu0 0.0
    %4322 = vmatpush2.xpose.msra.mxu0 0.0
    %4323 = vmatprep.subr.mxu0 0.0
    %4324 = vmatpush2.xpose.msra.mxu0 0.0
    %4325 = vmatprep.subr.mxu0 0.0
    %4326 = vmatpush2.xpose.msra.mxu0 0.0
    %4327 = vmatprep.subr.mxu0 0.0
    %4328 = vmatpush2.xpose.msra.mxu0 0.0
    %4329 = vmatprep.subr.mxu0 0.0
    %4330 = vmatpush2.xpose.msra.mxu0 0.0
    %4331 = vmatprep.subr.mxu0 0.0
    %4332 = vmatpush2.xpose.msra.mxu0 0.0
    %4333 = vmatprep.subr.mxu0 0.0
    %4334 = vmatpush2.xpose.msra.mxu0 0.0
    %4335 = vmatprep.subr.mxu0 0.0
    %4336 = vmatpush2.xpose.msra.mxu0 0.0
    %4337 = vmatprep.subr.mxu0 0.0
    %4338 = vmatpush2.xpose.msra.mxu0 0.0
    %4339 = vmatprep.subr.mxu0 0.0
    %4340 = vmatpush2.xpose.msra.mxu0 0.0
    %4341 = vmatprep.subr.mxu0 0.0
    %4342 = vmatpush2.xpose.msra.mxu0 0.0
    %4343 = vmatprep.mubr.f32.mxu0 0.0
    %4344 = vmatmul.mubr.f32.gmra.mxu0 %v4271
    %v4345 = vpop.f32.mrf.mxu0
    %v4346 = vadd.f32 0.0, %v4345
    %v4347 = vpop.f32.mrf.mxu0
    %4348 = vmatprep.mubr.f32.mxu0 0.0
    %4349 = vmatmul.mubr.f32.gmra.mxu0 %v4273
    %v4350 = vpop.f32.mrf.mxu0
    %v4351 = vadd.f32 0.0, %v4350
    %v4352 = vpop.f32.mrf.mxu0
    %4353 = vdwg.mxu0
    %4354 = vrot.lane.b32.xlu0 %v3127, 104
    %v4355 = vpop.permute.xlu0 %4354
    %4356 = vrot.lane.b32.xlu0 %v3038, 104
    %v4357 = vpop.permute.xlu0 %4356
    %4358 = vrot.lane.b32.xlu0 %v3127, 72
    %v4359 = vpop.permute.xlu0 %4358
    %4360 = vrot.lane.b32.xlu0 %v3038, 72
    %v4361 = vpop.permute.xlu0 %4360
    %v4362 = vsel %vm544, %v4355, 0
    %v4364 = vsel %vm544, %v4357, 0
    %v4366 = vsel %vm544, %v4359, 0
    %v4368 = vsel %vm544, %v4361, 0
    %4370 = vmatprep.subr.mxu0 0.0
    %4371 = vmatpush1.xpose.msra.mxu0 0.0
    %4372 = vmatprep.subr.mxu0 0.0
    %4373 = vmatpush1.xpose.msra.mxu0 0.0
    %4374 = vmatprep.subr.mxu0 0.0
    %4375 = vmatpush1.xpose.msra.mxu0 0.0
    %4376 = vmatprep.subr.mxu0 0.0
    %4377 = vmatpush1.xpose.msra.mxu0 0.0
    %4378 = vmatprep.subr.mxu0 0.0
    %4379 = vmatpush1.xpose.msra.mxu0 0.0
    %4380 = vmatprep.subr.mxu0 0.0
    %4381 = vmatpush1.xpose.msra.mxu0 0.0
    %4382 = vmatprep.subr.mxu0 0.0
    %4383 = vmatpush1.xpose.msra.mxu0 0.0
    %4384 = vmatprep.subr.mxu0 0.0
    %4385 = vmatpush1.xpose.msra.mxu0 0.0
    %4386 = vmatprep.subr.mxu0 0.0
    %4387 = vmatpush1.xpose.msra.mxu0 0.0
    %4388 = vmatprep.subr.mxu0 0.0
    %4389 = vmatpush1.xpose.msra.mxu0 0.0
    %4390 = vmatprep.subr.mxu0 0.0
    %4391 = vmatpush1.xpose.msra.mxu0 0.0
    %4392 = vmatprep.subr.mxu0 0.0
    %4393 = vmatpush1.xpose.msra.mxu0 0.0
    %4394 = vmatprep.subr.mxu0 0.0
    %4395 = vmatpush1.xpose.msra.mxu0 0.0
    %4396 = vmatprep.subr.mxu0 0.0
    %4397 = vmatpush1.xpose.msra.mxu0 0.0
    %4398 = vmatprep.subr.mxu0 0.0
    %4399 = vmatpush1.xpose.msra.mxu0 %v4368
    %4400 = vmatprep.subr.mxu0 0.0
    %4401 = vmatpush1.xpose.msra.mxu0 %v4366
    %4402 = vmatprep.subr.mxu0 0.0
    %4403 = vmatpush2.xpose.msra.mxu0 0.0
    %4404 = vmatprep.subr.mxu0 0.0
    %4405 = vmatpush2.xpose.msra.mxu0 0.0
    %4406 = vmatprep.subr.mxu0 0.0
    %4407 = vmatpush2.xpose.msra.mxu0 0.0
    %4408 = vmatprep.subr.mxu0 0.0
    %4409 = vmatpush2.xpose.msra.mxu0 0.0
    %4410 = vmatprep.subr.mxu0 0.0
    %4411 = vmatpush2.xpose.msra.mxu0 0.0
    %4412 = vmatprep.subr.mxu0 0.0
    %4413 = vmatpush2.xpose.msra.mxu0 0.0
    %4414 = vmatprep.subr.mxu0 0.0
    %4415 = vmatpush2.xpose.msra.mxu0 0.0
    %4416 = vmatprep.subr.mxu0 0.0
    %4417 = vmatpush2.xpose.msra.mxu0 0.0
    %4418 = vmatprep.subr.mxu0 0.0
    %4419 = vmatpush2.xpose.msra.mxu0 0.0
    %4420 = vmatprep.subr.mxu0 0.0
    %4421 = vmatpush2.xpose.msra.mxu0 0.0
    %4422 = vmatprep.subr.mxu0 0.0
    %4423 = vmatpush2.xpose.msra.mxu0 0.0
    %4424 = vmatprep.subr.mxu0 0.0
    %4425 = vmatpush2.xpose.msra.mxu0 0.0
    %4426 = vmatprep.subr.mxu0 0.0
    %4427 = vmatpush2.xpose.msra.mxu0 0.0
    %4428 = vmatprep.subr.mxu0 0.0
    %4429 = vmatpush2.xpose.msra.mxu0 0.0
    %4430 = vmatprep.subr.mxu0 0.0
    %4431 = vmatpush2.xpose.msra.mxu0 0.0
    %4432 = vmatprep.subr.mxu0 0.0
    %4433 = vmatpush2.xpose.msra.mxu0 0.0
    %4434 = vmatprep.mubr.f32.mxu0 0.0
    %4435 = vmatmul.mubr.f32.gmra.mxu0 %v4362
    %v4436 = vpop.f32.mrf.mxu0
    %v4437 = vadd.f32 0.0, %v4436
    %v4438 = vpop.f32.mrf.mxu0
    %4439 = vmatprep.mubr.f32.mxu0 0.0
    %4440 = vmatmul.mubr.f32.gmra.mxu0 %v4364
    %v4441 = vpop.f32.mrf.mxu0
    %v4442 = vadd.f32 0.0, %v4441
    %v4443 = vpop.f32.mrf.mxu0
    %4444 = vdwg.mxu0
    %v4445 = vmul.f32 %v4346, 0.35355338
    %v4446 = vmul.f32 %v4351, 0.35355338
    %v4447 = vmul.f32 %v4437, 0.35355338
    %v4448 = vmul.f32 %v4442, 0.35355338
    %v4449 = vadd.f32 %v4445, %v445
    %v4450 = vadd.f32 %v4446, %v446
    %v4451 = vadd.f32 %v4447, %v447
    %v4452 = vadd.f32 %v4448, %v448
    %v4453 = vsel %vm724, %v4449, -inf
    %4454 = vmax.xlane.f32.xlu0 %v4453
    %v4455 = vpop.xlane.xlu0 %4454
    %v4456 = vsel %vm728, %v4450, -inf
    %4457 = vmax.xlane.f32.xlu0 %v4456
    %v4458 = vpop.xlane.xlu0 %4457
    %v4459 = vsel %vm724, %v4451, -inf
    %4460 = vmax.xlane.f32.xlu0 %v4459
    %v4461 = vpop.xlane.xlu0 %4460
    %v4462 = vsel %vm728, %v4452, -inf
    %4463 = vmax.xlane.f32.xlu0 %v4462
    %v4464 = vpop.xlane.xlu0 %4463
    %v4465 = vsub.f32 %v4449, %v4455
    %v4466 = vsub.f32 %v4450, %v4458
    %v4467 = vsub.f32 %v4451, %v4461
    %v4468 = vsub.f32 %v4452, %v4464
    %v4469 = vmul.f32 %v4465, 1.442695
    %v4470 = vpow.pop %v4469
    %v4471 = vmul.f32 %v4466, 1.442695
    %v4472 = vpow.pop %v4471
    %v4473 = vmul.f32 %v4467, 1.442695
    %v4474 = vpow.pop %v4473
    %v4475 = vmul.f32 %v4468, 1.442695
    %v4476 = vpow.pop %v4475
    %v4477 = vsel %vm724, %v4470, 0.0
    %4478 = vadd.xlane.f32.xlu0 %v4477
    %v4479 = vpop.xlane.xlu0 %4478
    %v4480 = vsel %vm728, %v4472, 0.0
    %4481 = vadd.xlane.f32.xlu0 %v4480
    %v4482 = vpop.xlane.xlu0 %4481
    %v4483 = vsel %vm724, %v4474, 0.0
    %4484 = vadd.xlane.f32.xlu0 %v4483
    %v4485 = vpop.xlane.xlu0 %4484
    %v4486 = vsel %vm728, %v4476, 0.0
    %4487 = vadd.xlane.f32.xlu0 %v4486
    %v4488 = vpop.xlane.xlu0 %4487
    %v4489 = vrcp.pop %v4479
    %v4490 = vrcp.pop %v4482
    %v4491 = vrcp.pop %v4485
    %v4492 = vrcp.pop %v4488
    %v4493 = vmul.f32 %v4470, %v4489
    %v4494 = vmul.f32 %v4472, %v4490
    %v4495 = vmul.f32 %v4474, %v4491
    %v4496 = vmul.f32 %v4476, %v4492
    %4497 = vrot.lane.b32.xlu0 %v3039, 40
    %v4498 = vpop.permute.xlu0 %4497
    %4499 = vrot.lane.b32.xlu0 %v3023, 40
    %v4500 = vpop.permute.xlu0 %4499
    %v4503 = vsel %vm724, %v4493, 0
    %v4506 = vsel %vm724, %v4494, 0
    %v4508 = vsel %vm781, %v4500, 0
    %4510 = vmatprep.subr.mxu0 0.0
    %4511 = vmatpush1.msra.mxu0 0.0
    %4512 = vmatprep.subr.mxu0 0.0
    %4513 = vmatpush1.msra.mxu0 0.0
    %4514 = vmatprep.subr.mxu0 0.0
    %4515 = vmatpush1.msra.mxu0 0.0
    %4516 = vmatprep.subr.mxu0 0.0
    %4517 = vmatpush1.msra.mxu0 0.0
    %4518 = vmatprep.subr.mxu0 0.0
    %4519 = vmatpush1.msra.mxu0 0.0
    %4520 = vmatprep.subr.mxu0 0.0
    %4521 = vmatpush1.msra.mxu0 0.0
    %4522 = vmatprep.subr.mxu0 0.0
    %4523 = vmatpush1.msra.mxu0 0.0
    %4524 = vmatprep.subr.mxu0 0.0
    %4525 = vmatpush1.msra.mxu0 0.0
    %4526 = vmatprep.subr.mxu0 0.0
    %4527 = vmatpush1.msra.mxu0 0.0
    %4528 = vmatprep.subr.mxu0 0.0
    %4529 = vmatpush1.msra.mxu0 0.0
    %4530 = vmatprep.subr.mxu0 0.0
    %4531 = vmatpush1.msra.mxu0 0.0
    %4532 = vmatprep.subr.mxu0 0.0
    %4533 = vmatpush1.msra.mxu0 0.0
    %4534 = vmatprep.subr.mxu0 0.0
    %4535 = vmatpush1.msra.mxu0 0.0
    %4536 = vmatprep.subr.mxu0 0.0
    %4537 = vmatpush1.msra.mxu0 0.0
    %4538 = vmatprep.subr.mxu0 0.0
    %4539 = vmatpush1.msra.mxu0 %v4508
    %4540 = vmatprep.subr.mxu0 0.0
    %4541 = vmatpush1.msra.mxu0 %v4498
    %4542 = vmatprep.subr.mxu0 0.0
    %4543 = vmatpush2.msra.mxu0 0.0
    %4544 = vmatprep.subr.mxu0 0.0
    %4545 = vmatpush2.msra.mxu0 0.0
    %4546 = vmatprep.subr.mxu0 0.0
    %4547 = vmatpush2.msra.mxu0 0.0
    %4548 = vmatprep.subr.mxu0 0.0
    %4549 = vmatpush2.msra.mxu0 0.0
    %4550 = vmatprep.subr.mxu0 0.0
    %4551 = vmatpush2.msra.mxu0 0.0
    %4552 = vmatprep.subr.mxu0 0.0
    %4553 = vmatpush2.msra.mxu0 0.0
    %4554 = vmatprep.subr.mxu0 0.0
    %4555 = vmatpush2.msra.mxu0 0.0
    %4556 = vmatprep.subr.mxu0 0.0
    %4557 = vmatpush2.msra.mxu0 0.0
    %4558 = vmatprep.subr.mxu0 0.0
    %4559 = vmatpush2.msra.mxu0 0.0
    %4560 = vmatprep.subr.mxu0 0.0
    %4561 = vmatpush2.msra.mxu0 0.0
    %4562 = vmatprep.subr.mxu0 0.0
    %4563 = vmatpush2.msra.mxu0 0.0
    %4564 = vmatprep.subr.mxu0 0.0
    %4565 = vmatpush2.msra.mxu0 0.0
    %4566 = vmatprep.subr.mxu0 0.0
    %4567 = vmatpush2.msra.mxu0 0.0
    %4568 = vmatprep.subr.mxu0 0.0
    %4569 = vmatpush2.msra.mxu0 0.0
    %4570 = vmatprep.subr.mxu0 0.0
    %4571 = vmatpush2.msra.mxu0 0.0
    %4572 = vmatprep.subr.mxu0 0.0
    %4573 = vmatpush2.msra.mxu0 0.0
    %4574 = vmatprep.mubr.f32.mxu0 0.0
    %4575 = vmatmul.mubr.f32.gmra.mxu0 %v4503
    %v4576 = vpop.f32.mrf.mxu0
    %v4577 = vadd.f32 0.0, %v4576
    %v4578 = vpop.f32.mrf.mxu0
    %4579 = vmatprep.mubr.f32.mxu0 0.0
    %4580 = vmatmul.mubr.f32.gmra.mxu0 %v4506
    %v4581 = vpop.f32.mrf.mxu0
    %v4582 = vadd.f32 0.0, %v4581
    %v4583 = vpop.f32.mrf.mxu0
    %4584 = vdwg.mxu0
    %4585 = vrot.lane.b32.xlu0 %v3127, 40
    %v4586 = vpop.permute.xlu0 %4585
    %4587 = vrot.lane.b32.xlu0 %v3038, 40
    %v4588 = vpop.permute.xlu0 %4587
    %v4591 = vsel %vm724, %v4495, 0
    %v4594 = vsel %vm724, %v4496, 0
    %v4596 = vsel %vm781, %v4588, 0
    %4598 = vmatprep.subr.mxu0 0.0
    %4599 = vmatpush1.msra.mxu0 0.0
    %4600 = vmatprep.subr.mxu0 0.0
    %4601 = vmatpush1.msra.mxu0 0.0
    %4602 = vmatprep.subr.mxu0 0.0
    %4603 = vmatpush1.msra.mxu0 0.0
    %4604 = vmatprep.subr.mxu0 0.0
    %4605 = vmatpush1.msra.mxu0 0.0
    %4606 = vmatprep.subr.mxu0 0.0
    %4607 = vmatpush1.msra.mxu0 0.0
    %4608 = vmatprep.subr.mxu0 0.0
    %4609 = vmatpush1.msra.mxu0 0.0
    %4610 = vmatprep.subr.mxu0 0.0
    %4611 = vmatpush1.msra.mxu0 0.0
    %4612 = vmatprep.subr.mxu0 0.0
    %4613 = vmatpush1.msra.mxu0 0.0
    %4614 = vmatprep.subr.mxu0 0.0
    %4615 = vmatpush1.msra.mxu0 0.0
    %4616 = vmatprep.subr.mxu0 0.0
    %4617 = vmatpush1.msra.mxu0 0.0
    %4618 = vmatprep.subr.mxu0 0.0
    %4619 = vmatpush1.msra.mxu0 0.0
    %4620 = vmatprep.subr.mxu0 0.0
    %4621 = vmatpush1.msra.mxu0 0.0
    %4622 = vmatprep.subr.mxu0 0.0
    %4623 = vmatpush1.msra.mxu0 0.0
    %4624 = vmatprep.subr.mxu0 0.0
    %4625 = vmatpush1.msra.mxu0 0.0
    %4626 = vmatprep.subr.mxu0 0.0
    %4627 = vmatpush1.msra.mxu0 %v4596
    %4628 = vmatprep.subr.mxu0 0.0
    %4629 = vmatpush1.msra.mxu0 %v4586
    %4630 = vmatprep.subr.mxu0 0.0
    %4631 = vmatpush2.msra.mxu0 0.0
    %4632 = vmatprep.subr.mxu0 0.0
    %4633 = vmatpush2.msra.mxu0 0.0
    %4634 = vmatprep.subr.mxu0 0.0
    %4635 = vmatpush2.msra.mxu0 0.0
    %4636 = vmatprep.subr.mxu0 0.0
    %4637 = vmatpush2.msra.mxu0 0.0
    %4638 = vmatprep.subr.mxu0 0.0
    %4639 = vmatpush2.msra.mxu0 0.0
    %4640 = vmatprep.subr.mxu0 0.0
    %4641 = vmatpush2.msra.mxu0 0.0
    %4642 = vmatprep.subr.mxu0 0.0
    %4643 = vmatpush2.msra.mxu0 0.0
    %4644 = vmatprep.subr.mxu0 0.0
    %4645 = vmatpush2.msra.mxu0 0.0
    %4646 = vmatprep.subr.mxu0 0.0
    %4647 = vmatpush2.msra.mxu0 0.0
    %4648 = vmatprep.subr.mxu0 0.0
    %4649 = vmatpush2.msra.mxu0 0.0
    %4650 = vmatprep.subr.mxu0 0.0
    %4651 = vmatpush2.msra.mxu0 0.0
    %4652 = vmatprep.subr.mxu0 0.0
    %4653 = vmatpush2.msra.mxu0 0.0
    %4654 = vmatprep.subr.mxu0 0.0
    %4655 = vmatpush2.msra.mxu0 0.0
    %4656 = vmatprep.subr.mxu0 0.0
    %4657 = vmatpush2.msra.mxu0 0.0
    %4658 = vmatprep.subr.mxu0 0.0
    %4659 = vmatpush2.msra.mxu0 0.0
    %4660 = vmatprep.subr.mxu0 0.0
    %4661 = vmatpush2.msra.mxu0 0.0
    %4662 = vmatprep.mubr.f32.mxu0 0.0
    %4663 = vmatmul.mubr.f32.gmra.mxu0 %v4591
    %v4664 = vpop.f32.mrf.mxu0
    %v4665 = vadd.f32 0.0, %v4664
    %v4666 = vpop.f32.mrf.mxu0
    %4667 = vmatprep.mubr.f32.mxu0 0.0
    %4668 = vmatmul.mubr.f32.gmra.mxu0 %v4594
    %v4669 = vpop.f32.mrf.mxu0
    %v4670 = vadd.f32 0.0, %v4669
    %v4671 = vpop.f32.mrf.mxu0
    %4672 = vdwg.mxu0
    %4677 = vrot.lane.b32.xlu0 %v3757, 8
    %v4678 = vpop.permute.xlu0 %4677
    %4679 = vrot.lane.b32.xlu0 %v3762, 8
    %v4680 = vpop.permute.xlu0 %4679
    %4681 = vrot.lane.b32.xlu0 %v3845, 8
    %v4682 = vpop.permute.xlu0 %4681
    %4683 = vrot.lane.b32.xlu0 %v3850, 8
    %v4684 = vpop.permute.xlu0 %4683
    %4693 = vrot.lane.b32.xlu0 %v4167, 16
    %v4694 = vpop.permute.xlu0 %4693
    %4695 = vrot.lane.b32.xlu0 %v4172, 16
    %v4696 = vpop.permute.xlu0 %4695
    %4697 = vrot.lane.b32.xlu0 %v4255, 16
    %v4698 = vpop.permute.xlu0 %4697
    %4699 = vrot.lane.b32.xlu0 %v4260, 16
    %v4700 = vpop.permute.xlu0 %4699
    %4709 = vrot.lane.b32.xlu0 %v4577, 24
    %v4710 = vpop.permute.xlu0 %4709
    %4711 = vrot.lane.b32.xlu0 %v4582, 24
    %v4712 = vpop.permute.xlu0 %4711
    %4713 = vrot.lane.b32.xlu0 %v4665, 24
    %v4714 = vpop.permute.xlu0 %4713
    %4715 = vrot.lane.b32.xlu0 %v4670, 24
    %v4716 = vpop.permute.xlu0 %4715
    %v4721 = vsel %vm544, %v3347, %v4678
    %v4722 = vsel %vm544, %v3352, %v4680
    %v4723 = vsel %vm544, %v3435, %v4682
    %v4724 = vsel %vm544, %v3440, %v4684
    %v4725 = vsel %vm2229, %v4721, %v4694
    %v4726 = vsel %vm2229, %v4722, %v4696
    %v4727 = vsel %vm2229, %v4723, %v4698
    %v4728 = vsel %vm2229, %v4724, %v4700
    %v4729 = vsel %vm2234, %v4725, %v4710
    %v4730 = vsel %vm2234, %v4726, %v4712
    %v4731 = vsel %vm2234, %v4727, %v4714
    %v4732 = vsel %vm2234, %v4728, %v4716
    %v4737 = vcombine.high %v4729, %v4729
    %v4738 = vcombine.high %v4731, %v4731
    %v4739 = vcombine.low %v4729, %v4737
    %v4740 = vcombine.low %v4730, %v4731
    %v4741 = vcombine.low %v4738, %v4732
    %v4745 = vpack.c.bf16 %v4740, %v4739
    %v4746 = vpack.c.bf16 %v4741, %v4741
    %s4747 = scalar_lea.vmem %s7, 16
    %v4748 = vld [vmem:[%s4747] sm:$0xf]
    %v4749 = vld [vmem:[%s4747 + $0x4] sm:$0xf]
    %v4750 = vld [vmem:[%s4747 + $0x8] sm:$0xf]
    %v4751 = vld [vmem:[%s4747 + $0xc] sm:$0xf]
    %v4752 = vlaneseq
    %v4753 = vshrl.u32 %v4752, 7
    %v4754 = vsub.s32 2, %v4753
    %v4755 = vrot.slane %v2943, %v4754
    %v4760 = vunpack.c.l.b16 %v4748
    %v4761 = vunpack.c.l.b16 %v4749
    %v4762 = vunpack.c.l.b16 %v4750
    %v4763 = vunpack.c.l.b16 %v4751
    %v4764 = vpack.c.b16 %v4761, %v4760
    %v4765 = vpack.c.b16 %v4763, %v4762
    %v4769 = vsel %vm478, %v4745, 0
    %v4772 = vsel %vm478, %v4746, 0
    %4774 = vmatprep.subr.bf16.mxu0 0
    %4775 = vmatpush1.bf16.msra.mxu0 0
    %4776 = vmatprep.subr.bf16.mxu0 0
    %4777 = vmatpush1.bf16.msra.mxu0 0
    %4778 = vmatprep.subr.bf16.mxu0 0
    %4779 = vmatpush1.bf16.msra.mxu0 0
    %4780 = vmatprep.subr.bf16.mxu0 0
    %4781 = vmatpush1.bf16.msra.mxu0 0
    %4782 = vmatprep.subr.bf16.mxu0 0
    %4783 = vmatpush1.bf16.msra.mxu0 0
    %4784 = vmatprep.subr.bf16.mxu0 0
    %4785 = vmatpush1.bf16.msra.mxu0 0
    %4786 = vmatprep.subr.bf16.mxu0 0
    %4787 = vmatpush1.bf16.msra.mxu0 %v4765
    %4788 = vmatprep.subr.bf16.mxu0 0
    %4789 = vmatpush1.bf16.msra.mxu0 %v4764
    %4790 = vmatprep.subr.bf16.mxu0 0
    %4791 = vmatpush2.bf16.msra.mxu0 0
    %4792 = vmatprep.subr.bf16.mxu0 0
    %4793 = vmatpush2.bf16.msra.mxu0 0
    %4794 = vmatprep.subr.bf16.mxu0 0
    %4795 = vmatpush2.bf16.msra.mxu0 0
    %4796 = vmatprep.subr.bf16.mxu0 0
    %4797 = vmatpush2.bf16.msra.mxu0 0
    %4798 = vmatprep.subr.bf16.mxu0 0
    %4799 = vmatpush2.bf16.msra.mxu0 0
    %4800 = vmatprep.subr.bf16.mxu0 0
    %4801 = vmatpush2.bf16.msra.mxu0 0
    %4802 = vmatprep.subr.bf16.mxu0 0
    %4803 = vmatpush2.bf16.msra.mxu0 0
    %4804 = vmatprep.subr.bf16.mxu0 0
    %4805 = vmatpush2.bf16.msra.mxu0 0
    %4806 = vmatprep.mubr.bf16.mxu0 0
    %4807 = vmatmul.mubr.bf16.gmra.mxu0 %v4769
    %v4808 = vpop.f32.mrf.mxu0
    %v4809 = vadd.f32 %v4755, %v4808
    %v4810 = vpop.f32.mrf.mxu0
    %v4811 = vpop.f32.mrf.mxu0
    %v4812 = vadd.f32 %v4755, %v4811
    %v4813 = vpop.f32.mrf.mxu0
    %4814 = vmatprep.mubr.bf16.mxu0 0
    %4815 = vmatmul.mubr.bf16.gmra.mxu0 %v4772
    %v4816 = vpop.f32.mrf.mxu0
    %v4817 = vadd.f32 %v4755, %v4816
    %v4818 = vpop.f32.mrf.mxu0
    %v4819 = vpop.f32.mrf.mxu0
    %v4820 = vpop.f32.mrf.mxu0
    %4821 = vdwg.mxu0
    %v4825 = vcombine.high %v4809, %v4809
    %v4826 = vcombine.high %v4812, %v4812
    %v4827 = vcombine.high %v4817, %v4817
    %v4831 = vadd.f32 %v2936, %v4809
    %v4832 = vadd.f32 %v2937, %v4825
    %v4833 = vadd.f32 %v2938, %v4812
    %v4834 = vadd.f32 %v2939, %v4826
    %v4835 = vadd.f32 %v2940, %v4817
    %v4836 = vadd.f32 %v2941, %v4827
    %v4843 = vcombine.low %v4831, %v4832
    %v4844 = vcombine.low %v4833, %v4834
    %v4845 = vcombine.low %v4835, %v4836
    %v4849 = vsel %vm478, %v4843, 0.0
    %4850 = vadd.xlane.f32.xlu0 %v4849
    %v4851 = vpop.xlane.xlu0 %4850
    %v4852 = vsel %vm478, %v4844, 0.0
    %4853 = vadd.xlane.f32.xlu0 %v4852
    %v4854 = vpop.xlane.xlu0 %4853
    %v4855 = vsel %vm478, %v4845, 0.0
    %4856 = vadd.xlane.f32.xlu0 %v4855
    %v4857 = vpop.xlane.xlu0 %4856
    %v4858 = vmul.f32 %v4851, %v2363
    %v4859 = vmul.f32 %v4854, %v2363
    %v4860 = vmul.f32 %v4857, %v2363
    %v4865 = vunpack.c.l.s4 839922192
    %v4866 = vunpack.c.0.s8 %v4865
    %v4867 = vlaneseq
    %v4868 = vshrl.u32 %v4867, 7
    %v4869 = vsub.s32 %v4866, %v4868
    %v4870 = vrot.slane %v4858, %v4869
    %v4872 = vunpack.c.l.s4 1985246804
    %v4873 = vunpack.c.0.s8 %v4872
    %v4874 = vlaneseq
    %v4875 = vshrl.u32 %v4874, 7
    %v4876 = vsub.s32 %v4873, %v4875
    %v4877 = vrot.slane %v4858, %v4876
    %v4879 = vunpack.c.l.s4 839922192
    %v4880 = vunpack.c.0.s8 %v4879
    %v4881 = vlaneseq
    %v4882 = vshrl.u32 %v4881, 7
    %v4883 = vsub.s32 %v4880, %v4882
    %v4884 = vrot.slane %v4859, %v4883
    %v4886 = vunpack.c.l.s4 1985246804
    %v4887 = vunpack.c.0.s8 %v4886
    %v4888 = vlaneseq
    %v4889 = vshrl.u32 %v4888, 7
    %v4890 = vsub.s32 %v4887, %v4889
    %v4891 = vrot.slane %v4859, %v4890
    %v4893 = vunpack.c.l.s4 839922192
    %v4894 = vunpack.c.0.s8 %v4893
    %v4895 = vlaneseq
    %v4896 = vshrl.u32 %v4895, 7
    %v4897 = vsub.s32 %v4894, %v4896
    %v4898 = vrot.slane %v4860, %v4897
    %v4900 = vunpack.c.l.s4 1985246804
    %v4901 = vunpack.c.0.s8 %v4900
    %v4902 = vlaneseq
    %v4903 = vshrl.u32 %v4902, 7
    %v4904 = vsub.s32 %v4901, %v4903
    %v4905 = vrot.slane %v4860, %v4904
    %v4912 = vsub.f32 %v4831, %v4870
    %v4913 = vsub.f32 %v4832, %v4877
    %v4914 = vsub.f32 %v4833, %v4884
    %v4915 = vsub.f32 %v4834, %v4891
    %v4916 = vsub.f32 %v4835, %v4898
    %v4917 = vsub.f32 %v4836, %v4905
    %v4918 = vmul.f32 %v4912, %v4912
    %v4919 = vmul.f32 %v4913, %v4913
    %v4920 = vmul.f32 %v4914, %v4914
    %v4921 = vmul.f32 %v4915, %v4915
    %v4922 = vmul.f32 %v4916, %v4916
    %v4923 = vmul.f32 %v4917, %v4917
    %v4930 = vcombine.low %v4918, %v4919
    %v4931 = vcombine.low %v4920, %v4921
    %v4932 = vcombine.low %v4922, %v4923
    %v4936 = vsel %vm478, %v4930, 0.0
    %4937 = vadd.xlane.f32.xlu0 %v4936
    %v4938 = vpop.xlane.xlu0 %4937
    %v4939 = vsel %vm478, %v4931, 0.0
    %4940 = vadd.xlane.f32.xlu0 %v4939
    %v4941 = vpop.xlane.xlu0 %4940
    %v4942 = vsel %vm478, %v4932, 0.0
    %4943 = vadd.xlane.f32.xlu0 %v4942
    %v4944 = vpop.xlane.xlu0 %4943
    %v4945 = vmul.f32 %v4938, %v2363
    %v4946 = vmul.f32 %v4941, %v2363
    %v4947 = vmul.f32 %v4944, %v2363
    %v4948 = vadd.f32 %v4945, 1e-05
    %v4949 = vadd.f32 %v4946, 1e-05
    %v4950 = vadd.f32 %v4947, 1e-05
    %v4951 = vrsqrt.pop %v4948
    %v4952 = vrsqrt.pop %v4949
    %v4953 = vrsqrt.pop %v4950
    %v4958 = vunpack.c.l.s4 839922192
    %v4959 = vunpack.c.0.s8 %v4958
    %v4960 = vlaneseq
    %v4961 = vshrl.u32 %v4960, 7
    %v4962 = vsub.s32 %v4959, %v4961
    %v4963 = vrot.slane %v4951, %v4962
    %v4965 = vunpack.c.l.s4 1985246804
    %v4966 = vunpack.c.0.s8 %v4965
    %v4967 = vlaneseq
    %v4968 = vshrl.u32 %v4967, 7
    %v4969 = vsub.s32 %v4966, %v4968
    %v4970 = vrot.slane %v4951, %v4969
    %v4972 = vunpack.c.l.s4 839922192
    %v4973 = vunpack.c.0.s8 %v4972
    %v4974 = vlaneseq
    %v4975 = vshrl.u32 %v4974, 7
    %v4976 = vsub.s32 %v4973, %v4975
    %v4977 = vrot.slane %v4952, %v4976
    %v4979 = vunpack.c.l.s4 1985246804
    %v4980 = vunpack.c.0.s8 %v4979
    %v4981 = vlaneseq
    %v4982 = vshrl.u32 %v4981, 7
    %v4983 = vsub.s32 %v4980, %v4982
    %v4984 = vrot.slane %v4952, %v4983
    %v4986 = vunpack.c.l.s4 839922192
    %v4987 = vunpack.c.0.s8 %v4986
    %v4988 = vlaneseq
    %v4989 = vshrl.u32 %v4988, 7
    %v4990 = vsub.s32 %v4987, %v4989
    %v4991 = vrot.slane %v4953, %v4990
    %v4993 = vunpack.c.l.s4 1985246804
    %v4994 = vunpack.c.0.s8 %v4993
    %v4995 = vlaneseq
    %v4996 = vshrl.u32 %v4995, 7
    %v4997 = vsub.s32 %v4994, %v4996
    %v4998 = vrot.slane %v4953, %v4997
    %v5005 = vmul.f32 %v4912, %v4963
    %v5006 = vmul.f32 %v4913, %v4970
    %v5007 = vmul.f32 %v4914, %v4977
    %v5008 = vmul.f32 %v4915, %v4984
    %v5009 = vmul.f32 %v4916, %v4991
    %v5010 = vmul.f32 %v4917, %v4998
    %v5011 = vlaneseq
    %v5012 = vshrl.u32 %v5011, 7
    %v5013 = vsub.s32 3, %v5012
    %v5014 = vrot.slane %v2943, %v5013
    %v5016 = vcombine.high %v5014, %v5014
    %v5018 = vmul.f32 %v5005, %v5014
    %v5019 = vmul.f32 %v5006, %v5016
    %v5020 = vmul.f32 %v5007, %v5014
    %v5021 = vmul.f32 %v5008, %v5016
    %v5022 = vmul.f32 %v5009, %v5014
    %v5023 = vmul.f32 %v5010, %v5016
    %v5024 = vlaneseq
    %v5025 = vshrl.u32 %v5024, 7
    %v5026 = vsub.s32 4, %v5025
    %v5027 = vrot.slane %v2943, %v5026
    %v5029 = vcombine.high %v5027, %v5027
    %v5031 = vadd.f32 %v5018, %v5027
    %v5032 = vadd.f32 %v5019, %v5029
    %v5033 = vadd.f32 %v5020, %v5027
    %v5034 = vadd.f32 %v5021, %v5029
    %v5035 = vadd.f32 %v5022, %v5027
    %v5036 = vadd.f32 %v5023, %v5029
    %v5043 = vcombine.low %v5031, %v5032
    %v5044 = vcombine.low %v5033, %v5034
    %v5045 = vcombine.low %v5035, %v5036
    %v5049 = vpack.c.bf16 %v5044, %v5043
    %v5050 = vpack.c.bf16 %v5045, %v5045
    %s5051 = scalar_lea.vmem %s8, 16
    %v5052 = vld [vmem:[%s5051] sm:$0xf]
    %v5053 = vld [vmem:[%s5051 + $0x4] sm:$0xf]
    %v5054 = vld [vmem:[%s5051 + $0x8] sm:$0xf]
    %v5055 = vld [vmem:[%s5051 + $0xc] sm:$0xf]
    %v5056 = vlaneseq
    %v5057 = vshrl.u32 %v5056, 7
    %v5058 = vsub.s32 1, %v5057
    %v5059 = vrot.slane %v2943, %v5058
    %v5064 = vunpack.c.l.b16 %v5052
    %v5065 = vunpack.c.l.b16 %v5053
    %v5066 = vunpack.c.l.b16 %v5054
    %v5067 = vunpack.c.l.b16 %v5055
    %v5068 = vpack.c.b16 %v5065, %v5064
    %v5069 = vpack.c.b16 %v5067, %v5066
    %v5073 = vsel %vm478, %v5049, 0
    %v5076 = vsel %vm478, %v5050, 0
    %5078 = vmatprep.subr.bf16.mxu0 0
    %5079 = vmatpush1.bf16.msra.mxu0 0
    %5080 = vmatprep.subr.bf16.mxu0 0
    %5081 = vmatpush1.bf16.msra.mxu0 0
    %5082 = vmatprep.subr.bf16.mxu0 0
    %5083 = vmatpush1.bf16.msra.mxu0 0
    %5084 = vmatprep.subr.bf16.mxu0 0
    %5085 = vmatpush1.bf16.msra.mxu0 0
    %5086 = vmatprep.subr.bf16.mxu0 0
    %5087 = vmatpush1.bf16.msra.mxu0 0
    %5088 = vmatprep.subr.bf16.mxu0 0
    %5089 = vmatpush1.bf16.msra.mxu0 0
    %5090 = vmatprep.subr.bf16.mxu0 0
    %5091 = vmatpush1.bf16.msra.mxu0 %v5069
    %5092 = vmatprep.subr.bf16.mxu0 0
    %5093 = vmatpush1.bf16.msra.mxu0 %v5068
    %5094 = vmatprep.subr.bf16.mxu0 0
    %5095 = vmatpush2.bf16.msra.mxu0 0
    %5096 = vmatprep.subr.bf16.mxu0 0
    %5097 = vmatpush2.bf16.msra.mxu0 0
    %5098 = vmatprep.subr.bf16.mxu0 0
    %5099 = vmatpush2.bf16.msra.mxu0 0
    %5100 = vmatprep.subr.bf16.mxu0 0
    %5101 = vmatpush2.bf16.msra.mxu0 0
    %5102 = vmatprep.subr.bf16.mxu0 0
    %5103 = vmatpush2.bf16.msra.mxu0 0
    %5104 = vmatprep.subr.bf16.mxu0 0
    %5105 = vmatpush2.bf16.msra.mxu0 0
    %5106 = vmatprep.subr.bf16.mxu0 0
    %5107 = vmatpush2.bf16.msra.mxu0 0
    %5108 = vmatprep.subr.bf16.mxu0 0
    %5109 = vmatpush2.bf16.msra.mxu0 0
    %5110 = vmatprep.mubr.bf16.mxu0 0
    %5111 = vmatmul.mubr.bf16.gmra.mxu0 %v5073
    %v5112 = vpop.f32.mrf.mxu0
    %v5113 = vadd.f32 %v5059, %v5112
    %v5114 = vpop.f32.mrf.mxu0
    %v5115 = vpop.f32.mrf.mxu0
    %v5116 = vadd.f32 %v5059, %v5115
    %v5117 = vpop.f32.mrf.mxu0
    %5118 = vmatprep.mubr.bf16.mxu0 0
    %5119 = vmatmul.mubr.bf16.gmra.mxu0 %v5076
    %v5120 = vpop.f32.mrf.mxu0
    %v5121 = vadd.f32 %v5059, %v5120
    %v5122 = vpop.f32.mrf.mxu0
    %v5123 = vpop.f32.mrf.mxu0
    %v5124 = vpop.f32.mrf.mxu0
    %5125 = vdwg.mxu0
    %v5126 = vmax.f32 %v5113, 0.0
    %v5127 = vmax.f32 %v5116, 0.0
    %v5128 = vmax.f32 %v5121, 0.0
    %v5129 = vpack.c.bf16 %v5127, %v5126
    %v5130 = vpack.c.bf16 %v5128, %v5128
    %s5131 = scalar_lea.vmem %s9, 32
    %v5132 = vld [vmem:[%s5131] sm:$0xf]
    %v5133 = vld [vmem:[%s5131 + $0x4] sm:$0xf]
    %v5134 = vld [vmem:[%s5131 + $0x8] sm:$0xf]
    %v5135 = vld [vmem:[%s5131 + $0xc] sm:$0xf]
    %v5136 = vld [vmem:[%s5131 + $0x10] sm:$0xf]
    %v5137 = vld [vmem:[%s5131 + $0x14] sm:$0xf]
    %v5138 = vld [vmem:[%s5131 + $0x18] sm:$0xf]
    %v5139 = vld [vmem:[%s5131 + $0x1c] sm:$0xf]
    %v5140 = vlaneseq
    %v5141 = vshrl.u32 %v5140, 7
    %v5142 = vsub.s32 7, %v5141
    %v5143 = vrot.slane %v2943, %v5142
    %v5152 = vunpack.c.l.b16 %v5132
    %v5153 = vunpack.c.l.b16 %v5133
    %v5154 = vunpack.c.l.b16 %v5134
    %v5155 = vunpack.c.l.b16 %v5135
    %v5156 = vunpack.c.l.b16 %v5136
    %v5157 = vunpack.c.l.b16 %v5137
    %v5158 = vunpack.c.l.b16 %v5138
    %v5159 = vunpack.c.l.b16 %v5139
    %v5160 = vpack.c.b16 %v5153, %v5152
    %v5161 = vpack.c.b16 %v5155, %v5154
    %v5162 = vpack.c.b16 %v5157, %v5156
    %v5163 = vpack.c.b16 %v5159, %v5158
    %v5169 = vsel %vm2672, %v5129, 0
    %v5172 = vsel %vm2672, %v5130, 0
    %5174 = vmatprep.subr.bf16.mxu0 0
    %5175 = vmatpush1.bf16.msra.mxu0 0
    %5176 = vmatprep.subr.bf16.mxu0 0
    %5177 = vmatpush1.bf16.msra.mxu0 0
    %5178 = vmatprep.subr.bf16.mxu0 0
    %5179 = vmatpush1.bf16.msra.mxu0 0
    %5180 = vmatprep.subr.bf16.mxu0 0
    %5181 = vmatpush1.bf16.msra.mxu0 0
    %5182 = vmatprep.subr.bf16.mxu0 0
    %5183 = vmatpush1.bf16.msra.mxu0 %v5163
    %5184 = vmatprep.subr.bf16.mxu0 0
    %5185 = vmatpush1.bf16.msra.mxu0 %v5162
    %5186 = vmatprep.subr.bf16.mxu0 0
    %5187 = vmatpush1.bf16.msra.mxu0 %v5161
    %5188 = vmatprep.subr.bf16.mxu0 0
    %5189 = vmatpush1.bf16.msra.mxu0 %v5160
    %5190 = vmatprep.subr.bf16.mxu0 0
    %5191 = vmatpush2.bf16.msra.mxu0 0
    %5192 = vmatprep.subr.bf16.mxu0 0
    %5193 = vmatpush2.bf16.msra.mxu0 0
    %5194 = vmatprep.subr.bf16.mxu0 0
    %5195 = vmatpush2.bf16.msra.mxu0 0
    %5196 = vmatprep.subr.bf16.mxu0 0
    %5197 = vmatpush2.bf16.msra.mxu0 0
    %5198 = vmatprep.subr.bf16.mxu0 0
    %5199 = vmatpush2.bf16.msra.mxu0 0
    %5200 = vmatprep.subr.bf16.mxu0 0
    %5201 = vmatpush2.bf16.msra.mxu0 0
    %5202 = vmatprep.subr.bf16.mxu0 0
    %5203 = vmatpush2.bf16.msra.mxu0 0
    %5204 = vmatprep.subr.bf16.mxu0 0
    %5205 = vmatpush2.bf16.msra.mxu0 0
    %5206 = vmatprep.mubr.bf16.mxu0 0
    %5207 = vmatmul.mubr.bf16.gmra.mxu0 %v5169
    %v5208 = vpop.f32.mrf.mxu0
    %v5209 = vadd.f32 %v5143, %v5208
    %v5210 = vpop.f32.mrf.mxu0
    %v5211 = vpop.f32.mrf.mxu0
    %v5212 = vadd.f32 %v5143, %v5211
    %v5213 = vpop.f32.mrf.mxu0
    %5214 = vmatprep.mubr.bf16.mxu0 0
    %5215 = vmatmul.mubr.bf16.gmra.mxu0 %v5172
    %v5216 = vpop.f32.mrf.mxu0
    %v5217 = vadd.f32 %v5143, %v5216
    %v5218 = vpop.f32.mrf.mxu0
    %v5219 = vpop.f32.mrf.mxu0
    %v5220 = vpop.f32.mrf.mxu0
    %5221 = vdwg.mxu0
    %v5225 = vcombine.high %v5209, %v5209
    %v5226 = vcombine.high %v5212, %v5212
    %v5227 = vcombine.high %v5217, %v5217
    %v5231 = vadd.f32 %v5031, %v5209
    %v5232 = vadd.f32 %v5032, %v5225
    %v5233 = vadd.f32 %v5033, %v5212
    %v5234 = vadd.f32 %v5034, %v5226
    %v5235 = vadd.f32 %v5035, %v5217
    %v5236 = vadd.f32 %v5036, %v5227
    %v5243 = vcombine.low %v5231, %v5232
    %v5244 = vcombine.low %v5233, %v5234
    %v5245 = vcombine.low %v5235, %v5236
    %v5249 = vsel %vm478, %v5243, 0.0
    %5250 = vadd.xlane.f32.xlu0 %v5249
    %v5251 = vpop.xlane.xlu0 %5250
    %v5252 = vsel %vm478, %v5244, 0.0
    %5253 = vadd.xlane.f32.xlu0 %v5252
    %v5254 = vpop.xlane.xlu0 %5253
    %v5255 = vsel %vm478, %v5245, 0.0
    %5256 = vadd.xlane.f32.xlu0 %v5255
    %v5257 = vpop.xlane.xlu0 %5256
    %v5258 = vmul.f32 %v5251, %v2363
    %v5259 = vmul.f32 %v5254, %v2363
    %v5260 = vmul.f32 %v5257, %v2363
    %v5265 = vunpack.c.l.s4 839922192
    %v5266 = vunpack.c.0.s8 %v5265
    %v5267 = vlaneseq
    %v5268 = vshrl.u32 %v5267, 7
    %v5269 = vsub.s32 %v5266, %v5268
    %v5270 = vrot.slane %v5258, %v5269
    %v5272 = vunpack.c.l.s4 1985246804
    %v5273 = vunpack.c.0.s8 %v5272
    %v5274 = vlaneseq
    %v5275 = vshrl.u32 %v5274, 7
    %v5276 = vsub.s32 %v5273, %v5275
    %v5277 = vrot.slane %v5258, %v5276
    %v5279 = vunpack.c.l.s4 839922192
    %v5280 = vunpack.c.0.s8 %v5279
    %v5281 = vlaneseq
    %v5282 = vshrl.u32 %v5281, 7
    %v5283 = vsub.s32 %v5280, %v5282
    %v5284 = vrot.slane %v5259, %v5283
    %v5286 = vunpack.c.l.s4 1985246804
    %v5287 = vunpack.c.0.s8 %v5286
    %v5288 = vlaneseq
    %v5289 = vshrl.u32 %v5288, 7
    %v5290 = vsub.s32 %v5287, %v5289
    %v5291 = vrot.slane %v5259, %v5290
    %v5293 = vunpack.c.l.s4 839922192
    %v5294 = vunpack.c.0.s8 %v5293
    %v5295 = vlaneseq
    %v5296 = vshrl.u32 %v5295, 7
    %v5297 = vsub.s32 %v5294, %v5296
    %v5298 = vrot.slane %v5260, %v5297
    %v5300 = vunpack.c.l.s4 1985246804
    %v5301 = vunpack.c.0.s8 %v5300
    %v5302 = vlaneseq
    %v5303 = vshrl.u32 %v5302, 7
    %v5304 = vsub.s32 %v5301, %v5303
    %v5305 = vrot.slane %v5260, %v5304
    %v5312 = vsub.f32 %v5231, %v5270
    %v5313 = vsub.f32 %v5232, %v5277
    %v5314 = vsub.f32 %v5233, %v5284
    %v5315 = vsub.f32 %v5234, %v5291
    %v5316 = vsub.f32 %v5235, %v5298
    %v5317 = vsub.f32 %v5236, %v5305
    %v5318 = vmul.f32 %v5312, %v5312
    %v5319 = vmul.f32 %v5313, %v5313
    %v5320 = vmul.f32 %v5314, %v5314
    %v5321 = vmul.f32 %v5315, %v5315
    %v5322 = vmul.f32 %v5316, %v5316
    %v5323 = vmul.f32 %v5317, %v5317
    %v5330 = vcombine.low %v5318, %v5319
    %v5331 = vcombine.low %v5320, %v5321
    %v5332 = vcombine.low %v5322, %v5323
    %v5336 = vsel %vm478, %v5330, 0.0
    %5337 = vadd.xlane.f32.xlu0 %v5336
    %v5338 = vpop.xlane.xlu0 %5337
    %v5339 = vsel %vm478, %v5331, 0.0
    %5340 = vadd.xlane.f32.xlu0 %v5339
    %v5341 = vpop.xlane.xlu0 %5340
    %v5342 = vsel %vm478, %v5332, 0.0
    %5343 = vadd.xlane.f32.xlu0 %v5342
    %v5344 = vpop.xlane.xlu0 %5343
    %v5345 = vmul.f32 %v5338, %v2363
    %v5346 = vmul.f32 %v5341, %v2363
    %v5347 = vmul.f32 %v5344, %v2363
    %v5348 = vadd.f32 %v5345, 1e-05
    %v5349 = vadd.f32 %v5346, 1e-05
    %v5350 = vadd.f32 %v5347, 1e-05
    %v5351 = vrsqrt.pop %v5348
    %v5352 = vrsqrt.pop %v5349
    %v5353 = vrsqrt.pop %v5350
    %v5358 = vunpack.c.l.s4 839922192
    %v5359 = vunpack.c.0.s8 %v5358
    %v5360 = vlaneseq
    %v5361 = vshrl.u32 %v5360, 7
    %v5362 = vsub.s32 %v5359, %v5361
    %v5363 = vrot.slane %v5351, %v5362
    %v5365 = vunpack.c.l.s4 1985246804
    %v5366 = vunpack.c.0.s8 %v5365
    %v5367 = vlaneseq
    %v5368 = vshrl.u32 %v5367, 7
    %v5369 = vsub.s32 %v5366, %v5368
    %v5370 = vrot.slane %v5351, %v5369
    %v5372 = vunpack.c.l.s4 1985246804
    %v5373 = vunpack.c.0.s8 %v5372
    %v5374 = vlaneseq
    %v5375 = vshrl.u32 %v5374, 7
    %v5376 = vsub.s32 %v5373, %v5375
    %v5377 = vrot.slane %v5352, %v5376
    %v5379 = vunpack.c.l.s4 839922192
    %v5380 = vunpack.c.0.s8 %v5379
    %v5381 = vlaneseq
    %v5382 = vshrl.u32 %v5381, 7
    %v5383 = vsub.s32 %v5380, %v5382
    %v5384 = vrot.slane %v5353, %v5383
    %v5389 = vmul.f32 %v5312, %v5363
    %v5390 = vmul.f32 %v5313, %v5370
    %v5391 = vmul.f32 %v5315, %v5377
    %v5392 = vmul.f32 %v5316, %v5384
    %v5393 = vlaneseq
    %v5394 = vshrl.u32 %v5393, 7
    %v5395 = vsub.s32 5, %v5394
    %v5396 = vrot.slane %v2943, %v5395
    %v5398 = vcombine.high %v5396, %v5396
    %v5400 = vmul.f32 %v5389, %v5396
    %v5401 = vmul.f32 %v5390, %v5398
    %v5402 = vmul.f32 %v5391, %v5398
    %v5403 = vmul.f32 %v5392, %v5396
    %v5404 = vlaneseq
    %v5405 = vshrl.u32 %v5404, 7
    %v5406 = vsub.s32 6, %v5405
    %v5407 = vrot.slane %v2943, %v5406
    %v5409 = vcombine.high %v5407, %v5407
    %v5411 = vadd.f32 %v5400, %v5407
    %v5412 = vadd.f32 %v5401, %v5409
    %v5413 = vadd.f32 %v5402, %v5409
    %v5414 = vadd.f32 %v5403, %v5407
    %v5419 = vcombine.low %v5411, %v5412
    %v5420 = vcombine.low %v5413, %v5414
    %v5423 = vpack.c.bf16 %v5420, %v5419
    %v5424 = vld [vmem:[%s10] sm:$0xf]
    %v5425 = vld [vmem:[%s10 + $0x4] sm:$0xf]
    %v5426 = vld [vmem:[%s10 + $0x8] sm:$0xf]
    %v5427 = vld [vmem:[%s10 + $0xc] sm:$0xf]
    %v5428 = vlaneseq
    %v5429 = vshrl.u32 %v5428, 7
    %v5430 = vsub.s32 1, %v5429
    %v5431 = vrot.slane %v46, %v5430
    %v5436 = vunpack.c.l.b16 %v5424
    %v5437 = vunpack.c.l.b16 %v5425
    %v5438 = vunpack.c.l.b16 %v5426
    %v5439 = vunpack.c.l.b16 %v5427
    %v5440 = vpack.c.b16 %v5437, %v5436
    %v5441 = vpack.c.b16 %v5439, %v5438
    %v5445 = vsel %vm478, %v5423, 0
    %5447 = vmatprep.subr.bf16.mxu0 0
    %5448 = vmatpush1.bf16.msra.mxu0 0
    %5449 = vmatprep.subr.bf16.mxu0 0
    %5450 = vmatpush1.bf16.msra.mxu0 0
    %5451 = vmatprep.subr.bf16.mxu0 0
    %5452 = vmatpush1.bf16.msra.mxu0 0
    %5453 = vmatprep.subr.bf16.mxu0 0
    %5454 = vmatpush1.bf16.msra.mxu0 0
    %5455 = vmatprep.subr.bf16.mxu0 0
    %5456 = vmatpush1.bf16.msra.mxu0 0
    %5457 = vmatprep.subr.bf16.mxu0 0
    %5458 = vmatpush1.bf16.msra.mxu0 0
    %5459 = vmatprep.subr.bf16.mxu0 0
    %5460 = vmatpush1.bf16.msra.mxu0 %v5441
    %5461 = vmatprep.subr.bf16.mxu0 0
    %5462 = vmatpush1.bf16.msra.mxu0 %v5440
    %5463 = vmatprep.subr.bf16.mxu0 0
    %5464 = vmatpush2.bf16.msra.mxu0 0
    %5465 = vmatprep.subr.bf16.mxu0 0
    %5466 = vmatpush2.bf16.msra.mxu0 0
    %5467 = vmatprep.subr.bf16.mxu0 0
    %5468 = vmatpush2.bf16.msra.mxu0 0
    %5469 = vmatprep.subr.bf16.mxu0 0
    %5470 = vmatpush2.bf16.msra.mxu0 0
    %5471 = vmatprep.subr.bf16.mxu0 0
    %5472 = vmatpush2.bf16.msra.mxu0 0
    %5473 = vmatprep.subr.bf16.mxu0 0
    %5474 = vmatpush2.bf16.msra.mxu0 0
    %5475 = vmatprep.subr.bf16.mxu0 0
    %5476 = vmatpush2.bf16.msra.mxu0 0
    %5477 = vmatprep.subr.bf16.mxu0 0
    %5478 = vmatpush2.bf16.msra.mxu0 0
    %5479 = vmatprep.mubr.bf16.mxu0 0
    %5480 = vmatmul.mubr.bf16.gmra.mxu0 %v5445
    %v5481 = vpop.f32.mrf.mxu0
    %v5482 = vadd.f32 %v5431, %v5481
    %v5483 = vpop.f32.mrf.mxu0
    %v5484 = vpop.f32.mrf.mxu0
    %v5485 = vadd.f32 %v5431, %v5484
    %v5486 = vpop.f32.mrf.mxu0
    %5487 = vdwg.mxu0
    %5488 = vmax.xlane.f32.xlu0 %v5482
    %v5489 = vpop.xlane.xlu0 %5488
    %5490 = vmax.xlane.f32.xlu0 %v5485
    %v5491 = vpop.xlane.xlu0 %5490
    %v5492 = vsub.f32 %v5482, %v5489
    %v5493 = vsub.f32 %v5485, %v5491
    %v5494 = vmul.f32 %v5492, 1.442695
    %v5495 = vpow.pop %v5494
    %v5496 = vmul.f32 %v5493, 1.442695
    %v5497 = vpow.pop %v5496
    %5498 = vadd.xlane.f32.xlu0 %v5495
    %v5499 = vpop.xlane.xlu0 %5498
    %5500 = vadd.xlane.f32.xlu0 %v5497
    %v5501 = vpop.xlane.xlu0 %5500
    %v5502 = vlog2.pop %v5499
    %v5503 = vmul.f32 %v5502, 0.6931472
    %v5504 = vlog2.pop %v5501
    %v5505 = vmul.f32 %v5504, 0.6931472
    %v5506 = vadd.f32 %v5489, %v5503
    %v5507 = vadd.f32 %v5491, %v5505
    %v5508 = vsub.f32 %v5482, %v5506
    %v5509 = vsub.f32 %v5485, %v5507
    %5510 = vst [vmem:[#allocation2] sm:$0xff] %v5508
    %5511 = vst [vmem:[#allocation2 + $0x8] sm:$0xff] %v5509
    // Predicated region
    $region54: #{forward.1} parent=1 // pred_check
      _
    $region55: #{forward.1} parent=1 // pred_check_branch
      %5513 = sbr.rel (0) target = $region57
    $region56: #{forward.1} parent=1 // pred_region
      %s5515 = ssub.s32 256, 256
      %5516 = vsyncadd [#allocation3], %s5515
      %s5517 = sshll.u32 [#allocation2], 4
      %s5518 = int_to_ptr.vmem [resolvable:$true] %s5517
      %5523 = dma.vmem_to_hbm [thread:$0]  %s5518, 256, %s13, [#allocation3], 128, 128, 8
    $region57: #{forward.1} parent=1 // pred_fallthru
      _
    // Predicated region
    $region58: #{forward.1} parent=1 // pred_check
      _
    $region59: #{forward.1} parent=1 // pred_check_branch
      %5525 = sbr.rel (0) target = $region61
    $region60: #{forward.1} parent=1 // pred_region
      %5526 = dma.done [#allocation3], 256
    $region61: #{forward.1} parent=1 // pred_fallthru
      _
    %5527 = vsyncpa [#allocation3], 1

</llo_original>
